<compile_context>
chip_gen: v6e
topology: v6e:2x2x1
jax: 0.10.0
libtpu: 0.0.40
codegen_flags: <defaults>
</compile_context>

<pallas_src>
import functools

import jax
import jax.numpy as jnp
from jax import lax
from jax.experimental import pallas as pl
from jax.experimental.pallas import tpu as pltpu

EPS = 1e-5
DROP_P = 0.1
_DROP_THRESH = int(round(DROP_P * 2 ** 32))      # keep element iff hash >= this
_VMEM_LIMIT = 32 * 1024 * 1024                   # safe on v5e/v6e/v7x


# ----------------------------------------------------------------------------
# Counter-based dropout hash (shared by the kernel and the pure-JAX reference).
# ----------------------------------------------------------------------------
def _fmix32(h):
    """murmur3 32-bit finalizer on uint32 arrays."""
    h = h ^ (h >> 16)
    h = h * jnp.uint32(0x85EBCA6B)
    h = h ^ (h >> 13)
    h = h * jnp.uint32(0xC2B2AE35)
    h = h ^ (h >> 16)
    return h


def _row_keys(n_idx_u32, c_idx_u32, n_channels, seed_u32):
    return _fmix32((n_idx_u32 * jnp.uint32(n_channels) + c_idx_u32)
                   * jnp.uint32(0x9E3779B1) + seed_u32)


def _col_keys(m_idx_u32):
    return _fmix32(m_idx_u32 * jnp.uint32(0x7FEB352D) + jnp.uint32(0x165667B1))


def _keep_from_keys(rk, ck):
    """Combine row/col keys -> boolean keep-mask with keep prob 1 - DROP_P."""
    h = rk + ck
    h = h ^ (h >> 16)
    h = h * jnp.uint32(0x9E3779B1)
    h = h ^ (h >> 15)
    return h >= jnp.uint32(_DROP_THRESH)


# ----------------------------------------------------------------------------
# Pass 1: per-channel batch statistics -> folded scale / shift.
# ----------------------------------------------------------------------------
def _stats_kernel(x_ref, gamma_ref, beta_ref, scale_ref, shift_ref,
                  sum_ref, sumsq_ref, *, tile_m, m_valid, count, eps,
                  extra_scale):
    n = pl.program_id(0)
    j = pl.program_id(1)

    @pl.when(jnp.logical_and(n == 0, j == 0))
    def _init():
        sum_ref[...] = jnp.zeros_like(sum_ref)
        sumsq_ref[...] = jnp.zeros_like(sumsq_ref)

    x = x_ref[0].astype(jnp.float32)                       # [C, tile_m]
    if m_valid % tile_m != 0:
        # mask the lane padding of the ragged last tile
        col = lax.broadcasted_iota(jnp.int32, x.shape, 1) + j * tile_m
        x = jnp.where(col < m_valid, x, 0.0)

    sum_ref[...] += jnp.sum(x, axis=1, keepdims=True)
    sumsq_ref[...] += jnp.sum(x * x, axis=1, keepdims=True)

    last = jnp.logical_and(n == pl.num_programs(0) - 1,
                           j == pl.num_programs(1) - 1)

    @pl.when(last)
    def _finalize():
        inv_cnt = 1.0 / float(count)
        mean = sum_ref[...] * inv_cnt
        # TODO(synk): E[x^2]-E[x]^2 in f32 loses precision for large-mean data;
        # a Welford-style accumulation would be more robust.
        var = jnp.maximum(sumsq_ref[...] * inv_cnt - mean * mean, 0.0)
        inv_std = lax.rsqrt(var + eps)
        g = gamma_ref[...] * inv_std
        # fold BN affine and the dropout 1/(1-p) rescale into one mul+add
        scale_ref[...] = g * extra_scale
        shift_ref[...] = (beta_ref[...] - mean * g) * extra_scale


# ----------------------------------------------------------------------------
# Pass 2: normalize -> ReLU -> dropout -> 1x1 conv (MXU matmul) per block.
# ----------------------------------------------------------------------------
def _apply_kernel(seed_ref, x_ref, scale_ref, shift_ref, w_ref, b_ref, o_ref,
                  *, tile_m, channels, training):
    x = x_ref[0].astype(jnp.float32)                       # [C, tile_m]
    y = jnp.maximum(x * scale_ref[...] + shift_ref[...], 0.0)

    if training and DROP_P > 0.0:
        seed_u = seed_ref[0].astype(jnp.uint32)
        n_u = pl.program_id(0).astype(jnp.uint32)
        col0 = (pl.program_id(1) * tile_m).astype(jnp.uint32)
        rows = lax.broadcasted_iota(jnp.uint32, (channels, 1), 0)
        cols = lax.broadcasted_iota(jnp.uint32, (1, tile_m), 1)
        keep = _keep_from_keys(_row_keys(n_u, rows, channels, seed_u),
                               _col_keys(col0 + cols))
        y = jnp.where(keep, y, 0.0)

    # 1x1 conv == [Cout, C] @ [C, tile_m]; f32 accumulation on the MXU.
    # (bf16 inputs would halve MXU input bandwidth but cost accuracy; the
    #  kernel is memory-bound so we keep f32.)
    o_ref[0] = (jnp.dot(w_ref[...], y, preferred_element_type=jnp.float32)
                + b_ref[...]).astype(o_ref.dtype)


# ----------------------------------------------------------------------------
# Wrapper.
# ----------------------------------------------------------------------------
def fused_bn_relu_dropout_conv1x1(x, gamma, beta, conv_w, conv_b, *,
                                  seed=0, training=True, tile_m=512):
    """x: [N, C, H, W] (NCHW).  conv_w: [Cout, C] (torch 1x1 weight squeezed).
    Returns [N, Cout, H, W]."""
    N, C, H, W = x.shape
    Cout = conv_w.shape[0]
    M = H * W

    xr = x.reshape(N, C, M)                 # channels-first view, free reshape

    if M <= tile_m:                         # small inputs: one full lane block
        tile_m = M
    grid_m = pl.cdiv(M, tile_m)
    m_pad = grid_m * tile_m

    gamma2 = gamma.reshape(C, 1).astype(jnp.float32)
    beta2 = beta.reshape(C, 1).astype(jnp.float32)
    w2 = conv_w.reshape(Cout, C)
    b2 = conv_b.reshape(Cout, 1)

    x_spec = pl.BlockSpec((1, C, tile_m), lambda n, j: (n, 0, j))
    per_chan_spec = pl.BlockSpec((C, 1), lambda n, j: (0, 0))

    if training:
        extra = 1.0 / (1.0 - DROP_P)
        scale, shift = pl.pallas_call(
            functools.partial(_stats_kernel, tile_m=tile_m, m_valid=M,
                              count=N * M, eps=EPS, extra_scale=extra),
            grid=(N, grid_m),
            in_specs=[x_spec, per_chan_spec, per_chan_spec],
            out_specs=[per_chan_spec, per_chan_spec],
            out_shape=[jax.ShapeDtypeStruct((C, 1), jnp.float32),
                       jax.ShapeDtypeStruct((C, 1), jnp.float32)],
            scratch_shapes=[pltpu.VMEM((C, 1), jnp.float32),
                            pltpu.VMEM((C, 1), jnp.float32)],
            compiler_params=pltpu.CompilerParams(
                dimension_semantics=("arbitrary", "arbitrary"),
                vmem_limit_bytes=_VMEM_LIMIT),
            cost_estimate=pl.CostEstimate(
                flops=3 * N * M * C, transcendentals=C,
                bytes_accessed=N * M * C * 4),
        )(xr, gamma2, beta2)
    else:
        # TODO(synk): eval mode uses the module's default running stats
        # (mean=0, var=1); real running stats are not threaded through.
        scale = gamma2 * (1.0 / jnp.sqrt(jnp.float32(1.0) + EPS))
        shift = beta2

    seed_arr = jnp.asarray([seed], dtype=jnp.int32)
    out = pl.pallas_call(
        functools.partial(_apply_kernel, tile_m=tile_m, channels=C,
                          training=training),
        grid=(N, grid_m),
        in_specs=[
            pl.BlockSpec(memory_space=pltpu.MemorySpace.SMEM),   # seed
            x_spec,                                              # x tile
            per_chan_spec,                                       # scale
            per_chan_spec,                                       # shift
            pl.BlockSpec((Cout, C), lambda n, j: (0, 0)),        # conv weight
            pl.BlockSpec((Cout, 1), lambda n, j: (0, 0)),        # conv bias
        ],
        out_specs=pl.BlockSpec((1, Cout, tile_m), lambda n, j: (n, 0, j)),
        out_shape=jax.ShapeDtypeStruct((N, Cout, m_pad), x.dtype),
        compiler_params=pltpu.CompilerParams(
            dimension_semantics=("parallel", "parallel"),
            vmem_limit_bytes=_VMEM_LIMIT),
        cost_estimate=pl.CostEstimate(
            flops=2 * N * M * C * Cout + 12 * N * M * C,
            transcendentals=0,
            bytes_accessed=N * M * C * 4 + N * m_pad * Cout * 4),
    )(seed_arr, xr, scale, shift, w2, b2)

    # Drop the lane padding (no-op when M % tile_m == 0), back to NCHW (free).
    return out[:, :, :M].reshape(N, Cout, H, W)


# ----------------------------------------------------------------------------
# Pure-JAX reference (same dropout hash -> bit-identical mask).
# ----------------------------------------------------------------------------
def _reference(x, gamma, beta, conv_w, conv_b, *, seed, training):
    N, C, H, W = x.shape
    Cout = conv_w.shape[0]
    M = H * W
    xr = x.reshape(N, C, M).astype(jnp.float32)
    if training:
        mean = jnp.mean(xr, axis=(0, 2))
        var = jnp.maximum(jnp.mean(xr * xr, axis=(0, 2)) - mean * mean, 0.0)
    else:
        mean = jnp.zeros((C,), jnp.float32)
        var = jnp.ones((C,), jnp.float32)
    inv_std = lax.rsqrt(var + EPS)
    y = (xr - mean[None, :, None]) * (gamma * inv_std)[None, :, None] \
        + beta[None, :, None]
    y = jnp.maximum(y, 0.0)
    if training:
        n_idx = jnp.arange(N, dtype=jnp.uint32)[:, None, None]
        c_idx = jnp.arange(C, dtype=jnp.uint32)[None, :, None]
        m_idx = jnp.arange(M, dtype=jnp.uint32)[None, None, :]
        keep = _keep_from_keys(_row_keys(n_idx, c_idx, C, jnp.uint32(seed)),
                               _col_keys(m_idx))
        y = jnp.where(keep, y, 0.0) * (1.0 / (1.0 - DROP_P))
    out = jnp.einsum("oc,ncm->nom", conv_w, y,
                     precision=jax.lax.Precision.HIGHEST)
    out = out + conv_b[None, :, None]
    return out.reshape(N, Cout, H, W)


if __name__ == "__main__":
    key = jax.random.PRNGKey(0)
    kx, kg, kb, kw, kc = jax.random.split(key, 5)

    # Channel counts are fixed by the module (BatchNorm2d(256), Conv 256->21);
    # spatial size matches the module's example input (28x28).
    N, C, H, W, COUT = 1, 256, 28, 28, 21

    x = jax.random.normal(kx, (N, C, H, W), dtype=jnp.float32)
    gamma = 1.0 + 0.1 * jax.random.normal(kg, (C,), dtype=jnp.float32)
    beta = 0.1 * jax.random.normal(kb, (C,), dtype=jnp.float32)
    conv_w = 0.05 * jax.random.normal(kw, (COUT, C), dtype=jnp.float32)
    conv_b = 0.01 * jax.random.normal(kc, (COUT,), dtype=jnp.float32)

    out = fused_bn_relu_dropout_conv1x1(x, gamma, beta, conv_w, conv_b,
                                        seed=42, training=True)
    out = jax.block_until_ready(out)
    assert out.shape == (N, COUT, H, W), out.shape
    assert bool(jnp.all(jnp.isfinite(out)))

    ref = _reference(x, gamma, beta, conv_w, conv_b, seed=42, training=True)
    max_err = float(jnp.max(jnp.abs(out - ref)))
    assert max_err < 1e-2, f"kernel/reference mismatch: {max_err}"

    print("KERNEL_OK")
</pallas_src>

<mosaic_0001>
module attributes {stable_mosaic.version = 11 : i64} {
  func.func @_stats_kernel(%arg0: i32, %arg1: i32, %arg2: memref<1x256x512xf32, #tpu.memory_space<vmem>>, %arg3: memref<256x1xf32, #tpu.memory_space<vmem>>, %arg4: memref<256x1xf32, #tpu.memory_space<vmem>>, %arg5: memref<256x1xf32, #tpu.memory_space<vmem>>, %arg6: memref<256x1xf32, #tpu.memory_space<vmem>>, %arg7: memref<256x1xf32, #tpu.memory_space<vmem>>, %arg8: memref<256x1xf32, #tpu.memory_space<vmem>>) attributes {dimension_semantics = [#tpu.dimension_semantics<arbitrary>, #tpu.dimension_semantics<arbitrary>], iteration_bounds = array<i64: 1, 2>, scalar_prefetch = 0 : i64, scratch_operands = 2 : i64, tpu.core_type = #tpu.core_type<tc>, window_params = [{transform_indices = @transform_0, window_bounds = array<i64: 1, 256, 512>}, {pipeline_mode = #tpu.pipeline_mode<synchronous>, transform_indices = @transform_1, window_bounds = array<i64: 256, 1>}, {pipeline_mode = #tpu.pipeline_mode<synchronous>, transform_indices = @transform_2, window_bounds = array<i64: 256, 1>}, {pipeline_mode = #tpu.pipeline_mode<synchronous>, transform_indices = @transform_3, window_bounds = array<i64: 256, 1>}, {pipeline_mode = #tpu.pipeline_mode<synchronous>, transform_indices = @transform_4, window_bounds = array<i64: 256, 1>}]} {
    %c0_i32 = arith.constant 0 : i32
    %0 = arith.cmpi eq, %arg0, %c0_i32 : i32
    %c0_i32_0 = arith.constant 0 : i32
    %1 = arith.cmpi eq, %arg1, %c0_i32_0 : i32
    %2 = arith.andi %0, %1 : i1
    %3 = arith.extui %2 : i1 to i32
    %c0_i32_1 = arith.constant 0 : i32
    %4 = arith.cmpi ne, %3, %c0_i32_1 : i32
    scf.if %4 {
      %cst_16 = arith.constant 0.000000e+00 : f32
      %31 = vector.broadcast %cst_16 : f32 to vector<256x1xf32>
      %c0_17 = arith.constant 0 : index
      %c0_18 = arith.constant 0 : index
      %32 = vector.load %arg7[%c0_17, %c0_18] : memref<256x1xf32, #tpu.memory_space<vmem>>, vector<256x1xf32>
      tpu.vector_store %arg7[%c0_17, %c0_18], %31 {strides = array<i32>} : memref<256x1xf32, #tpu.memory_space<vmem>>, vector<256x1xf32>,
      %cst_19 = arith.constant 0.000000e+00 : f32
      %33 = vector.broadcast %cst_19 : f32 to vector<256x1xf32>
      %c0_20 = arith.constant 0 : index
      %c0_21 = arith.constant 0 : index
      %34 = vector.load %arg8[%c0_20, %c0_21] : memref<256x1xf32, #tpu.memory_space<vmem>>, vector<256x1xf32>
      tpu.vector_store %arg8[%c0_20, %c0_21], %33 {strides = array<i32>} : memref<256x1xf32, #tpu.memory_space<vmem>>, vector<256x1xf32>,
    } else {
    }
    %c0 = arith.constant 0 : index
    %c0_2 = arith.constant 0 : index
    %c0_3 = arith.constant 0 : index
    %5 = vector.load %arg2[%c0, %c0_2, %c0_3] : memref<1x256x512xf32, #tpu.memory_space<vmem>>, vector<1x256x512xf32>
    %6 = vector.shape_cast %5 : vector<1x256x512xf32> to vector<256x512xf32>
    %7 = tpu.iota {dimensions = array<i32: 1>} : vector<256x512xi32>
    %c512_i32 = arith.constant 512 : i32
    %8 = arith.muli %arg1, %c512_i32 : i32
    %9 = vector.broadcast %8 : i32 to vector<256x512xi32>
    %10 = arith.addi %7, %9 : vector<256x512xi32>
    %c784_i32 = arith.constant 784 : i32
    %11 = vector.broadcast %c784_i32 : i32 to vector<256x512xi32>
    %12 = arith.cmpi slt, %10, %11 : vector<256x512xi32>
    %cst = arith.constant 0.000000e+00 : f32
    %13 = vector.broadcast %cst : f32 to vector<256x512xf32>
    %14 = arith.select %12, %6, %13 : vector<256x512xi1>, vector<256x512xf32>
    %c0_4 = arith.constant 0 : index
    %c0_5 = arith.constant 0 : index
    %15 = vector.load %arg7[%c0_4, %c0_5] : memref<256x1xf32, #tpu.memory_space<vmem>>, vector<256x1xf32>
    %cst_6 = arith.constant dense<0.000000e+00> : vector<256xf32>
    %16 = vector.multi_reduction <add>, %14, %cst_6 [1] : vector<256x512xf32> to vector<256xf32>
    %17 = vector.shape_cast %16 : vector<256xf32> to vector<256x1xf32>
    %18 = arith.addf %15, %17 : vector<256x1xf32>
    %c0_7 = arith.constant 0 : index
    %c0_8 = arith.constant 0 : index
    %19 = vector.load %arg7[%c0_7, %c0_8] : memref<256x1xf32, #tpu.memory_space<vmem>>, vector<256x1xf32>
    tpu.vector_store %arg7[%c0_7, %c0_8], %18 {strides = array<i32>} : memref<256x1xf32, #tpu.memory_space<vmem>>, vector<256x1xf32>,
    %c0_9 = arith.constant 0 : index
    %c0_10 = arith.constant 0 : index
    %20 = vector.load %arg8[%c0_9, %c0_10] : memref<256x1xf32, #tpu.memory_space<vmem>>, vector<256x1xf32>
    %21 = arith.mulf %14, %14 : vector<256x512xf32>
    %cst_11 = arith.constant dense<0.000000e+00> : vector<256xf32>
    %22 = vector.multi_reduction <add>, %21, %cst_11 [1] : vector<256x512xf32> to vector<256xf32>
    %23 = vector.shape_cast %22 : vector<256xf32> to vector<256x1xf32>
    %24 = arith.addf %20, %23 : vector<256x1xf32>
    %c0_12 = arith.constant 0 : index
    %c0_13 = arith.constant 0 : index
    %25 = vector.load %arg8[%c0_12, %c0_13] : memref<256x1xf32, #tpu.memory_space<vmem>>, vector<256x1xf32>
    tpu.vector_store %arg8[%c0_12, %c0_13], %24 {strides = array<i32>} : memref<256x1xf32, #tpu.memory_space<vmem>>, vector<256x1xf32>,
    %c0_i32_14 = arith.constant 0 : i32
    %26 = arith.cmpi eq, %arg0, %c0_i32_14 : i32
    %c1_i32 = arith.constant 1 : i32
    %27 = arith.cmpi eq, %arg1, %c1_i32 : i32
    %28 = arith.andi %26, %27 : i1
    %29 = arith.extui %28 : i1 to i32
    %c0_i32_15 = arith.constant 0 : i32
    %30 = arith.cmpi ne, %29, %c0_i32_15 : i32
    scf.if %30 {
      %c0_16 = arith.constant 0 : index
      %c0_17 = arith.constant 0 : index
      %31 = vector.load %arg7[%c0_16, %c0_17] : memref<256x1xf32, #tpu.memory_space<vmem>>, vector<256x1xf32>
      %cst_18 = arith.constant 0.00127551018 : f32
      %32 = vector.broadcast %cst_18 : f32 to vector<256x1xf32>
      %33 = arith.mulf %31, %32 : vector<256x1xf32>
      %c0_19 = arith.constant 0 : index
      %c0_20 = arith.constant 0 : index
      %34 = vector.load %arg8[%c0_19, %c0_20] : memref<256x1xf32, #tpu.memory_space<vmem>>, vector<256x1xf32>
      %cst_21 = arith.constant 0.00127551018 : f32
      %35 = vector.broadcast %cst_21 : f32 to vector<256x1xf32>
      %36 = arith.mulf %34, %35 : vector<256x1xf32>
      %37 = arith.mulf %33, %33 : vector<256x1xf32>
      %38 = arith.subf %36, %37 : vector<256x1xf32>
      %cst_22 = arith.constant 0.000000e+00 : f32
      %39 = vector.broadcast %cst_22 : f32 to vector<256x1xf32>
      %40 = arith.maximumf %38, %39 : vector<256x1xf32>
      %cst_23 = arith.constant 9.99999974E-6 : f32
      %41 = vector.broadcast %cst_23 : f32 to vector<256x1xf32>
      %42 = arith.addf %40, %41 : vector<256x1xf32>
      %43 = math.rsqrt %42 : vector<256x1xf32>
      %c0_24 = arith.constant 0 : index
      %c0_25 = arith.constant 0 : index
      %44 = vector.load %arg3[%c0_24, %c0_25] : memref<256x1xf32, #tpu.memory_space<vmem>>, vector<256x1xf32>
      %45 = arith.mulf %44, %43 : vector<256x1xf32>
      %cst_26 = arith.constant 1.11111116 : f32
      %46 = vector.broadcast %cst_26 : f32 to vector<256x1xf32>
      %47 = arith.mulf %45, %46 : vector<256x1xf32>
      %c0_27 = arith.constant 0 : index
      %c0_28 = arith.constant 0 : index
      %48 = vector.load %arg5[%c0_27, %c0_28] : memref<256x1xf32, #tpu.memory_space<vmem>>, vector<256x1xf32>
      tpu.vector_store %arg5[%c0_27, %c0_28], %47 {strides = array<i32>} : memref<256x1xf32, #tpu.memory_space<vmem>>, vector<256x1xf32>,
      %c0_29 = arith.constant 0 : index
      %c0_30 = arith.constant 0 : index
      %49 = vector.load %arg4[%c0_29, %c0_30] : memref<256x1xf32, #tpu.memory_space<vmem>>, vector<256x1xf32>
      %50 = arith.mulf %33, %45 : vector<256x1xf32>
      %51 = arith.subf %49, %50 : vector<256x1xf32>
      %cst_31 = arith.constant 1.11111116 : f32
      %52 = vector.broadcast %cst_31 : f32 to vector<256x1xf32>
      %53 = arith.mulf %51, %52 : vector<256x1xf32>
      %c0_32 = arith.constant 0 : index
      %c0_33 = arith.constant 0 : index
      %54 = vector.load %arg6[%c0_32, %c0_33] : memref<256x1xf32, #tpu.memory_space<vmem>>, vector<256x1xf32>
      tpu.vector_store %arg6[%c0_32, %c0_33], %53 {strides = array<i32>} : memref<256x1xf32, #tpu.memory_space<vmem>>, vector<256x1xf32>,
    } else {
    }
    return
  }
  func.func @transform_0(%arg0: i32, %arg1: i32) -> (i32, i32, i32) {
    %c0_i32 = arith.constant 0 : i32
    %c0_i32_0 = arith.constant 0 : i32
    return %arg0, %c0_i32, %arg1 : i32, i32, i32
  }
  func.func @transform_1(%arg0: i32, %arg1: i32) -> (i32, i32) {
    %c0_i32 = arith.constant 0 : i32
    %c0_i32_0 = arith.constant 0 : i32
    %c0_i32_1 = arith.constant 0 : i32
    return %c0_i32, %c0_i32_0 : i32, i32
  }
  func.func @transform_2(%arg0: i32, %arg1: i32) -> (i32, i32) {
    %c0_i32 = arith.constant 0 : i32
    %c0_i32_0 = arith.constant 0 : i32
    %c0_i32_1 = arith.constant 0 : i32
    return %c0_i32, %c0_i32_0 : i32, i32
  }
  func.func @transform_3(%arg0: i32, %arg1: i32) -> (i32, i32) {
    %c0_i32 = arith.constant 0 : i32
    %c0_i32_0 = arith.constant 0 : i32
    %c0_i32_1 = arith.constant 0 : i32
    return %c0_i32, %c0_i32_0 : i32, i32
  }
  func.func @transform_4(%arg0: i32, %arg1: i32) -> (i32, i32) {
    %c0_i32 = arith.constant 0 : i32
    %c0_i32_0 = arith.constant 0 : i32
    %c0_i32_1 = arith.constant 0 : i32
    return %c0_i32, %c0_i32_0 : i32, i32
  }
}

</mosaic_0001>

<llo_original>
// kernel: tpu_custom_call.1
$region0: #{tpu_custom_call.1}
  #allocation0 [shape = 'u32[]', space=smem, size = 0x4, offset = 0x4, fixed_abs, tag = 'smem constant byte address 0x4 - core index']
  #allocation1 [shape = 'u32[144,128]{1,0:T(1,128)}', space=vmem, size = 0x12000, scoped, tag = 'internal scratch']
  #allocation2 [shape = 'f32[256,1]{1,0:T(8,128)}', space=vmem, size = 0x20000, scoped, tag = 'scratch operand']
  #allocation3 [shape = 'f32[256,1]{1,0:T(8,128)}', space=vmem, size = 0x20000, scoped, tag = 'scratch operand']
  %s0 = inlined_call_operand.vmem [shape: f32[1,256,784], index: 0, kind: input, shape index: {}]
  %s1 = inlined_call_operand.vmem [shape: f32[256,1], index: 1, kind: input, shape index: {}]
  %s2 = inlined_call_operand.vmem [shape: f32[256,1], index: 2, kind: input, shape index: {}]
  %s3 = inlined_call_operand.vmem [shape: f32[256,1], index: 3, kind: output, shape index: {0}]
  %s4 = inlined_call_operand.vmem [shape: f32[256,1], index: 4, kind: output, shape index: {1}]
  %5 = xla_tuple %s3, %s4
  %s6 = sld [smem:[#allocation0]]
  $region127: #{tpu_custom_call.1} parent=0
    _
  %s8 = ssub.s32 1, %s6
  %s9 = scalar_select 0, %s8, %s6
  $region1: #{tpu_custom_call.1} parent=0
    #allocation4 [shape = 'u8[1048576]{0}', space=vmem, size = 0x100000, scoped, tag = 'input window, operand 0']
    loop: start=0, step=1, limit=4
    $region2: #{tpu_custom_call.1} parent=1 // loop_pre_header
      _
    $region3: #{tpu_custom_call.1} parent=1 // loop_header
      %s11 = sphi 0, %s15
      %p12 = scmp.ge.s32.totalorder %s11, 4
      %s18 = sphi 0, %s30
      %s19 = sphi 0, %s26
      %s20 = sphi 0, %s18
      %s21 = sphi 0, %s19
      %s22 = sphi 0, %s20
      %s23 = sphi 0, %s21
      %s35 = sphi 0, %s37
      %s38 = sphi 0, %s35
      %s39 = sphi 0, %s38
      %s55 = sphi 0, %s39
      %s59 = sphi 0, %s59
      %s61 = sphi 0, %s59
      %s62 = sphi 0, %s61
      %s76 = sphi 0, %s62
      %s80 = sphi 0, %s80
      %s82 = sphi 0, %s80
      %s83 = sphi 0, %s82
      %s97 = sphi 0, %s83
      %s101 = sphi 0, %s101
      %s103 = sphi 0, %s101
      %s104 = sphi 0, %s103
      %s118 = sphi 0, %s104
      %s122 = sphi 0, %s122
      %s124 = sphi 0, %s122
      %s125 = sphi 0, %s124
      %s139 = sphi 0, %s125
    $region4: #{tpu_custom_call.1} parent=1 // loop_header_branch
      %14 = sbr.rel (%p12) target = $region8
    $region5: #{tpu_custom_call.1} parent=1 // loop_body
      %s16 = ssub.s32 %s11, 1
      %s17 = ssub.s32 %s11, 2
      %s24 = sadd.s32 1, %s19
      %p25 = scmp.ge.s32.totalorder %s24, 2
      %s26 = scalar_select %p25, 0, %s24
      %s27 = sadd.s32 1, %s18
      %s28 = scalar_select %p25, %s27, %s18
      %p29 = scmp.ge.s32.totalorder %s28, 1
      %s30 = scalar_select %p29, 0, %s28
      %s31 = ssub.s32 %s18, %s30
      %s32 = ssub.s32 %s19, %s26
      %s33 = sor.u32 %s31, %s32
      %p34 = scmp.eq.s32.totalorder %s33, 0
      %s36 = sadd.s32 %s35, 1
      %s37 = scalar_select %p34, %s35, %s36
      %p40 = pneg %p34
      %p41 = scmp.eq.s32.totalorder %s11, 1
      %p42 = por %p40, %p41
      %p43 = scmp.ne.s32.totalorder %s35, %s38
      %p44 = scmp.eq.s32.totalorder %s11, 0
      %p45 = por %p43, %p44
      %p46 = scmp.ne.s32.totalorder %s35, %s38
      %p47 = scmp.eq.s32.totalorder %s16, 1
      %p48 = por %p46, %p47
      %p49 = scmp.ne.s32.totalorder %s38, %s39
      %p50 = scmp.eq.s32.totalorder %s16, 0
      %p51 = por %p49, %p50
      %p52 = scmp.ne.s32.totalorder %s38, %s39
      %p53 = scmp.eq.s32.totalorder %s17, 1
      %p54 = por %p52, %p53
      %p56 = scmp.ne.s32.totalorder %s39, %s55
      %p57 = scmp.eq.s32.totalorder %s17, 0
      %p58 = por %p56, %p57
      %s60 = sadd.s32 %s59, 1
      %p63 = scmp.eq.s32.totalorder %s11, 1
      %p64 = scmp.ne.s32.totalorder %s59, %s61
      %p65 = scmp.eq.s32.totalorder %s11, 0
      %p66 = por %p64, %p65
      %p67 = scmp.ne.s32.totalorder %s59, %s61
      %p68 = scmp.eq.s32.totalorder %s16, 1
      %p69 = por %p67, %p68
      %p70 = scmp.ne.s32.totalorder %s61, %s62
      %p71 = scmp.eq.s32.totalorder %s16, 0
      %p72 = por %p70, %p71
      %p73 = scmp.ne.s32.totalorder %s61, %s62
      %p74 = scmp.eq.s32.totalorder %s17, 1
      %p75 = por %p73, %p74
      %p77 = scmp.ne.s32.totalorder %s62, %s76
      %p78 = scmp.eq.s32.totalorder %s17, 0
      %p79 = por %p77, %p78
      %s81 = sadd.s32 %s80, 1
      %p84 = scmp.eq.s32.totalorder %s11, 1
      %p85 = scmp.ne.s32.totalorder %s80, %s82
      %p86 = scmp.eq.s32.totalorder %s11, 0
      %p87 = por %p85, %p86
      %p88 = scmp.ne.s32.totalorder %s80, %s82
      %p89 = scmp.eq.s32.totalorder %s16, 1
      %p90 = por %p88, %p89
      %p91 = scmp.ne.s32.totalorder %s82, %s83
      %p92 = scmp.eq.s32.totalorder %s16, 0
      %p93 = por %p91, %p92
      %p94 = scmp.ne.s32.totalorder %s82, %s83
      %p95 = scmp.eq.s32.totalorder %s17, 1
      %p96 = por %p94, %p95
      %p98 = scmp.ne.s32.totalorder %s83, %s97
      %p99 = scmp.eq.s32.totalorder %s17, 0
      %p100 = por %p98, %p99
      %s102 = sadd.s32 %s101, 1
      %p105 = scmp.eq.s32.totalorder %s11, 1
      %p106 = scmp.ne.s32.totalorder %s101, %s103
      %p107 = scmp.eq.s32.totalorder %s11, 0
      %p108 = por %p106, %p107
      %p109 = scmp.ne.s32.totalorder %s101, %s103
      %p110 = scmp.eq.s32.totalorder %s16, 1
      %p111 = por %p109, %p110
      %p112 = scmp.ne.s32.totalorder %s103, %s104
      %p113 = scmp.eq.s32.totalorder %s16, 0
      %p114 = por %p112, %p113
      %p115 = scmp.ne.s32.totalorder %s103, %s104
      %p116 = scmp.eq.s32.totalorder %s17, 1
      %p117 = por %p115, %p116
      %p119 = scmp.ne.s32.totalorder %s104, %s118
      %p120 = scmp.eq.s32.totalorder %s17, 0
      %p121 = por %p119, %p120
      %s123 = sadd.s32 %s122, 1
      %p126 = scmp.eq.s32.totalorder %s11, 1
      %p127 = scmp.ne.s32.totalorder %s122, %s124
      %p128 = scmp.eq.s32.totalorder %s11, 0
      %p129 = por %p127, %p128
      %p130 = scmp.ne.s32.totalorder %s122, %s124
      %p131 = scmp.eq.s32.totalorder %s16, 1
      %p132 = por %p130, %p131
      %p133 = scmp.ne.s32.totalorder %s124, %s125
      %p134 = scmp.eq.s32.totalorder %s16, 0
      %p135 = por %p133, %p134
      %p136 = scmp.ne.s32.totalorder %s124, %s125
      %p137 = scmp.eq.s32.totalorder %s17, 1
      %p138 = por %p136, %p137
      %p140 = scmp.ne.s32.totalorder %s125, %s139
      %p141 = scmp.eq.s32.totalorder %s17, 0
      %p142 = por %p140, %p141
      %p143 = scmp.le.s32.totalorder 1, %s11
      %p144 = scmp.lt.s32.totalorder %s11, 3
      %p145 = pnand %p143, %p144
      %p146 = pneg %p145
      // Predicated region
      $region9: #{tpu_custom_call.1} parent=5 // pred_check
        _
      $region10: #{tpu_custom_call.1} parent=5 // pred_check_branch
        %148 = sbr.rel (%p145) target = $region12
      $region11: #{tpu_custom_call.1} parent=5 // pred_region
        %s149 = ssub.s32 %s11, 1
        // Predicated region
        $region13: #{tpu_custom_call.1} parent=11 // pred_check
          %p150 = pneg %p72
        $region14: #{tpu_custom_call.1} parent=11 // pred_check_branch
          %152 = sbr.rel (%p150) target = $region16
        $region15: #{tpu_custom_call.1} parent=11 // pred_region
          _
        $region16: #{tpu_custom_call.1} parent=11 // pred_fallthru
          _
        // Predicated region
        $region17: #{tpu_custom_call.1} parent=11 // pred_check
          %p153 = pneg %p93
        $region18: #{tpu_custom_call.1} parent=11 // pred_check_branch
          %155 = sbr.rel (%p153) target = $region20
        $region19: #{tpu_custom_call.1} parent=11 // pred_region
          _
        $region20: #{tpu_custom_call.1} parent=11 // pred_fallthru
          _
      $region12: #{tpu_custom_call.1} parent=5 // pred_fallthru
        _
      %p156 = scmp.lt.s32.totalorder %s11, 2
      // Predicated region
      $region21: #{tpu_custom_call.1} parent=5 // pred_check
        %p157 = pneg %p156
      $region22: #{tpu_custom_call.1} parent=5 // pred_check_branch
        %159 = sbr.rel (%p157) target = $region24
      $region23: #{tpu_custom_call.1} parent=5 // pred_region
        // Predicated region
        $region25: #{tpu_custom_call.1} parent=23 // pred_check
          %p160 = pneg %p45
        $region26: #{tpu_custom_call.1} parent=23 // pred_check_branch
          %162 = sbr.rel (%p160) target = $region28
        $region27: #{tpu_custom_call.1} parent=23 // pred_region
          %s163 = sand.u32 %s35, 1
          %s164 = sand.u32 %s35, 1
          %s165 = smul.addr %s164, 1024
          %s166 = scalar_lea.vmem [#allocation4], %s165
          %s167 = smul.u32 4, %s19
          %s168 = ssub.s32 7, %s167
          %p169 = scmp.lt.s32.totalorder %s168, 4
          %s170 = scalar_select %p169, %s168, 4
          %s171 = smul.u32 4096, %s170
          %p172 = scmp.ne.s32.totalorder 0, %s171
          %s173 = smul.addr %s18, 224
          %s174 = sadd.s32 %s167, %s173
          %s175 = smul.addr %s174, 8
          %s176 = scalar_lea.vmem %s0, %s175
          %s177 = smul.u32 %s170, 8
          // Predicated region
          $region29: #{tpu_custom_call.1} parent=27 // pred_check
            %p178 = pneg %p172
          $region30: #{tpu_custom_call.1} parent=27 // pred_check_branch
            %180 = sbr.rel (%p178) target = $region32
          $region31: #{tpu_custom_call.1} parent=27 // pred_region
            %p181 = scmp.lt.u32.totalorder %s177, 8
            %p182 = pneg %p181
            // Predicated region
            $region33: #{tpu_custom_call.1} parent=31 // pred_check
              _
            $region34: #{tpu_custom_call.1} parent=31 // pred_check_branch
              %184 = sbr.rel (%p181) target = $region36
            $region35: #{tpu_custom_call.1} parent=31 // pred_region
              %s262 = sand.u32 %s177, 7
              %p263 = scmp.eq.s32.totalorder %s262, 0
              // Predicated region
              $region48: #{tpu_custom_call.1} parent=35 // pred_check
                %p264 = pneg %p263
              $region49: #{tpu_custom_call.1} parent=35 // pred_check_branch
                %266 = sbr.rel (%p264) target = $region51
              $region50: #{tpu_custom_call.1} parent=35 // pred_region
                %s267 = sshrl.u32 %s177, 3
                %s268 = sshrl.u32 %s267, 1
                // While loop
                $region52: #{tpu_custom_call.1} parent=50 // loop_pre_header
                  _
                $region53: #{tpu_custom_call.1} parent=50 // loop_header
                  %s272 = sphi 0, %s274
                  %p273 = scmp.ge.s32.totalorder %s272, %s268
                  %s277 = sphi 0, %s410
                  %s278 = sphi %s176, %s413
                  %s279 = sphi %s166, %s414
                $region54: #{tpu_custom_call.1} parent=50 // loop_header_branch
                  %276 = sbr.rel (%p273) target = $region58
                $region55: #{tpu_custom_call.1} parent=50 // loop_body
                  %v280 = vld [vmem:[%s278] sm:$0xff]
                  %281 = vst [vmem:[%s279] sm:$0xff] %v280
                  %v282 = vld [vmem:[%s278 + $0x8] sm:$0xff]
                  %283 = vst [vmem:[%s279 + $0x8] sm:$0xff] %v282
                  %v284 = vld [vmem:[%s278 + $0x38] sm:$0xff]
                  %285 = vst [vmem:[%s279 + $0x20] sm:$0xff] %v284
                  %v286 = vld [vmem:[%s278 + $0x40] sm:$0xff]
                  %287 = vst [vmem:[%s279 + $0x28] sm:$0xff] %v286
                  %v288 = vld [vmem:[%s278 + $0x70] sm:$0xff]
                  %289 = vst [vmem:[%s279 + $0x40] sm:$0xff] %v288
                  %v290 = vld [vmem:[%s278 + $0x78] sm:$0xff]
                  %291 = vst [vmem:[%s279 + $0x48] sm:$0xff] %v290
                  %v292 = vld [vmem:[%s278 + $0xa8] sm:$0xff]
                  %293 = vst [vmem:[%s279 + $0x60] sm:$0xff] %v292
                  %v294 = vld [vmem:[%s278 + $0xb0] sm:$0xff]
                  %295 = vst [vmem:[%s279 + $0x68] sm:$0xff] %v294
                  %v296 = vld [vmem:[%s278 + $0xe0] sm:$0xff]
                  %297 = vst [vmem:[%s279 + $0x80] sm:$0xff] %v296
                  %v298 = vld [vmem:[%s278 + $0xe8] sm:$0xff]
                  %299 = vst [vmem:[%s279 + $0x88] sm:$0xff] %v298
                  %v300 = vld [vmem:[%s278 + $0x118] sm:$0xff]
                  %301 = vst [vmem:[%s279 + $0xa0] sm:$0xff] %v300
                  %v302 = vld [vmem:[%s278 + $0x120] sm:$0xff]
                  %303 = vst [vmem:[%s279 + $0xa8] sm:$0xff] %v302
                  %v304 = vld [vmem:[%s278 + $0x150] sm:$0xff]
                  %305 = vst [vmem:[%s279 + $0xc0] sm:$0xff] %v304
                  %v306 = vld [vmem:[%s278 + $0x158] sm:$0xff]
                  %307 = vst [vmem:[%s279 + $0xc8] sm:$0xff] %v306
                  %v308 = vld [vmem:[%s278 + $0x188] sm:$0xff]
                  %309 = vst [vmem:[%s279 + $0xe0] sm:$0xff] %v308
                  %v310 = vld [vmem:[%s278 + $0x190] sm:$0xff]
                  %311 = vst [vmem:[%s279 + $0xe8] sm:$0xff] %v310
                  %v312 = vld [vmem:[%s278 + $0x1c0] sm:$0xff]
                  %313 = vst [vmem:[%s279 + $0x100] sm:$0xff] %v312
                  %v314 = vld [vmem:[%s278 + $0x1c8] sm:$0xff]
                  %315 = vst [vmem:[%s279 + $0x108] sm:$0xff] %v314
                  %v316 = vld [vmem:[%s278 + $0x1f8] sm:$0xff]
                  %317 = vst [vmem:[%s279 + $0x120] sm:$0xff] %v316
                  %v318 = vld [vmem:[%s278 + $0x200] sm:$0xff]
                  %319 = vst [vmem:[%s279 + $0x128] sm:$0xff] %v318
                  %v320 = vld [vmem:[%s278 + $0x230] sm:$0xff]
                  %321 = vst [vmem:[%s279 + $0x140] sm:$0xff] %v320
                  %v322 = vld [vmem:[%s278 + $0x238] sm:$0xff]
                  %323 = vst [vmem:[%s279 + $0x148] sm:$0xff] %v322
                  %v324 = vld [vmem:[%s278 + $0x268] sm:$0xff]
                  %325 = vst [vmem:[%s279 + $0x160] sm:$0xff] %v324
                  %v326 = vld [vmem:[%s278 + $0x270] sm:$0xff]
                  %327 = vst [vmem:[%s279 + $0x168] sm:$0xff] %v326
                  %v328 = vld [vmem:[%s278 + $0x2a0] sm:$0xff]
                  %329 = vst [vmem:[%s279 + $0x180] sm:$0xff] %v328
                  %v330 = vld [vmem:[%s278 + $0x2a8] sm:$0xff]
                  %331 = vst [vmem:[%s279 + $0x188] sm:$0xff] %v330
                  %v332 = vld [vmem:[%s278 + $0x2d8] sm:$0xff]
                  %333 = vst [vmem:[%s279 + $0x1a0] sm:$0xff] %v332
                  %v334 = vld [vmem:[%s278 + $0x2e0] sm:$0xff]
                  %335 = vst [vmem:[%s279 + $0x1a8] sm:$0xff] %v334
                  %v336 = vld [vmem:[%s278 + $0x310] sm:$0xff]
                  %337 = vst [vmem:[%s279 + $0x1c0] sm:$0xff] %v336
                  %v338 = vld [vmem:[%s278 + $0x318] sm:$0xff]
                  %339 = vst [vmem:[%s279 + $0x1c8] sm:$0xff] %v338
                  %v340 = vld [vmem:[%s278 + $0x348] sm:$0xff]
                  %341 = vst [vmem:[%s279 + $0x1e0] sm:$0xff] %v340
                  %v342 = vld [vmem:[%s278 + $0x350] sm:$0xff]
                  %343 = vst [vmem:[%s279 + $0x1e8] sm:$0xff] %v342
                  %v344 = vld [vmem:[%s278 + $0x380] sm:$0xff]
                  %345 = vst [vmem:[%s279 + $0x200] sm:$0xff] %v344
                  %v346 = vld [vmem:[%s278 + $0x388] sm:$0xff]
                  %347 = vst [vmem:[%s279 + $0x208] sm:$0xff] %v346
                  %v348 = vld [vmem:[%s278 + $0x3b8] sm:$0xff]
                  %349 = vst [vmem:[%s279 + $0x220] sm:$0xff] %v348
                  %v350 = vld [vmem:[%s278 + $0x3c0] sm:$0xff]
                  %351 = vst [vmem:[%s279 + $0x228] sm:$0xff] %v350
                  %v352 = vld [vmem:[%s278 + $0x3f0] sm:$0xff]
                  %353 = vst [vmem:[%s279 + $0x240] sm:$0xff] %v352
                  %v354 = vld [vmem:[%s278 + $0x3f8] sm:$0xff]
                  %355 = vst [vmem:[%s279 + $0x248] sm:$0xff] %v354
                  %v356 = vld [vmem:[%s278 + $0x428] sm:$0xff]
                  %357 = vst [vmem:[%s279 + $0x260] sm:$0xff] %v356
                  %v358 = vld [vmem:[%s278 + $0x430] sm:$0xff]
                  %359 = vst [vmem:[%s279 + $0x268] sm:$0xff] %v358
                  %v360 = vld [vmem:[%s278 + $0x460] sm:$0xff]
                  %361 = vst [vmem:[%s279 + $0x280] sm:$0xff] %v360
                  %v362 = vld [vmem:[%s278 + $0x468] sm:$0xff]
                  %363 = vst [vmem:[%s279 + $0x288] sm:$0xff] %v362
                  %v364 = vld [vmem:[%s278 + $0x498] sm:$0xff]
                  %365 = vst [vmem:[%s279 + $0x2a0] sm:$0xff] %v364
                  %v366 = vld [vmem:[%s278 + $0x4a0] sm:$0xff]
                  %367 = vst [vmem:[%s279 + $0x2a8] sm:$0xff] %v366
                  %v368 = vld [vmem:[%s278 + $0x4d0] sm:$0xff]
                  %369 = vst [vmem:[%s279 + $0x2c0] sm:$0xff] %v368
                  %v370 = vld [vmem:[%s278 + $0x4d8] sm:$0xff]
                  %371 = vst [vmem:[%s279 + $0x2c8] sm:$0xff] %v370
                  %v372 = vld [vmem:[%s278 + $0x508] sm:$0xff]
                  %373 = vst [vmem:[%s279 + $0x2e0] sm:$0xff] %v372
                  %v374 = vld [vmem:[%s278 + $0x510] sm:$0xff]
                  %375 = vst [vmem:[%s279 + $0x2e8] sm:$0xff] %v374
                  %v376 = vld [vmem:[%s278 + $0x540] sm:$0xff]
                  %377 = vst [vmem:[%s279 + $0x300] sm:$0xff] %v376
                  %v378 = vld [vmem:[%s278 + $0x548] sm:$0xff]
                  %379 = vst [vmem:[%s279 + $0x308] sm:$0xff] %v378
                  %v380 = vld [vmem:[%s278 + $0x578] sm:$0xff]
                  %381 = vst [vmem:[%s279 + $0x320] sm:$0xff] %v380
                  %v382 = vld [vmem:[%s278 + $0x580] sm:$0xff]
                  %383 = vst [vmem:[%s279 + $0x328] sm:$0xff] %v382
                  %v384 = vld [vmem:[%s278 + $0x5b0] sm:$0xff]
                  %385 = vst [vmem:[%s279 + $0x340] sm:$0xff] %v384
                  %v386 = vld [vmem:[%s278 + $0x5b8] sm:$0xff]
                  %387 = vst [vmem:[%s279 + $0x348] sm:$0xff] %v386
                  %v388 = vld [vmem:[%s278 + $0x5e8] sm:$0xff]
                  %389 = vst [vmem:[%s279 + $0x360] sm:$0xff] %v388
                  %v390 = vld [vmem:[%s278 + $0x5f0] sm:$0xff]
                  %391 = vst [vmem:[%s279 + $0x368] sm:$0xff] %v390
                  %v392 = vld [vmem:[%s278 + $0x620] sm:$0xff]
                  %393 = vst [vmem:[%s279 + $0x380] sm:$0xff] %v392
                  %v394 = vld [vmem:[%s278 + $0x628] sm:$0xff]
                  %395 = vst [vmem:[%s279 + $0x388] sm:$0xff] %v394
                  %v396 = vld [vmem:[%s278 + $0x658] sm:$0xff]
                  %397 = vst [vmem:[%s279 + $0x3a0] sm:$0xff] %v396
                  %v398 = vld [vmem:[%s278 + $0x660] sm:$0xff]
                  %399 = vst [vmem:[%s279 + $0x3a8] sm:$0xff] %v398
                  %v400 = vld [vmem:[%s278 + $0x690] sm:$0xff]
                  %401 = vst [vmem:[%s279 + $0x3c0] sm:$0xff] %v400
                  %v402 = vld [vmem:[%s278 + $0x698] sm:$0xff]
                  %403 = vst [vmem:[%s279 + $0x3c8] sm:$0xff] %v402
                  %v404 = vld [vmem:[%s278 + $0x6c8] sm:$0xff]
                  %405 = vst [vmem:[%s279 + $0x3e0] sm:$0xff] %v404
                  %v406 = vld [vmem:[%s278 + $0x6d0] sm:$0xff]
                  %407 = vst [vmem:[%s279 + $0x3e8] sm:$0xff] %v406
                  %s408 = sadd.s32 1, %s277
                  %p409 = scmp.ge.s32.totalorder %s408, %s268
                  %s410 = scalar_select %p409, 0, %s408
                  %s411 = smul.u32 %s410, 16
                  %s412 = smul.u32 %s410, 16
                  %s413 = scalar_lea.vmem %s176, %s411
                  %s414 = scalar_lea.vmem %s166, %s412 [#allocation4]
                $region56: #{tpu_custom_call.1} parent=50 // loop_footer
                  %s274 = sadd.s32 %s272, 1
                $region57: #{tpu_custom_call.1} parent=50 // loop_footer_branch
                  %271 = sbr.rel target = $region53
                $region58: #{tpu_custom_call.1} parent=50 // loop_exit
                  _
                %s415 = sshrl.u32 %s267, 1
                %s416 = sand.u32 %s267, 1
                %s417 = smul.u32 %s415, 2
                %s418 = smul.u32 128, %s417
                %s419 = sshra.s32 %s418, 4
                %s420 = scalar_lea.vmem %s176, %s419
                %s421 = smul.u32 128, %s417
                %s422 = sshra.s32 %s421, 4
                %s423 = scalar_lea.vmem %s166, %s422 [#allocation4]
                // While loop
                $region59: #{tpu_custom_call.1} parent=50 // loop_pre_header
                  _
                $region60: #{tpu_custom_call.1} parent=50 // loop_header
                  %s427 = sphi 0, %s429
                  %p428 = scmp.ge.s32.totalorder %s427, %s416
                  %s432 = sphi 0, %s501
                  %s433 = sphi %s420, %s504
                  %s434 = sphi %s423, %s505
                $region61: #{tpu_custom_call.1} parent=50 // loop_header_branch
                  %431 = sbr.rel (%p428) target = $region65
                $region62: #{tpu_custom_call.1} parent=50 // loop_body
                  %v435 = vld [vmem:[%s433] sm:$0xff]
                  %436 = vst [vmem:[%s434] sm:$0xff] %v435
                  %v437 = vld [vmem:[%s433 + $0x38] sm:$0xff]
                  %438 = vst [vmem:[%s434 + $0x20] sm:$0xff] %v437
                  %v439 = vld [vmem:[%s433 + $0x70] sm:$0xff]
                  %440 = vst [vmem:[%s434 + $0x40] sm:$0xff] %v439
                  %v441 = vld [vmem:[%s433 + $0xa8] sm:$0xff]
                  %442 = vst [vmem:[%s434 + $0x60] sm:$0xff] %v441
                  %v443 = vld [vmem:[%s433 + $0xe0] sm:$0xff]
                  %444 = vst [vmem:[%s434 + $0x80] sm:$0xff] %v443
                  %v445 = vld [vmem:[%s433 + $0x118] sm:$0xff]
                  %446 = vst [vmem:[%s434 + $0xa0] sm:$0xff] %v445
                  %v447 = vld [vmem:[%s433 + $0x150] sm:$0xff]
                  %448 = vst [vmem:[%s434 + $0xc0] sm:$0xff] %v447
                  %v449 = vld [vmem:[%s433 + $0x188] sm:$0xff]
                  %450 = vst [vmem:[%s434 + $0xe0] sm:$0xff] %v449
                  %v451 = vld [vmem:[%s433 + $0x1c0] sm:$0xff]
                  %452 = vst [vmem:[%s434 + $0x100] sm:$0xff] %v451
                  %v453 = vld [vmem:[%s433 + $0x1f8] sm:$0xff]
                  %454 = vst [vmem:[%s434 + $0x120] sm:$0xff] %v453
                  %v455 = vld [vmem:[%s433 + $0x230] sm:$0xff]
                  %456 = vst [vmem:[%s434 + $0x140] sm:$0xff] %v455
                  %v457 = vld [vmem:[%s433 + $0x268] sm:$0xff]
                  %458 = vst [vmem:[%s434 + $0x160] sm:$0xff] %v457
                  %v459 = vld [vmem:[%s433 + $0x2a0] sm:$0xff]
                  %460 = vst [vmem:[%s434 + $0x180] sm:$0xff] %v459
                  %v461 = vld [vmem:[%s433 + $0x2d8] sm:$0xff]
                  %462 = vst [vmem:[%s434 + $0x1a0] sm:$0xff] %v461
                  %v463 = vld [vmem:[%s433 + $0x310] sm:$0xff]
                  %464 = vst [vmem:[%s434 + $0x1c0] sm:$0xff] %v463
                  %v465 = vld [vmem:[%s433 + $0x348] sm:$0xff]
                  %466 = vst [vmem:[%s434 + $0x1e0] sm:$0xff] %v465
                  %v467 = vld [vmem:[%s433 + $0x380] sm:$0xff]
                  %468 = vst [vmem:[%s434 + $0x200] sm:$0xff] %v467
                  %v469 = vld [vmem:[%s433 + $0x3b8] sm:$0xff]
                  %470 = vst [vmem:[%s434 + $0x220] sm:$0xff] %v469
                  %v471 = vld [vmem:[%s433 + $0x3f0] sm:$0xff]
                  %472 = vst [vmem:[%s434 + $0x240] sm:$0xff] %v471
                  %v473 = vld [vmem:[%s433 + $0x428] sm:$0xff]
                  %474 = vst [vmem:[%s434 + $0x260] sm:$0xff] %v473
                  %v475 = vld [vmem:[%s433 + $0x460] sm:$0xff]
                  %476 = vst [vmem:[%s434 + $0x280] sm:$0xff] %v475
                  %v477 = vld [vmem:[%s433 + $0x498] sm:$0xff]
                  %478 = vst [vmem:[%s434 + $0x2a0] sm:$0xff] %v477
                  %v479 = vld [vmem:[%s433 + $0x4d0] sm:$0xff]
                  %480 = vst [vmem:[%s434 + $0x2c0] sm:$0xff] %v479
                  %v481 = vld [vmem:[%s433 + $0x508] sm:$0xff]
                  %482 = vst [vmem:[%s434 + $0x2e0] sm:$0xff] %v481
                  %v483 = vld [vmem:[%s433 + $0x540] sm:$0xff]
                  %484 = vst [vmem:[%s434 + $0x300] sm:$0xff] %v483
                  %v485 = vld [vmem:[%s433 + $0x578] sm:$0xff]
                  %486 = vst [vmem:[%s434 + $0x320] sm:$0xff] %v485
                  %v487 = vld [vmem:[%s433 + $0x5b0] sm:$0xff]
                  %488 = vst [vmem:[%s434 + $0x340] sm:$0xff] %v487
                  %v489 = vld [vmem:[%s433 + $0x5e8] sm:$0xff]
                  %490 = vst [vmem:[%s434 + $0x360] sm:$0xff] %v489
                  %v491 = vld [vmem:[%s433 + $0x620] sm:$0xff]
                  %492 = vst [vmem:[%s434 + $0x380] sm:$0xff] %v491
                  %v493 = vld [vmem:[%s433 + $0x658] sm:$0xff]
                  %494 = vst [vmem:[%s434 + $0x3a0] sm:$0xff] %v493
                  %v495 = vld [vmem:[%s433 + $0x690] sm:$0xff]
                  %496 = vst [vmem:[%s434 + $0x3c0] sm:$0xff] %v495
                  %v497 = vld [vmem:[%s433 + $0x6c8] sm:$0xff]
                  %498 = vst [vmem:[%s434 + $0x3e0] sm:$0xff] %v497
                  %s499 = sadd.s32 1, %s432
                  %p500 = scmp.ge.s32.totalorder %s499, %s416
                  %s501 = scalar_select %p500, 0, %s499
                  %s502 = smul.u32 %s501, 8
                  %s503 = smul.u32 %s501, 8
                  %s504 = scalar_lea.vmem %s420, %s502
                  %s505 = scalar_lea.vmem %s423, %s503 [#allocation4]
                $region63: #{tpu_custom_call.1} parent=50 // loop_footer
                  %s429 = sadd.s32 %s427, 1
                $region64: #{tpu_custom_call.1} parent=50 // loop_footer_branch
                  %426 = sbr.rel target = $region60
                $region65: #{tpu_custom_call.1} parent=50 // loop_exit
                  _
              $region51: #{tpu_custom_call.1} parent=35 // pred_fallthru
                _
              %p506 = pneg %p263
              // Predicated region
              $region66: #{tpu_custom_call.1} parent=35 // pred_check
                _
              $region67: #{tpu_custom_call.1} parent=35 // pred_check_branch
                %508 = sbr.rel (%p263) target = $region69
              $region68: #{tpu_custom_call.1} parent=35 // pred_region
                %s509 = sand.u32 %s177, 7
                %s510 = ssub.s32 %s177, %s509
                %s511 = scalar_lea.vmem %s176, %s510
                %s512 = ssub.s32 %s177, %s509
                %s513 = scalar_lea.vmem %s166, %s512 [#allocation4]
                %s514 = sshrl.u32 %s177, 3
                %s515 = sshrl.u32 %s514, 1
                // While loop
                $region70: #{tpu_custom_call.1} parent=68 // loop_pre_header
                  _
                $region71: #{tpu_custom_call.1} parent=68 // loop_header
                  %s519 = sphi 0, %s521
                  %p520 = scmp.ge.s32.totalorder %s519, %s515
                  %s524 = sphi 0, %s657
                  %s525 = sphi %s176, %s660
                  %s526 = sphi %s166, %s661
                $region72: #{tpu_custom_call.1} parent=68 // loop_header_branch
                  %523 = sbr.rel (%p520) target = $region76
                $region73: #{tpu_custom_call.1} parent=68 // loop_body
                  %v527 = vld [vmem:[%s525] sm:$0xff]
                  %528 = vst [vmem:[%s526] sm:$0xff] %v527
                  %v529 = vld [vmem:[%s525 + $0x8] sm:$0xff]
                  %530 = vst [vmem:[%s526 + $0x8] sm:$0xff] %v529
                  %v531 = vld [vmem:[%s525 + $0x38] sm:$0xff]
                  %532 = vst [vmem:[%s526 + $0x20] sm:$0xff] %v531
                  %v533 = vld [vmem:[%s525 + $0x40] sm:$0xff]
                  %534 = vst [vmem:[%s526 + $0x28] sm:$0xff] %v533
                  %v535 = vld [vmem:[%s525 + $0x70] sm:$0xff]
                  %536 = vst [vmem:[%s526 + $0x40] sm:$0xff] %v535
                  %v537 = vld [vmem:[%s525 + $0x78] sm:$0xff]
                  %538 = vst [vmem:[%s526 + $0x48] sm:$0xff] %v537
                  %v539 = vld [vmem:[%s525 + $0xa8] sm:$0xff]
                  %540 = vst [vmem:[%s526 + $0x60] sm:$0xff] %v539
                  %v541 = vld [vmem:[%s525 + $0xb0] sm:$0xff]
                  %542 = vst [vmem:[%s526 + $0x68] sm:$0xff] %v541
                  %v543 = vld [vmem:[%s525 + $0xe0] sm:$0xff]
                  %544 = vst [vmem:[%s526 + $0x80] sm:$0xff] %v543
                  %v545 = vld [vmem:[%s525 + $0xe8] sm:$0xff]
                  %546 = vst [vmem:[%s526 + $0x88] sm:$0xff] %v545
                  %v547 = vld [vmem:[%s525 + $0x118] sm:$0xff]
                  %548 = vst [vmem:[%s526 + $0xa0] sm:$0xff] %v547
                  %v549 = vld [vmem:[%s525 + $0x120] sm:$0xff]
                  %550 = vst [vmem:[%s526 + $0xa8] sm:$0xff] %v549
                  %v551 = vld [vmem:[%s525 + $0x150] sm:$0xff]
                  %552 = vst [vmem:[%s526 + $0xc0] sm:$0xff] %v551
                  %v553 = vld [vmem:[%s525 + $0x158] sm:$0xff]
                  %554 = vst [vmem:[%s526 + $0xc8] sm:$0xff] %v553
                  %v555 = vld [vmem:[%s525 + $0x188] sm:$0xff]
                  %556 = vst [vmem:[%s526 + $0xe0] sm:$0xff] %v555
                  %v557 = vld [vmem:[%s525 + $0x190] sm:$0xff]
                  %558 = vst [vmem:[%s526 + $0xe8] sm:$0xff] %v557
                  %v559 = vld [vmem:[%s525 + $0x1c0] sm:$0xff]
                  %560 = vst [vmem:[%s526 + $0x100] sm:$0xff] %v559
                  %v561 = vld [vmem:[%s525 + $0x1c8] sm:$0xff]
                  %562 = vst [vmem:[%s526 + $0x108] sm:$0xff] %v561
                  %v563 = vld [vmem:[%s525 + $0x1f8] sm:$0xff]
                  %564 = vst [vmem:[%s526 + $0x120] sm:$0xff] %v563
                  %v565 = vld [vmem:[%s525 + $0x200] sm:$0xff]
                  %566 = vst [vmem:[%s526 + $0x128] sm:$0xff] %v565
                  %v567 = vld [vmem:[%s525 + $0x230] sm:$0xff]
                  %568 = vst [vmem:[%s526 + $0x140] sm:$0xff] %v567
                  %v569 = vld [vmem:[%s525 + $0x238] sm:$0xff]
                  %570 = vst [vmem:[%s526 + $0x148] sm:$0xff] %v569
                  %v571 = vld [vmem:[%s525 + $0x268] sm:$0xff]
                  %572 = vst [vmem:[%s526 + $0x160] sm:$0xff] %v571
                  %v573 = vld [vmem:[%s525 + $0x270] sm:$0xff]
                  %574 = vst [vmem:[%s526 + $0x168] sm:$0xff] %v573
                  %v575 = vld [vmem:[%s525 + $0x2a0] sm:$0xff]
                  %576 = vst [vmem:[%s526 + $0x180] sm:$0xff] %v575
                  %v577 = vld [vmem:[%s525 + $0x2a8] sm:$0xff]
                  %578 = vst [vmem:[%s526 + $0x188] sm:$0xff] %v577
                  %v579 = vld [vmem:[%s525 + $0x2d8] sm:$0xff]
                  %580 = vst [vmem:[%s526 + $0x1a0] sm:$0xff] %v579
                  %v581 = vld [vmem:[%s525 + $0x2e0] sm:$0xff]
                  %582 = vst [vmem:[%s526 + $0x1a8] sm:$0xff] %v581
                  %v583 = vld [vmem:[%s525 + $0x310] sm:$0xff]
                  %584 = vst [vmem:[%s526 + $0x1c0] sm:$0xff] %v583
                  %v585 = vld [vmem:[%s525 + $0x318] sm:$0xff]
                  %586 = vst [vmem:[%s526 + $0x1c8] sm:$0xff] %v585
                  %v587 = vld [vmem:[%s525 + $0x348] sm:$0xff]
                  %588 = vst [vmem:[%s526 + $0x1e0] sm:$0xff] %v587
                  %v589 = vld [vmem:[%s525 + $0x350] sm:$0xff]
                  %590 = vst [vmem:[%s526 + $0x1e8] sm:$0xff] %v589
                  %v591 = vld [vmem:[%s525 + $0x380] sm:$0xff]
                  %592 = vst [vmem:[%s526 + $0x200] sm:$0xff] %v591
                  %v593 = vld [vmem:[%s525 + $0x388] sm:$0xff]
                  %594 = vst [vmem:[%s526 + $0x208] sm:$0xff] %v593
                  %v595 = vld [vmem:[%s525 + $0x3b8] sm:$0xff]
                  %596 = vst [vmem:[%s526 + $0x220] sm:$0xff] %v595
                  %v597 = vld [vmem:[%s525 + $0x3c0] sm:$0xff]
                  %598 = vst [vmem:[%s526 + $0x228] sm:$0xff] %v597
                  %v599 = vld [vmem:[%s525 + $0x3f0] sm:$0xff]
                  %600 = vst [vmem:[%s526 + $0x240] sm:$0xff] %v599
                  %v601 = vld [vmem:[%s525 + $0x3f8] sm:$0xff]
                  %602 = vst [vmem:[%s526 + $0x248] sm:$0xff] %v601
                  %v603 = vld [vmem:[%s525 + $0x428] sm:$0xff]
                  %604 = vst [vmem:[%s526 + $0x260] sm:$0xff] %v603
                  %v605 = vld [vmem:[%s525 + $0x430] sm:$0xff]
                  %606 = vst [vmem:[%s526 + $0x268] sm:$0xff] %v605
                  %v607 = vld [vmem:[%s525 + $0x460] sm:$0xff]
                  %608 = vst [vmem:[%s526 + $0x280] sm:$0xff] %v607
                  %v609 = vld [vmem:[%s525 + $0x468] sm:$0xff]
                  %610 = vst [vmem:[%s526 + $0x288] sm:$0xff] %v609
                  %v611 = vld [vmem:[%s525 + $0x498] sm:$0xff]
                  %612 = vst [vmem:[%s526 + $0x2a0] sm:$0xff] %v611
                  %v613 = vld [vmem:[%s525 + $0x4a0] sm:$0xff]
                  %614 = vst [vmem:[%s526 + $0x2a8] sm:$0xff] %v613
                  %v615 = vld [vmem:[%s525 + $0x4d0] sm:$0xff]
                  %616 = vst [vmem:[%s526 + $0x2c0] sm:$0xff] %v615
                  %v617 = vld [vmem:[%s525 + $0x4d8] sm:$0xff]
                  %618 = vst [vmem:[%s526 + $0x2c8] sm:$0xff] %v617
                  %v619 = vld [vmem:[%s525 + $0x508] sm:$0xff]
                  %620 = vst [vmem:[%s526 + $0x2e0] sm:$0xff] %v619
                  %v621 = vld [vmem:[%s525 + $0x510] sm:$0xff]
                  %622 = vst [vmem:[%s526 + $0x2e8] sm:$0xff] %v621
                  %v623 = vld [vmem:[%s525 + $0x540] sm:$0xff]
                  %624 = vst [vmem:[%s526 + $0x300] sm:$0xff] %v623
                  %v625 = vld [vmem:[%s525 + $0x548] sm:$0xff]
                  %626 = vst [vmem:[%s526 + $0x308] sm:$0xff] %v625
                  %v627 = vld [vmem:[%s525 + $0x578] sm:$0xff]
                  %628 = vst [vmem:[%s526 + $0x320] sm:$0xff] %v627
                  %v629 = vld [vmem:[%s525 + $0x580] sm:$0xff]
                  %630 = vst [vmem:[%s526 + $0x328] sm:$0xff] %v629
                  %v631 = vld [vmem:[%s525 + $0x5b0] sm:$0xff]
                  %632 = vst [vmem:[%s526 + $0x340] sm:$0xff] %v631
                  %v633 = vld [vmem:[%s525 + $0x5b8] sm:$0xff]
                  %634 = vst [vmem:[%s526 + $0x348] sm:$0xff] %v633
                  %v635 = vld [vmem:[%s525 + $0x5e8] sm:$0xff]
                  %636 = vst [vmem:[%s526 + $0x360] sm:$0xff] %v635
                  %v637 = vld [vmem:[%s525 + $0x5f0] sm:$0xff]
                  %638 = vst [vmem:[%s526 + $0x368] sm:$0xff] %v637
                  %v639 = vld [vmem:[%s525 + $0x620] sm:$0xff]
                  %640 = vst [vmem:[%s526 + $0x380] sm:$0xff] %v639
                  %v641 = vld [vmem:[%s525 + $0x628] sm:$0xff]
                  %642 = vst [vmem:[%s526 + $0x388] sm:$0xff] %v641
                  %v643 = vld [vmem:[%s525 + $0x658] sm:$0xff]
                  %644 = vst [vmem:[%s526 + $0x3a0] sm:$0xff] %v643
                  %v645 = vld [vmem:[%s525 + $0x660] sm:$0xff]
                  %646 = vst [vmem:[%s526 + $0x3a8] sm:$0xff] %v645
                  %v647 = vld [vmem:[%s525 + $0x690] sm:$0xff]
                  %648 = vst [vmem:[%s526 + $0x3c0] sm:$0xff] %v647
                  %v649 = vld [vmem:[%s525 + $0x698] sm:$0xff]
                  %650 = vst [vmem:[%s526 + $0x3c8] sm:$0xff] %v649
                  %v651 = vld [vmem:[%s525 + $0x6c8] sm:$0xff]
                  %652 = vst [vmem:[%s526 + $0x3e0] sm:$0xff] %v651
                  %v653 = vld [vmem:[%s525 + $0x6d0] sm:$0xff]
                  %654 = vst [vmem:[%s526 + $0x3e8] sm:$0xff] %v653
                  %s655 = sadd.s32 1, %s524
                  %p656 = scmp.ge.s32.totalorder %s655, %s515
                  %s657 = scalar_select %p656, 0, %s655
                  %s658 = smul.u32 %s657, 16
                  %s659 = smul.u32 %s657, 16
                  %s660 = scalar_lea.vmem %s176, %s658
                  %s661 = scalar_lea.vmem %s166, %s659 [#allocation4]
                $region74: #{tpu_custom_call.1} parent=68 // loop_footer
                  %s521 = sadd.s32 %s519, 1
                $region75: #{tpu_custom_call.1} parent=68 // loop_footer_branch
                  %518 = sbr.rel target = $region71
                $region76: #{tpu_custom_call.1} parent=68 // loop_exit
                  _
                %s662 = sshrl.u32 %s514, 1
                %s663 = sand.u32 %s514, 1
                %s664 = smul.u32 %s662, 2
                %s665 = smul.u32 128, %s664
                %s666 = sshra.s32 %s665, 4
                %s667 = scalar_lea.vmem %s176, %s666
                %s668 = smul.u32 128, %s664
                %s669 = sshra.s32 %s668, 4
                %s670 = scalar_lea.vmem %s166, %s669 [#allocation4]
                // While loop
                $region77: #{tpu_custom_call.1} parent=68 // loop_pre_header
                  _
                $region78: #{tpu_custom_call.1} parent=68 // loop_header
                  %s674 = sphi 0, %s676
                  %p675 = scmp.ge.s32.totalorder %s674, %s663
                  %s679 = sphi 0, %s748
                  %s680 = sphi %s667, %s751
                  %s681 = sphi %s670, %s752
                $region79: #{tpu_custom_call.1} parent=68 // loop_header_branch
                  %678 = sbr.rel (%p675) target = $region83
                $region80: #{tpu_custom_call.1} parent=68 // loop_body
                  %v682 = vld [vmem:[%s680] sm:$0xff]
                  %683 = vst [vmem:[%s681] sm:$0xff] %v682
                  %v684 = vld [vmem:[%s680 + $0x38] sm:$0xff]
                  %685 = vst [vmem:[%s681 + $0x20] sm:$0xff] %v684
                  %v686 = vld [vmem:[%s680 + $0x70] sm:$0xff]
                  %687 = vst [vmem:[%s681 + $0x40] sm:$0xff] %v686
                  %v688 = vld [vmem:[%s680 + $0xa8] sm:$0xff]
                  %689 = vst [vmem:[%s681 + $0x60] sm:$0xff] %v688
                  %v690 = vld [vmem:[%s680 + $0xe0] sm:$0xff]
                  %691 = vst [vmem:[%s681 + $0x80] sm:$0xff] %v690
                  %v692 = vld [vmem:[%s680 + $0x118] sm:$0xff]
                  %693 = vst [vmem:[%s681 + $0xa0] sm:$0xff] %v692
                  %v694 = vld [vmem:[%s680 + $0x150] sm:$0xff]
                  %695 = vst [vmem:[%s681 + $0xc0] sm:$0xff] %v694
                  %v696 = vld [vmem:[%s680 + $0x188] sm:$0xff]
                  %697 = vst [vmem:[%s681 + $0xe0] sm:$0xff] %v696
                  %v698 = vld [vmem:[%s680 + $0x1c0] sm:$0xff]
                  %699 = vst [vmem:[%s681 + $0x100] sm:$0xff] %v698
                  %v700 = vld [vmem:[%s680 + $0x1f8] sm:$0xff]
                  %701 = vst [vmem:[%s681 + $0x120] sm:$0xff] %v700
                  %v702 = vld [vmem:[%s680 + $0x230] sm:$0xff]
                  %703 = vst [vmem:[%s681 + $0x140] sm:$0xff] %v702
                  %v704 = vld [vmem:[%s680 + $0x268] sm:$0xff]
                  %705 = vst [vmem:[%s681 + $0x160] sm:$0xff] %v704
                  %v706 = vld [vmem:[%s680 + $0x2a0] sm:$0xff]
                  %707 = vst [vmem:[%s681 + $0x180] sm:$0xff] %v706
                  %v708 = vld [vmem:[%s680 + $0x2d8] sm:$0xff]
                  %709 = vst [vmem:[%s681 + $0x1a0] sm:$0xff] %v708
                  %v710 = vld [vmem:[%s680 + $0x310] sm:$0xff]
                  %711 = vst [vmem:[%s681 + $0x1c0] sm:$0xff] %v710
                  %v712 = vld [vmem:[%s680 + $0x348] sm:$0xff]
                  %713 = vst [vmem:[%s681 + $0x1e0] sm:$0xff] %v712
                  %v714 = vld [vmem:[%s680 + $0x380] sm:$0xff]
                  %715 = vst [vmem:[%s681 + $0x200] sm:$0xff] %v714
                  %v716 = vld [vmem:[%s680 + $0x3b8] sm:$0xff]
                  %717 = vst [vmem:[%s681 + $0x220] sm:$0xff] %v716
                  %v718 = vld [vmem:[%s680 + $0x3f0] sm:$0xff]
                  %719 = vst [vmem:[%s681 + $0x240] sm:$0xff] %v718
                  %v720 = vld [vmem:[%s680 + $0x428] sm:$0xff]
                  %721 = vst [vmem:[%s681 + $0x260] sm:$0xff] %v720
                  %v722 = vld [vmem:[%s680 + $0x460] sm:$0xff]
                  %723 = vst [vmem:[%s681 + $0x280] sm:$0xff] %v722
                  %v724 = vld [vmem:[%s680 + $0x498] sm:$0xff]
                  %725 = vst [vmem:[%s681 + $0x2a0] sm:$0xff] %v724
                  %v726 = vld [vmem:[%s680 + $0x4d0] sm:$0xff]
                  %727 = vst [vmem:[%s681 + $0x2c0] sm:$0xff] %v726
                  %v728 = vld [vmem:[%s680 + $0x508] sm:$0xff]
                  %729 = vst [vmem:[%s681 + $0x2e0] sm:$0xff] %v728
                  %v730 = vld [vmem:[%s680 + $0x540] sm:$0xff]
                  %731 = vst [vmem:[%s681 + $0x300] sm:$0xff] %v730
                  %v732 = vld [vmem:[%s680 + $0x578] sm:$0xff]
                  %733 = vst [vmem:[%s681 + $0x320] sm:$0xff] %v732
                  %v734 = vld [vmem:[%s680 + $0x5b0] sm:$0xff]
                  %735 = vst [vmem:[%s681 + $0x340] sm:$0xff] %v734
                  %v736 = vld [vmem:[%s680 + $0x5e8] sm:$0xff]
                  %737 = vst [vmem:[%s681 + $0x360] sm:$0xff] %v736
                  %v738 = vld [vmem:[%s680 + $0x620] sm:$0xff]
                  %739 = vst [vmem:[%s681 + $0x380] sm:$0xff] %v738
                  %v740 = vld [vmem:[%s680 + $0x658] sm:$0xff]
                  %741 = vst [vmem:[%s681 + $0x3a0] sm:$0xff] %v740
                  %v742 = vld [vmem:[%s680 + $0x690] sm:$0xff]
                  %743 = vst [vmem:[%s681 + $0x3c0] sm:$0xff] %v742
                  %v744 = vld [vmem:[%s680 + $0x6c8] sm:$0xff]
                  %745 = vst [vmem:[%s681 + $0x3e0] sm:$0xff] %v744
                  %s746 = sadd.s32 1, %s679
                  %p747 = scmp.ge.s32.totalorder %s746, %s663
                  %s748 = scalar_select %p747, 0, %s746
                  %s749 = smul.u32 %s748, 8
                  %s750 = smul.u32 %s748, 8
                  %s751 = scalar_lea.vmem %s667, %s749
                  %s752 = scalar_lea.vmem %s670, %s750 [#allocation4]
                $region81: #{tpu_custom_call.1} parent=68 // loop_footer
                  %s676 = sadd.s32 %s674, 1
                $region82: #{tpu_custom_call.1} parent=68 // loop_footer_branch
                  %673 = sbr.rel target = $region78
                $region83: #{tpu_custom_call.1} parent=68 // loop_exit
                  _
                %s753 = sshll.u32 1, %s509
                %s754 = ssub.s32 %s753, 1
                loop: start=0, step=1, limit=1
                $region84: #{tpu_custom_call.1} parent=68 // loop_pre_header
                  _
                $region85: #{tpu_custom_call.1} parent=68 // loop_header
                  %s756 = sphi 0, %s760
                  %p757 = scmp.ge.s32.totalorder %s756, 1
                  %s761 = sphi %s511, %s511
                  %s762 = sphi %s513, %s513
                $region86: #{tpu_custom_call.1} parent=68 // loop_header_branch
                  %759 = sbr.rel (%p757) target = $region90
                $region87: #{tpu_custom_call.1} parent=68 // loop_body
                  %v763 = vld [vmem:[%s761] sm:%s754]
                  %764 = vst [vmem:[%s762] sm:%s754] %v763
                  %v765 = vld [vmem:[%s761 + $0x38] sm:%s754]
                  %766 = vst [vmem:[%s762 + $0x20] sm:%s754] %v765
                  %v767 = vld [vmem:[%s761 + $0x70] sm:%s754]
                  %768 = vst [vmem:[%s762 + $0x40] sm:%s754] %v767
                  %v769 = vld [vmem:[%s761 + $0xa8] sm:%s754]
                  %770 = vst [vmem:[%s762 + $0x60] sm:%s754] %v769
                  %v771 = vld [vmem:[%s761 + $0xe0] sm:%s754]
                  %772 = vst [vmem:[%s762 + $0x80] sm:%s754] %v771
                  %v773 = vld [vmem:[%s761 + $0x118] sm:%s754]
                  %774 = vst [vmem:[%s762 + $0xa0] sm:%s754] %v773
                  %v775 = vld [vmem:[%s761 + $0x150] sm:%s754]
                  %776 = vst [vmem:[%s762 + $0xc0] sm:%s754] %v775
                  %v777 = vld [vmem:[%s761 + $0x188] sm:%s754]
                  %778 = vst [vmem:[%s762 + $0xe0] sm:%s754] %v777
                  %v779 = vld [vmem:[%s761 + $0x1c0] sm:%s754]
                  %780 = vst [vmem:[%s762 + $0x100] sm:%s754] %v779
                  %v781 = vld [vmem:[%s761 + $0x1f8] sm:%s754]
                  %782 = vst [vmem:[%s762 + $0x120] sm:%s754] %v781
                  %v783 = vld [vmem:[%s761 + $0x230] sm:%s754]
                  %784 = vst [vmem:[%s762 + $0x140] sm:%s754] %v783
                  %v785 = vld [vmem:[%s761 + $0x268] sm:%s754]
                  %786 = vst [vmem:[%s762 + $0x160] sm:%s754] %v785
                  %v787 = vld [vmem:[%s761 + $0x2a0] sm:%s754]
                  %788 = vst [vmem:[%s762 + $0x180] sm:%s754] %v787
                  %v789 = vld [vmem:[%s761 + $0x2d8] sm:%s754]
                  %790 = vst [vmem:[%s762 + $0x1a0] sm:%s754] %v789
                  %v791 = vld [vmem:[%s761 + $0x310] sm:%s754]
                  %792 = vst [vmem:[%s762 + $0x1c0] sm:%s754] %v791
                  %v793 = vld [vmem:[%s761 + $0x348] sm:%s754]
                  %794 = vst [vmem:[%s762 + $0x1e0] sm:%s754] %v793
                  %v795 = vld [vmem:[%s761 + $0x380] sm:%s754]
                  %796 = vst [vmem:[%s762 + $0x200] sm:%s754] %v795
                  %v797 = vld [vmem:[%s761 + $0x3b8] sm:%s754]
                  %798 = vst [vmem:[%s762 + $0x220] sm:%s754] %v797
                  %v799 = vld [vmem:[%s761 + $0x3f0] sm:%s754]
                  %800 = vst [vmem:[%s762 + $0x240] sm:%s754] %v799
                  %v801 = vld [vmem:[%s761 + $0x428] sm:%s754]
                  %802 = vst [vmem:[%s762 + $0x260] sm:%s754] %v801
                  %v803 = vld [vmem:[%s761 + $0x460] sm:%s754]
                  %804 = vst [vmem:[%s762 + $0x280] sm:%s754] %v803
                  %v805 = vld [vmem:[%s761 + $0x498] sm:%s754]
                  %806 = vst [vmem:[%s762 + $0x2a0] sm:%s754] %v805
                  %v807 = vld [vmem:[%s761 + $0x4d0] sm:%s754]
                  %808 = vst [vmem:[%s762 + $0x2c0] sm:%s754] %v807
                  %v809 = vld [vmem:[%s761 + $0x508] sm:%s754]
                  %810 = vst [vmem:[%s762 + $0x2e0] sm:%s754] %v809
                  %v811 = vld [vmem:[%s761 + $0x540] sm:%s754]
                  %812 = vst [vmem:[%s762 + $0x300] sm:%s754] %v811
                  %v813 = vld [vmem:[%s761 + $0x578] sm:%s754]
                  %814 = vst [vmem:[%s762 + $0x320] sm:%s754] %v813
                  %v815 = vld [vmem:[%s761 + $0x5b0] sm:%s754]
                  %816 = vst [vmem:[%s762 + $0x340] sm:%s754] %v815
                  %v817 = vld [vmem:[%s761 + $0x5e8] sm:%s754]
                  %818 = vst [vmem:[%s762 + $0x360] sm:%s754] %v817
                  %v819 = vld [vmem:[%s761 + $0x620] sm:%s754]
                  %820 = vst [vmem:[%s762 + $0x380] sm:%s754] %v819
                  %v821 = vld [vmem:[%s761 + $0x658] sm:%s754]
                  %822 = vst [vmem:[%s762 + $0x3a0] sm:%s754] %v821
                  %v823 = vld [vmem:[%s761 + $0x690] sm:%s754]
                  %824 = vst [vmem:[%s762 + $0x3c0] sm:%s754] %v823
                  %v825 = vld [vmem:[%s761 + $0x6c8] sm:%s754]
                  %826 = vst [vmem:[%s762 + $0x3e0] sm:%s754] %v825
                $region88: #{tpu_custom_call.1} parent=68 // loop_footer
                  %s760 = sadd.s32 1, %s756
                $region89: #{tpu_custom_call.1} parent=68 // loop_footer_branch
                  %755 = sbr.rel target = $region85
                $region90: #{tpu_custom_call.1} parent=68 // loop_exit
                  _
              $region69: #{tpu_custom_call.1} parent=35 // pred_fallthru
                _
            $region36: #{tpu_custom_call.1} parent=31 // pred_fallthru
              _
            // Predicated region
            $region37: #{tpu_custom_call.1} parent=31 // pred_check
              %p185 = pneg %p181
            $region38: #{tpu_custom_call.1} parent=31 // pred_check_branch
              %187 = sbr.rel (%p185) target = $region40
            $region39: #{tpu_custom_call.1} parent=31 // pred_region
              %s188 = sshll.u32 1, %s177
              %s189 = ssub.s32 %s188, 1
              loop: start=0, step=1, limit=1
              $region41: #{tpu_custom_call.1} parent=39 // loop_pre_header
                _
              $region42: #{tpu_custom_call.1} parent=39 // loop_header
                %s191 = sphi 0, %s195
                %p192 = scmp.ge.s32.totalorder %s191, 1
                %s196 = sphi %s176, %s176
                %s197 = sphi %s166, %s166
              $region43: #{tpu_custom_call.1} parent=39 // loop_header_branch
                %194 = sbr.rel (%p192) target = $region47
              $region44: #{tpu_custom_call.1} parent=39 // loop_body
                %v198 = vld [vmem:[%s196] sm:%s189]
                %199 = vst [vmem:[%s197] sm:%s189] %v198
                %v200 = vld [vmem:[%s196 + $0x38] sm:%s189]
                %201 = vst [vmem:[%s197 + $0x20] sm:%s189] %v200
                %v202 = vld [vmem:[%s196 + $0x70] sm:%s189]
                %203 = vst [vmem:[%s197 + $0x40] sm:%s189] %v202
                %v204 = vld [vmem:[%s196 + $0xa8] sm:%s189]
                %205 = vst [vmem:[%s197 + $0x60] sm:%s189] %v204
                %v206 = vld [vmem:[%s196 + $0xe0] sm:%s189]
                %207 = vst [vmem:[%s197 + $0x80] sm:%s189] %v206
                %v208 = vld [vmem:[%s196 + $0x118] sm:%s189]
                %209 = vst [vmem:[%s197 + $0xa0] sm:%s189] %v208
                %v210 = vld [vmem:[%s196 + $0x150] sm:%s189]
                %211 = vst [vmem:[%s197 + $0xc0] sm:%s189] %v210
                %v212 = vld [vmem:[%s196 + $0x188] sm:%s189]
                %213 = vst [vmem:[%s197 + $0xe0] sm:%s189] %v212
                %v214 = vld [vmem:[%s196 + $0x1c0] sm:%s189]
                %215 = vst [vmem:[%s197 + $0x100] sm:%s189] %v214
                %v216 = vld [vmem:[%s196 + $0x1f8] sm:%s189]
                %217 = vst [vmem:[%s197 + $0x120] sm:%s189] %v216
                %v218 = vld [vmem:[%s196 + $0x230] sm:%s189]
                %219 = vst [vmem:[%s197 + $0x140] sm:%s189] %v218
                %v220 = vld [vmem:[%s196 + $0x268] sm:%s189]
                %221 = vst [vmem:[%s197 + $0x160] sm:%s189] %v220
                %v222 = vld [vmem:[%s196 + $0x2a0] sm:%s189]
                %223 = vst [vmem:[%s197 + $0x180] sm:%s189] %v222
                %v224 = vld [vmem:[%s196 + $0x2d8] sm:%s189]
                %225 = vst [vmem:[%s197 + $0x1a0] sm:%s189] %v224
                %v226 = vld [vmem:[%s196 + $0x310] sm:%s189]
                %227 = vst [vmem:[%s197 + $0x1c0] sm:%s189] %v226
                %v228 = vld [vmem:[%s196 + $0x348] sm:%s189]
                %229 = vst [vmem:[%s197 + $0x1e0] sm:%s189] %v228
                %v230 = vld [vmem:[%s196 + $0x380] sm:%s189]
                %231 = vst [vmem:[%s197 + $0x200] sm:%s189] %v230
                %v232 = vld [vmem:[%s196 + $0x3b8] sm:%s189]
                %233 = vst [vmem:[%s197 + $0x220] sm:%s189] %v232
                %v234 = vld [vmem:[%s196 + $0x3f0] sm:%s189]
                %235 = vst [vmem:[%s197 + $0x240] sm:%s189] %v234
                %v236 = vld [vmem:[%s196 + $0x428] sm:%s189]
                %237 = vst [vmem:[%s197 + $0x260] sm:%s189] %v236
                %v238 = vld [vmem:[%s196 + $0x460] sm:%s189]
                %239 = vst [vmem:[%s197 + $0x280] sm:%s189] %v238
                %v240 = vld [vmem:[%s196 + $0x498] sm:%s189]
                %241 = vst [vmem:[%s197 + $0x2a0] sm:%s189] %v240
                %v242 = vld [vmem:[%s196 + $0x4d0] sm:%s189]
                %243 = vst [vmem:[%s197 + $0x2c0] sm:%s189] %v242
                %v244 = vld [vmem:[%s196 + $0x508] sm:%s189]
                %245 = vst [vmem:[%s197 + $0x2e0] sm:%s189] %v244
                %v246 = vld [vmem:[%s196 + $0x540] sm:%s189]
                %247 = vst [vmem:[%s197 + $0x300] sm:%s189] %v246
                %v248 = vld [vmem:[%s196 + $0x578] sm:%s189]
                %249 = vst [vmem:[%s197 + $0x320] sm:%s189] %v248
                %v250 = vld [vmem:[%s196 + $0x5b0] sm:%s189]
                %251 = vst [vmem:[%s197 + $0x340] sm:%s189] %v250
                %v252 = vld [vmem:[%s196 + $0x5e8] sm:%s189]
                %253 = vst [vmem:[%s197 + $0x360] sm:%s189] %v252
                %v254 = vld [vmem:[%s196 + $0x620] sm:%s189]
                %255 = vst [vmem:[%s197 + $0x380] sm:%s189] %v254
                %v256 = vld [vmem:[%s196 + $0x658] sm:%s189]
                %257 = vst [vmem:[%s197 + $0x3a0] sm:%s189] %v256
                %v258 = vld [vmem:[%s196 + $0x690] sm:%s189]
                %259 = vst [vmem:[%s197 + $0x3c0] sm:%s189] %v258
                %v260 = vld [vmem:[%s196 + $0x6c8] sm:%s189]
                %261 = vst [vmem:[%s197 + $0x3e0] sm:%s189] %v260
              $region45: #{tpu_custom_call.1} parent=39 // loop_footer
                %s195 = sadd.s32 1, %s191
              $region46: #{tpu_custom_call.1} parent=39 // loop_footer_branch
                %190 = sbr.rel target = $region42
              $region47: #{tpu_custom_call.1} parent=39 // loop_exit
                _
            $region40: #{tpu_custom_call.1} parent=31 // pred_fallthru
              _
          $region32: #{tpu_custom_call.1} parent=27 // pred_fallthru
            _
          %827 = vnop
        $region28: #{tpu_custom_call.1} parent=23 // pred_fallthru
          _
      $region24: #{tpu_custom_call.1} parent=5 // pred_fallthru
        _
      %p828 = scmp.le.s32.totalorder 1, %s11
      %p829 = scmp.lt.s32.totalorder %s11, 3
      %p830 = pnand %p828, %p829
      %p831 = pneg %p830
      // Predicated region
      $region91: #{tpu_custom_call.1} parent=5 // pred_check
        _
      $region92: #{tpu_custom_call.1} parent=5 // pred_check_branch
        %833 = sbr.rel (%p830) target = $region94
      $region93: #{tpu_custom_call.1} parent=5 // pred_region
        %s834 = ssub.s32 %s11, 1
        %s835 = sand.u32 %s38, 1
        %s836 = sand.u32 %s38, 1
        %s837 = smul.addr %s836, 1024
        %s838 = scalar_lea.vmem [#allocation4], %s837
        // Predicated region
        $region95: #{tpu_custom_call.1} parent=93 // pred_check
          %p839 = pneg %p51
        $region96: #{tpu_custom_call.1} parent=93 // pred_check_branch
          %841 = sbr.rel (%p839) target = $region98
        $region97: #{tpu_custom_call.1} parent=93 // pred_region
          _
        $region98: #{tpu_custom_call.1} parent=93 // pred_fallthru
          _
        %s842 = sand.u32 %s38, 1
        %s843 = sand.u32 %s38, 1
        %s844 = smul.addr %s843, 1024
        %s845 = scalar_lea.vmem [#allocation4], %s844
        %p846 = pneg %p51
        %p847 = pneg %p48
        %p848 = pneg %p72
        %p849 = pneg %p69
        %p850 = pneg %p93
        %p851 = pneg %p90
        %p852 = pneg %p114
        %p853 = pneg %p111
        %p854 = pneg %p135
        %p855 = pneg %p132
        %s856 = smul.u32 4, %s21
        %s857 = ssub.s32 7, %s856
        %p858 = scmp.lt.s32.totalorder %s857, 4
        %s859 = scalar_select %p858, %s857, 4
        %s860 = smul.u32 4096, %s859
        %p861 = scmp.eq.s32.totalorder %s20, 0
        %p862 = scmp.eq.s32.totalorder %s21, 0
        %p863 = pnand %p861, %p862
        %p864 = pneg %p863
        // Predicated region
        $region99: #{tpu_custom_call.1} parent=93 // pred_check
          _
        $region100: #{tpu_custom_call.1} parent=93 // pred_check_branch
          %866 = sbr.rel (%p863) target = $region102
        $region101: #{tpu_custom_call.1} parent=93 // pred_region
          %vm867 = vcmask 7168
          %868 = vst.msk [vmem:[#allocation2] sm:$0xff] %vm867, 0.0
          %869 = vst.msk [vmem:[#allocation2 + $0x8] sm:$0xff] %vm867, 0.0
          %870 = vst.msk [vmem:[#allocation2 + $0x10] sm:$0xff] %vm867, 0.0
          %871 = vst.msk [vmem:[#allocation2 + $0x18] sm:$0xff] %vm867, 0.0
          %872 = vst.msk [vmem:[#allocation2 + $0x20] sm:$0xff] %vm867, 0.0
          %873 = vst.msk [vmem:[#allocation2 + $0x28] sm:$0xff] %vm867, 0.0
          %874 = vst.msk [vmem:[#allocation2 + $0x30] sm:$0xff] %vm867, 0.0
          %875 = vst.msk [vmem:[#allocation2 + $0x38] sm:$0xff] %vm867, 0.0
          %876 = vst.msk [vmem:[#allocation2 + $0x40] sm:$0xff] %vm867, 0.0
          %877 = vst.msk [vmem:[#allocation2 + $0x48] sm:$0xff] %vm867, 0.0
          %878 = vst.msk [vmem:[#allocation2 + $0x50] sm:$0xff] %vm867, 0.0
          %879 = vst.msk [vmem:[#allocation2 + $0x58] sm:$0xff] %vm867, 0.0
          %880 = vst.msk [vmem:[#allocation2 + $0x60] sm:$0xff] %vm867, 0.0
          %881 = vst.msk [vmem:[#allocation2 + $0x68] sm:$0xff] %vm867, 0.0
          %882 = vst.msk [vmem:[#allocation2 + $0x70] sm:$0xff] %vm867, 0.0
          %883 = vst.msk [vmem:[#allocation2 + $0x78] sm:$0xff] %vm867, 0.0
          %884 = vst.msk [vmem:[#allocation2 + $0x80] sm:$0xff] %vm867, 0.0
          %885 = vst.msk [vmem:[#allocation2 + $0x88] sm:$0xff] %vm867, 0.0
          %886 = vst.msk [vmem:[#allocation2 + $0x90] sm:$0xff] %vm867, 0.0
          %887 = vst.msk [vmem:[#allocation2 + $0x98] sm:$0xff] %vm867, 0.0
          %888 = vst.msk [vmem:[#allocation2 + $0xa0] sm:$0xff] %vm867, 0.0
          %889 = vst.msk [vmem:[#allocation2 + $0xa8] sm:$0xff] %vm867, 0.0
          %890 = vst.msk [vmem:[#allocation2 + $0xb0] sm:$0xff] %vm867, 0.0
          %891 = vst.msk [vmem:[#allocation2 + $0xb8] sm:$0xff] %vm867, 0.0
          %892 = vst.msk [vmem:[#allocation2 + $0xc0] sm:$0xff] %vm867, 0.0
          %893 = vst.msk [vmem:[#allocation2 + $0xc8] sm:$0xff] %vm867, 0.0
          %894 = vst.msk [vmem:[#allocation2 + $0xd0] sm:$0xff] %vm867, 0.0
          %895 = vst.msk [vmem:[#allocation2 + $0xd8] sm:$0xff] %vm867, 0.0
          %896 = vst.msk [vmem:[#allocation2 + $0xe0] sm:$0xff] %vm867, 0.0
          %897 = vst.msk [vmem:[#allocation2 + $0xe8] sm:$0xff] %vm867, 0.0
          %898 = vst.msk [vmem:[#allocation2 + $0xf0] sm:$0xff] %vm867, 0.0
          %899 = vst.msk [vmem:[#allocation2 + $0xf8] sm:$0xff] %vm867, 0.0
          %900 = vst.msk [vmem:[#allocation3] sm:$0xff] %vm867, 0.0
          %901 = vst.msk [vmem:[#allocation3 + $0x8] sm:$0xff] %vm867, 0.0
          %902 = vst.msk [vmem:[#allocation3 + $0x10] sm:$0xff] %vm867, 0.0
          %903 = vst.msk [vmem:[#allocation3 + $0x18] sm:$0xff] %vm867, 0.0
          %904 = vst.msk [vmem:[#allocation3 + $0x20] sm:$0xff] %vm867, 0.0
          %905 = vst.msk [vmem:[#allocation3 + $0x28] sm:$0xff] %vm867, 0.0
          %906 = vst.msk [vmem:[#allocation3 + $0x30] sm:$0xff] %vm867, 0.0
          %907 = vst.msk [vmem:[#allocation3 + $0x38] sm:$0xff] %vm867, 0.0
          %908 = vst.msk [vmem:[#allocation3 + $0x40] sm:$0xff] %vm867, 0.0
          %909 = vst.msk [vmem:[#allocation3 + $0x48] sm:$0xff] %vm867, 0.0
          %910 = vst.msk [vmem:[#allocation3 + $0x50] sm:$0xff] %vm867, 0.0
          %911 = vst.msk [vmem:[#allocation3 + $0x58] sm:$0xff] %vm867, 0.0
          %912 = vst.msk [vmem:[#allocation3 + $0x60] sm:$0xff] %vm867, 0.0
          %913 = vst.msk [vmem:[#allocation3 + $0x68] sm:$0xff] %vm867, 0.0
          %914 = vst.msk [vmem:[#allocation3 + $0x70] sm:$0xff] %vm867, 0.0
          %915 = vst.msk [vmem:[#allocation3 + $0x78] sm:$0xff] %vm867, 0.0
          %916 = vst.msk [vmem:[#allocation3 + $0x80] sm:$0xff] %vm867, 0.0
          %917 = vst.msk [vmem:[#allocation3 + $0x88] sm:$0xff] %vm867, 0.0
          %918 = vst.msk [vmem:[#allocation3 + $0x90] sm:$0xff] %vm867, 0.0
          %919 = vst.msk [vmem:[#allocation3 + $0x98] sm:$0xff] %vm867, 0.0
          %920 = vst.msk [vmem:[#allocation3 + $0xa0] sm:$0xff] %vm867, 0.0
          %921 = vst.msk [vmem:[#allocation3 + $0xa8] sm:$0xff] %vm867, 0.0
          %922 = vst.msk [vmem:[#allocation3 + $0xb0] sm:$0xff] %vm867, 0.0
          %923 = vst.msk [vmem:[#allocation3 + $0xb8] sm:$0xff] %vm867, 0.0
          %924 = vst.msk [vmem:[#allocation3 + $0xc0] sm:$0xff] %vm867, 0.0
          %925 = vst.msk [vmem:[#allocation3 + $0xc8] sm:$0xff] %vm867, 0.0
          %926 = vst.msk [vmem:[#allocation3 + $0xd0] sm:$0xff] %vm867, 0.0
          %927 = vst.msk [vmem:[#allocation3 + $0xd8] sm:$0xff] %vm867, 0.0
          %928 = vst.msk [vmem:[#allocation3 + $0xe0] sm:$0xff] %vm867, 0.0
          %929 = vst.msk [vmem:[#allocation3 + $0xe8] sm:$0xff] %vm867, 0.0
          %930 = vst.msk [vmem:[#allocation3 + $0xf0] sm:$0xff] %vm867, 0.0
          %931 = vst.msk [vmem:[#allocation3 + $0xf8] sm:$0xff] %vm867, 0.0
        $region102: #{tpu_custom_call.1} parent=93 // pred_fallthru
          _
        %v932 = vld [vmem:[%s838] sm:$0xff]
        %v933 = vld [vmem:[%s838 + $0x8] sm:$0xff]
        %v934 = vld [vmem:[%s838 + $0x10] sm:$0xff]
        %v935 = vld [vmem:[%s838 + $0x18] sm:$0xff]
        %v936 = vld [vmem:[%s838 + $0x20] sm:$0xff]
        %v937 = vld [vmem:[%s838 + $0x28] sm:$0xff]
        %v938 = vld [vmem:[%s838 + $0x30] sm:$0xff]
        %v939 = vld [vmem:[%s838 + $0x38] sm:$0xff]
        %v940 = vld [vmem:[%s838 + $0x40] sm:$0xff]
        %v941 = vld [vmem:[%s838 + $0x48] sm:$0xff]
        %v942 = vld [vmem:[%s838 + $0x50] sm:$0xff]
        %v943 = vld [vmem:[%s838 + $0x58] sm:$0xff]
        %v944 = vld [vmem:[%s838 + $0x60] sm:$0xff]
        %v945 = vld [vmem:[%s838 + $0x68] sm:$0xff]
        %v946 = vld [vmem:[%s838 + $0x70] sm:$0xff]
        %v947 = vld [vmem:[%s838 + $0x78] sm:$0xff]
        %v948 = vld [vmem:[%s838 + $0x80] sm:$0xff]
        %v949 = vld [vmem:[%s838 + $0x88] sm:$0xff]
        %v950 = vld [vmem:[%s838 + $0x90] sm:$0xff]
        %v951 = vld [vmem:[%s838 + $0x98] sm:$0xff]
        %v952 = vld [vmem:[%s838 + $0xa0] sm:$0xff]
        %v953 = vld [vmem:[%s838 + $0xa8] sm:$0xff]
        %v954 = vld [vmem:[%s838 + $0xb0] sm:$0xff]
        %v955 = vld [vmem:[%s838 + $0xb8] sm:$0xff]
        %v956 = vld [vmem:[%s838 + $0xc0] sm:$0xff]
        %v957 = vld [vmem:[%s838 + $0xc8] sm:$0xff]
        %v958 = vld [vmem:[%s838 + $0xd0] sm:$0xff]
        %v959 = vld [vmem:[%s838 + $0xd8] sm:$0xff]
        %v960 = vld [vmem:[%s838 + $0xe0] sm:$0xff]
        %v961 = vld [vmem:[%s838 + $0xe8] sm:$0xff]
        %v962 = vld [vmem:[%s838 + $0xf0] sm:$0xff]
        %v963 = vld [vmem:[%s838 + $0xf8] sm:$0xff]
        %v964 = vld [vmem:[%s838 + $0x100] sm:$0xff]
        %v965 = vld [vmem:[%s838 + $0x108] sm:$0xff]
        %v966 = vld [vmem:[%s838 + $0x110] sm:$0xff]
        %v967 = vld [vmem:[%s838 + $0x118] sm:$0xff]
        %v968 = vld [vmem:[%s838 + $0x120] sm:$0xff]
        %v969 = vld [vmem:[%s838 + $0x128] sm:$0xff]
        %v970 = vld [vmem:[%s838 + $0x130] sm:$0xff]
        %v971 = vld [vmem:[%s838 + $0x138] sm:$0xff]
        %v972 = vld [vmem:[%s838 + $0x140] sm:$0xff]
        %v973 = vld [vmem:[%s838 + $0x148] sm:$0xff]
        %v974 = vld [vmem:[%s838 + $0x150] sm:$0xff]
        %v975 = vld [vmem:[%s838 + $0x158] sm:$0xff]
        %v976 = vld [vmem:[%s838 + $0x160] sm:$0xff]
        %v977 = vld [vmem:[%s838 + $0x168] sm:$0xff]
        %v978 = vld [vmem:[%s838 + $0x170] sm:$0xff]
        %v979 = vld [vmem:[%s838 + $0x178] sm:$0xff]
        %v980 = vld [vmem:[%s838 + $0x180] sm:$0xff]
        %v981 = vld [vmem:[%s838 + $0x188] sm:$0xff]
        %v982 = vld [vmem:[%s838 + $0x190] sm:$0xff]
        %v983 = vld [vmem:[%s838 + $0x198] sm:$0xff]
        %v984 = vld [vmem:[%s838 + $0x1a0] sm:$0xff]
        %v985 = vld [vmem:[%s838 + $0x1a8] sm:$0xff]
        %v986 = vld [vmem:[%s838 + $0x1b0] sm:$0xff]
        %v987 = vld [vmem:[%s838 + $0x1b8] sm:$0xff]
        %v988 = vld [vmem:[%s838 + $0x1c0] sm:$0xff]
        %v989 = vld [vmem:[%s838 + $0x1c8] sm:$0xff]
        %v990 = vld [vmem:[%s838 + $0x1d0] sm:$0xff]
        %v991 = vld [vmem:[%s838 + $0x1d8] sm:$0xff]
        %v992 = vld [vmem:[%s838 + $0x1e0] sm:$0xff]
        %v993 = vld [vmem:[%s838 + $0x1e8] sm:$0xff]
        %v994 = vld [vmem:[%s838 + $0x1f0] sm:$0xff]
        %v995 = vld [vmem:[%s838 + $0x1f8] sm:$0xff]
        %v996 = vld [vmem:[%s838 + $0x200] sm:$0xff]
        %v997 = vld [vmem:[%s838 + $0x208] sm:$0xff]
        %v998 = vld [vmem:[%s838 + $0x210] sm:$0xff]
        %v999 = vld [vmem:[%s838 + $0x218] sm:$0xff]
        %v1000 = vld [vmem:[%s838 + $0x220] sm:$0xff]
        %v1001 = vld [vmem:[%s838 + $0x228] sm:$0xff]
        %v1002 = vld [vmem:[%s838 + $0x230] sm:$0xff]
        %v1003 = vld [vmem:[%s838 + $0x238] sm:$0xff]
        %v1004 = vld [vmem:[%s838 + $0x240] sm:$0xff]
        %v1005 = vld [vmem:[%s838 + $0x248] sm:$0xff]
        %v1006 = vld [vmem:[%s838 + $0x250] sm:$0xff]
        %v1007 = vld [vmem:[%s838 + $0x258] sm:$0xff]
        %v1008 = vld [vmem:[%s838 + $0x260] sm:$0xff]
        %v1009 = vld [vmem:[%s838 + $0x268] sm:$0xff]
        %v1010 = vld [vmem:[%s838 + $0x270] sm:$0xff]
        %v1011 = vld [vmem:[%s838 + $0x278] sm:$0xff]
        %v1012 = vld [vmem:[%s838 + $0x280] sm:$0xff]
        %v1013 = vld [vmem:[%s838 + $0x288] sm:$0xff]
        %v1014 = vld [vmem:[%s838 + $0x290] sm:$0xff]
        %v1015 = vld [vmem:[%s838 + $0x298] sm:$0xff]
        %v1016 = vld [vmem:[%s838 + $0x2a0] sm:$0xff]
        %v1017 = vld [vmem:[%s838 + $0x2a8] sm:$0xff]
        %v1018 = vld [vmem:[%s838 + $0x2b0] sm:$0xff]
        %v1019 = vld [vmem:[%s838 + $0x2b8] sm:$0xff]
        %v1020 = vld [vmem:[%s838 + $0x2c0] sm:$0xff]
        %v1021 = vld [vmem:[%s838 + $0x2c8] sm:$0xff]
        %v1022 = vld [vmem:[%s838 + $0x2d0] sm:$0xff]
        %v1023 = vld [vmem:[%s838 + $0x2d8] sm:$0xff]
        %v1024 = vld [vmem:[%s838 + $0x2e0] sm:$0xff]
        %v1025 = vld [vmem:[%s838 + $0x2e8] sm:$0xff]
        %v1026 = vld [vmem:[%s838 + $0x2f0] sm:$0xff]
        %v1027 = vld [vmem:[%s838 + $0x2f8] sm:$0xff]
        %v1028 = vld [vmem:[%s838 + $0x300] sm:$0xff]
        %v1029 = vld [vmem:[%s838 + $0x308] sm:$0xff]
        %v1030 = vld [vmem:[%s838 + $0x310] sm:$0xff]
        %v1031 = vld [vmem:[%s838 + $0x318] sm:$0xff]
        %v1032 = vld [vmem:[%s838 + $0x320] sm:$0xff]
        %v1033 = vld [vmem:[%s838 + $0x328] sm:$0xff]
        %v1034 = vld [vmem:[%s838 + $0x330] sm:$0xff]
        %v1035 = vld [vmem:[%s838 + $0x338] sm:$0xff]
        %v1036 = vld [vmem:[%s838 + $0x340] sm:$0xff]
        %v1037 = vld [vmem:[%s838 + $0x348] sm:$0xff]
        %v1038 = vld [vmem:[%s838 + $0x350] sm:$0xff]
        %v1039 = vld [vmem:[%s838 + $0x358] sm:$0xff]
        %v1040 = vld [vmem:[%s838 + $0x360] sm:$0xff]
        %v1041 = vld [vmem:[%s838 + $0x368] sm:$0xff]
        %v1042 = vld [vmem:[%s838 + $0x370] sm:$0xff]
        %v1043 = vld [vmem:[%s838 + $0x378] sm:$0xff]
        %v1044 = vld [vmem:[%s838 + $0x380] sm:$0xff]
        %v1045 = vld [vmem:[%s838 + $0x388] sm:$0xff]
        %v1046 = vld [vmem:[%s838 + $0x390] sm:$0xff]
        %v1047 = vld [vmem:[%s838 + $0x398] sm:$0xff]
        %v1048 = vld [vmem:[%s838 + $0x3a0] sm:$0xff]
        %v1049 = vld [vmem:[%s838 + $0x3a8] sm:$0xff]
        %v1050 = vld [vmem:[%s838 + $0x3b0] sm:$0xff]
        %v1051 = vld [vmem:[%s838 + $0x3b8] sm:$0xff]
        %v1052 = vld [vmem:[%s838 + $0x3c0] sm:$0xff]
        %v1053 = vld [vmem:[%s838 + $0x3c8] sm:$0xff]
        %v1054 = vld [vmem:[%s838 + $0x3d0] sm:$0xff]
        %v1055 = vld [vmem:[%s838 + $0x3d8] sm:$0xff]
        %v1056 = vld [vmem:[%s838 + $0x3e0] sm:$0xff]
        %v1057 = vld [vmem:[%s838 + $0x3e8] sm:$0xff]
        %v1058 = vld [vmem:[%s838 + $0x3f0] sm:$0xff]
        %v1059 = vld [vmem:[%s838 + $0x3f8] sm:$0xff]
        %v1060 = vlaneseq
        %v1061 = vand.u32 %v1060, 127
        %v1062 = vadd.s32 %v1061, 128
        %v1063 = vadd.s32 %v1061, 256
        %v1064 = vadd.s32 %v1061, 384
        %s1065 = smul.u32 %s21, 512
        %v1066 = vstv %s1065
        %v1067 = vadd.s32 %v1061, %v1066
        %v1068 = vadd.s32 %v1062, %v1066
        %v1069 = vadd.s32 %v1063, %v1066
        %v1070 = vadd.s32 %v1064, %v1066
        %vm1071 = vcmp.lt.s32.totalorder %v1067, 784
        %vm1072 = vcmp.lt.s32.totalorder %v1068, 784
        %vm1073 = vcmp.lt.s32.totalorder %v1069, 784
        %vm1074 = vcmp.lt.s32.totalorder %v1070, 784
        %v1075 = vsel %vm1071, %v932, 0.0
        %v1076 = vsel %vm1072, %v933, 0.0
        %v1077 = vsel %vm1073, %v934, 0.0
        %v1078 = vsel %vm1074, %v935, 0.0
        %v1079 = vsel %vm1071, %v936, 0.0
        %v1080 = vsel %vm1072, %v937, 0.0
        %v1081 = vsel %vm1073, %v938, 0.0
        %v1082 = vsel %vm1074, %v939, 0.0
        %v1083 = vsel %vm1071, %v940, 0.0
        %v1084 = vsel %vm1072, %v941, 0.0
        %v1085 = vsel %vm1073, %v942, 0.0
        %v1086 = vsel %vm1074, %v943, 0.0
        %v1087 = vsel %vm1071, %v944, 0.0
        %v1088 = vsel %vm1072, %v945, 0.0
        %v1089 = vsel %vm1073, %v946, 0.0
        %v1090 = vsel %vm1074, %v947, 0.0
        %v1091 = vsel %vm1071, %v948, 0.0
        %v1092 = vsel %vm1072, %v949, 0.0
        %v1093 = vsel %vm1073, %v950, 0.0
        %v1094 = vsel %vm1074, %v951, 0.0
        %v1095 = vsel %vm1071, %v952, 0.0
        %v1096 = vsel %vm1072, %v953, 0.0
        %v1097 = vsel %vm1073, %v954, 0.0
        %v1098 = vsel %vm1074, %v955, 0.0
        %v1099 = vsel %vm1071, %v956, 0.0
        %v1100 = vsel %vm1072, %v957, 0.0
        %v1101 = vsel %vm1073, %v958, 0.0
        %v1102 = vsel %vm1074, %v959, 0.0
        %v1103 = vsel %vm1071, %v960, 0.0
        %v1104 = vsel %vm1072, %v961, 0.0
        %v1105 = vsel %vm1073, %v962, 0.0
        %v1106 = vsel %vm1074, %v963, 0.0
        %v1107 = vsel %vm1071, %v964, 0.0
        %v1108 = vsel %vm1072, %v965, 0.0
        %v1109 = vsel %vm1073, %v966, 0.0
        %v1110 = vsel %vm1074, %v967, 0.0
        %v1111 = vsel %vm1071, %v968, 0.0
        %v1112 = vsel %vm1072, %v969, 0.0
        %v1113 = vsel %vm1073, %v970, 0.0
        %v1114 = vsel %vm1074, %v971, 0.0
        %v1115 = vsel %vm1071, %v972, 0.0
        %v1116 = vsel %vm1072, %v973, 0.0
        %v1117 = vsel %vm1073, %v974, 0.0
        %v1118 = vsel %vm1074, %v975, 0.0
        %v1119 = vsel %vm1071, %v976, 0.0
        %v1120 = vsel %vm1072, %v977, 0.0
        %v1121 = vsel %vm1073, %v978, 0.0
        %v1122 = vsel %vm1074, %v979, 0.0
        %v1123 = vsel %vm1071, %v980, 0.0
        %v1124 = vsel %vm1072, %v981, 0.0
        %v1125 = vsel %vm1073, %v982, 0.0
        %v1126 = vsel %vm1074, %v983, 0.0
        %v1127 = vsel %vm1071, %v984, 0.0
        %v1128 = vsel %vm1072, %v985, 0.0
        %v1129 = vsel %vm1073, %v986, 0.0
        %v1130 = vsel %vm1074, %v987, 0.0
        %v1131 = vsel %vm1071, %v988, 0.0
        %v1132 = vsel %vm1072, %v989, 0.0
        %v1133 = vsel %vm1073, %v990, 0.0
        %v1134 = vsel %vm1074, %v991, 0.0
        %v1135 = vsel %vm1071, %v992, 0.0
        %v1136 = vsel %vm1072, %v993, 0.0
        %v1137 = vsel %vm1073, %v994, 0.0
        %v1138 = vsel %vm1074, %v995, 0.0
        %v1139 = vsel %vm1071, %v996, 0.0
        %v1140 = vsel %vm1072, %v997, 0.0
        %v1141 = vsel %vm1073, %v998, 0.0
        %v1142 = vsel %vm1074, %v999, 0.0
        %v1143 = vsel %vm1071, %v1000, 0.0
        %v1144 = vsel %vm1072, %v1001, 0.0
        %v1145 = vsel %vm1073, %v1002, 0.0
        %v1146 = vsel %vm1074, %v1003, 0.0
        %v1147 = vsel %vm1071, %v1004, 0.0
        %v1148 = vsel %vm1072, %v1005, 0.0
        %v1149 = vsel %vm1073, %v1006, 0.0
        %v1150 = vsel %vm1074, %v1007, 0.0
        %v1151 = vsel %vm1071, %v1008, 0.0
        %v1152 = vsel %vm1072, %v1009, 0.0
        %v1153 = vsel %vm1073, %v1010, 0.0
        %v1154 = vsel %vm1074, %v1011, 0.0
        %v1155 = vsel %vm1071, %v1012, 0.0
        %v1156 = vsel %vm1072, %v1013, 0.0
        %v1157 = vsel %vm1073, %v1014, 0.0
        %v1158 = vsel %vm1074, %v1015, 0.0
        %v1159 = vsel %vm1071, %v1016, 0.0
        %v1160 = vsel %vm1072, %v1017, 0.0
        %v1161 = vsel %vm1073, %v1018, 0.0
        %v1162 = vsel %vm1074, %v1019, 0.0
        %v1163 = vsel %vm1071, %v1020, 0.0
        %v1164 = vsel %vm1072, %v1021, 0.0
        %v1165 = vsel %vm1073, %v1022, 0.0
        %v1166 = vsel %vm1074, %v1023, 0.0
        %v1167 = vsel %vm1071, %v1024, 0.0
        %v1168 = vsel %vm1072, %v1025, 0.0
        %v1169 = vsel %vm1073, %v1026, 0.0
        %v1170 = vsel %vm1074, %v1027, 0.0
        %v1171 = vsel %vm1071, %v1028, 0.0
        %v1172 = vsel %vm1072, %v1029, 0.0
        %v1173 = vsel %vm1073, %v1030, 0.0
        %v1174 = vsel %vm1074, %v1031, 0.0
        %v1175 = vsel %vm1071, %v1032, 0.0
        %v1176 = vsel %vm1072, %v1033, 0.0
        %v1177 = vsel %vm1073, %v1034, 0.0
        %v1178 = vsel %vm1074, %v1035, 0.0
        %v1179 = vsel %vm1071, %v1036, 0.0
        %v1180 = vsel %vm1072, %v1037, 0.0
        %v1181 = vsel %vm1073, %v1038, 0.0
        %v1182 = vsel %vm1074, %v1039, 0.0
        %v1183 = vsel %vm1071, %v1040, 0.0
        %v1184 = vsel %vm1072, %v1041, 0.0
        %v1185 = vsel %vm1073, %v1042, 0.0
        %v1186 = vsel %vm1074, %v1043, 0.0
        %v1187 = vsel %vm1071, %v1044, 0.0
        %v1188 = vsel %vm1072, %v1045, 0.0
        %v1189 = vsel %vm1073, %v1046, 0.0
        %v1190 = vsel %vm1074, %v1047, 0.0
        %v1191 = vsel %vm1071, %v1048, 0.0
        %v1192 = vsel %vm1072, %v1049, 0.0
        %v1193 = vsel %vm1073, %v1050, 0.0
        %v1194 = vsel %vm1074, %v1051, 0.0
        %v1195 = vsel %vm1071, %v1052, 0.0
        %v1196 = vsel %vm1072, %v1053, 0.0
        %v1197 = vsel %vm1073, %v1054, 0.0
        %v1198 = vsel %vm1074, %v1055, 0.0
        %v1199 = vsel %vm1071, %v1056, 0.0
        %v1200 = vsel %vm1072, %v1057, 0.0
        %v1201 = vsel %vm1073, %v1058, 0.0
        %v1202 = vsel %vm1074, %v1059, 0.0
        %v1203 = vld [vmem:[#allocation2] sm:$0xff]
        %v1204 = vld [vmem:[#allocation2 + $0x8] sm:$0xff]
        %v1205 = vld [vmem:[#allocation2 + $0x10] sm:$0xff]
        %v1206 = vld [vmem:[#allocation2 + $0x18] sm:$0xff]
        %v1207 = vld [vmem:[#allocation2 + $0x20] sm:$0xff]
        %v1208 = vld [vmem:[#allocation2 + $0x28] sm:$0xff]
        %v1209 = vld [vmem:[#allocation2 + $0x30] sm:$0xff]
        %v1210 = vld [vmem:[#allocation2 + $0x38] sm:$0xff]
        %v1211 = vld [vmem:[#allocation2 + $0x40] sm:$0xff]
        %v1212 = vld [vmem:[#allocation2 + $0x48] sm:$0xff]
        %v1213 = vld [vmem:[#allocation2 + $0x50] sm:$0xff]
        %v1214 = vld [vmem:[#allocation2 + $0x58] sm:$0xff]
        %v1215 = vld [vmem:[#allocation2 + $0x60] sm:$0xff]
        %v1216 = vld [vmem:[#allocation2 + $0x68] sm:$0xff]
        %v1217 = vld [vmem:[#allocation2 + $0x70] sm:$0xff]
        %v1218 = vld [vmem:[#allocation2 + $0x78] sm:$0xff]
        %v1219 = vld [vmem:[#allocation2 + $0x80] sm:$0xff]
        %v1220 = vld [vmem:[#allocation2 + $0x88] sm:$0xff]
        %v1221 = vld [vmem:[#allocation2 + $0x90] sm:$0xff]
        %v1222 = vld [vmem:[#allocation2 + $0x98] sm:$0xff]
        %v1223 = vld [vmem:[#allocation2 + $0xa0] sm:$0xff]
        %v1224 = vld [vmem:[#allocation2 + $0xa8] sm:$0xff]
        %v1225 = vld [vmem:[#allocation2 + $0xb0] sm:$0xff]
        %v1226 = vld [vmem:[#allocation2 + $0xb8] sm:$0xff]
        %v1227 = vld [vmem:[#allocation2 + $0xc0] sm:$0xff]
        %v1228 = vld [vmem:[#allocation2 + $0xc8] sm:$0xff]
        %v1229 = vld [vmem:[#allocation2 + $0xd0] sm:$0xff]
        %v1230 = vld [vmem:[#allocation2 + $0xd8] sm:$0xff]
        %v1231 = vld [vmem:[#allocation2 + $0xe0] sm:$0xff]
        %v1232 = vld [vmem:[#allocation2 + $0xe8] sm:$0xff]
        %v1233 = vld [vmem:[#allocation2 + $0xf0] sm:$0xff]
        %v1234 = vld [vmem:[#allocation2 + $0xf8] sm:$0xff]
        %v1235 = vadd.f32 %v1075, %v1076
        %v1236 = vadd.f32 %v1235, %v1077
        %v1237 = vadd.f32 %v1236, %v1078
        %1238 = vadd.xlane.f32.xlu0 %v1237
        %v1239 = vpop.xlane.xlu0 %1238
        %v1240 = vadd.f32 %v1079, %v1080
        %v1241 = vadd.f32 %v1240, %v1081
        %v1242 = vadd.f32 %v1241, %v1082
        %1243 = vadd.xlane.f32.xlu0 %v1242
        %v1244 = vpop.xlane.xlu0 %1243
        %v1245 = vadd.f32 %v1083, %v1084
        %v1246 = vadd.f32 %v1245, %v1085
        %v1247 = vadd.f32 %v1246, %v1086
        %1248 = vadd.xlane.f32.xlu0 %v1247
        %v1249 = vpop.xlane.xlu0 %1248
        %v1250 = vadd.f32 %v1087, %v1088
        %v1251 = vadd.f32 %v1250, %v1089
        %v1252 = vadd.f32 %v1251, %v1090
        %1253 = vadd.xlane.f32.xlu0 %v1252
        %v1254 = vpop.xlane.xlu0 %1253
        %v1255 = vadd.f32 %v1091, %v1092
        %v1256 = vadd.f32 %v1255, %v1093
        %v1257 = vadd.f32 %v1256, %v1094
        %1258 = vadd.xlane.f32.xlu0 %v1257
        %v1259 = vpop.xlane.xlu0 %1258
        %v1260 = vadd.f32 %v1095, %v1096
        %v1261 = vadd.f32 %v1260, %v1097
        %v1262 = vadd.f32 %v1261, %v1098
        %1263 = vadd.xlane.f32.xlu0 %v1262
        %v1264 = vpop.xlane.xlu0 %1263
        %v1265 = vadd.f32 %v1099, %v1100
        %v1266 = vadd.f32 %v1265, %v1101
        %v1267 = vadd.f32 %v1266, %v1102
        %1268 = vadd.xlane.f32.xlu0 %v1267
        %v1269 = vpop.xlane.xlu0 %1268
        %v1270 = vadd.f32 %v1103, %v1104
        %v1271 = vadd.f32 %v1270, %v1105
        %v1272 = vadd.f32 %v1271, %v1106
        %1273 = vadd.xlane.f32.xlu0 %v1272
        %v1274 = vpop.xlane.xlu0 %1273
        %v1275 = vadd.f32 %v1107, %v1108
        %v1276 = vadd.f32 %v1275, %v1109
        %v1277 = vadd.f32 %v1276, %v1110
        %1278 = vadd.xlane.f32.xlu0 %v1277
        %v1279 = vpop.xlane.xlu0 %1278
        %v1280 = vadd.f32 %v1111, %v1112
        %v1281 = vadd.f32 %v1280, %v1113
        %v1282 = vadd.f32 %v1281, %v1114
        %1283 = vadd.xlane.f32.xlu0 %v1282
        %v1284 = vpop.xlane.xlu0 %1283
        %v1285 = vadd.f32 %v1115, %v1116
        %v1286 = vadd.f32 %v1285, %v1117
        %v1287 = vadd.f32 %v1286, %v1118
        %1288 = vadd.xlane.f32.xlu0 %v1287
        %v1289 = vpop.xlane.xlu0 %1288
        %v1290 = vadd.f32 %v1119, %v1120
        %v1291 = vadd.f32 %v1290, %v1121
        %v1292 = vadd.f32 %v1291, %v1122
        %1293 = vadd.xlane.f32.xlu0 %v1292
        %v1294 = vpop.xlane.xlu0 %1293
        %v1295 = vadd.f32 %v1123, %v1124
        %v1296 = vadd.f32 %v1295, %v1125
        %v1297 = vadd.f32 %v1296, %v1126
        %1298 = vadd.xlane.f32.xlu0 %v1297
        %v1299 = vpop.xlane.xlu0 %1298
        %v1300 = vadd.f32 %v1127, %v1128
        %v1301 = vadd.f32 %v1300, %v1129
        %v1302 = vadd.f32 %v1301, %v1130
        %1303 = vadd.xlane.f32.xlu0 %v1302
        %v1304 = vpop.xlane.xlu0 %1303
        %v1305 = vadd.f32 %v1131, %v1132
        %v1306 = vadd.f32 %v1305, %v1133
        %v1307 = vadd.f32 %v1306, %v1134
        %1308 = vadd.xlane.f32.xlu0 %v1307
        %v1309 = vpop.xlane.xlu0 %1308
        %v1310 = vadd.f32 %v1135, %v1136
        %v1311 = vadd.f32 %v1310, %v1137
        %v1312 = vadd.f32 %v1311, %v1138
        %1313 = vadd.xlane.f32.xlu0 %v1312
        %v1314 = vpop.xlane.xlu0 %1313
        %v1315 = vadd.f32 %v1139, %v1140
        %v1316 = vadd.f32 %v1315, %v1141
        %v1317 = vadd.f32 %v1316, %v1142
        %1318 = vadd.xlane.f32.xlu0 %v1317
        %v1319 = vpop.xlane.xlu0 %1318
        %v1320 = vadd.f32 %v1143, %v1144
        %v1321 = vadd.f32 %v1320, %v1145
        %v1322 = vadd.f32 %v1321, %v1146
        %1323 = vadd.xlane.f32.xlu0 %v1322
        %v1324 = vpop.xlane.xlu0 %1323
        %v1325 = vadd.f32 %v1147, %v1148
        %v1326 = vadd.f32 %v1325, %v1149
        %v1327 = vadd.f32 %v1326, %v1150
        %1328 = vadd.xlane.f32.xlu0 %v1327
        %v1329 = vpop.xlane.xlu0 %1328
        %v1330 = vadd.f32 %v1151, %v1152
        %v1331 = vadd.f32 %v1330, %v1153
        %v1332 = vadd.f32 %v1331, %v1154
        %1333 = vadd.xlane.f32.xlu0 %v1332
        %v1334 = vpop.xlane.xlu0 %1333
        %v1335 = vadd.f32 %v1155, %v1156
        %v1336 = vadd.f32 %v1335, %v1157
        %v1337 = vadd.f32 %v1336, %v1158
        %1338 = vadd.xlane.f32.xlu0 %v1337
        %v1339 = vpop.xlane.xlu0 %1338
        %v1340 = vadd.f32 %v1159, %v1160
        %v1341 = vadd.f32 %v1340, %v1161
        %v1342 = vadd.f32 %v1341, %v1162
        %1343 = vadd.xlane.f32.xlu0 %v1342
        %v1344 = vpop.xlane.xlu0 %1343
        %v1345 = vadd.f32 %v1163, %v1164
        %v1346 = vadd.f32 %v1345, %v1165
        %v1347 = vadd.f32 %v1346, %v1166
        %1348 = vadd.xlane.f32.xlu0 %v1347
        %v1349 = vpop.xlane.xlu0 %1348
        %v1350 = vadd.f32 %v1167, %v1168
        %v1351 = vadd.f32 %v1350, %v1169
        %v1352 = vadd.f32 %v1351, %v1170
        %1353 = vadd.xlane.f32.xlu0 %v1352
        %v1354 = vpop.xlane.xlu0 %1353
        %v1355 = vadd.f32 %v1171, %v1172
        %v1356 = vadd.f32 %v1355, %v1173
        %v1357 = vadd.f32 %v1356, %v1174
        %1358 = vadd.xlane.f32.xlu0 %v1357
        %v1359 = vpop.xlane.xlu0 %1358
        %v1360 = vadd.f32 %v1175, %v1176
        %v1361 = vadd.f32 %v1360, %v1177
        %v1362 = vadd.f32 %v1361, %v1178
        %1363 = vadd.xlane.f32.xlu0 %v1362
        %v1364 = vpop.xlane.xlu0 %1363
        %v1365 = vadd.f32 %v1179, %v1180
        %v1366 = vadd.f32 %v1365, %v1181
        %v1367 = vadd.f32 %v1366, %v1182
        %1368 = vadd.xlane.f32.xlu0 %v1367
        %v1369 = vpop.xlane.xlu0 %1368
        %v1370 = vadd.f32 %v1183, %v1184
        %v1371 = vadd.f32 %v1370, %v1185
        %v1372 = vadd.f32 %v1371, %v1186
        %1373 = vadd.xlane.f32.xlu0 %v1372
        %v1374 = vpop.xlane.xlu0 %1373
        %v1375 = vadd.f32 %v1187, %v1188
        %v1376 = vadd.f32 %v1375, %v1189
        %v1377 = vadd.f32 %v1376, %v1190
        %1378 = vadd.xlane.f32.xlu0 %v1377
        %v1379 = vpop.xlane.xlu0 %1378
        %v1380 = vadd.f32 %v1191, %v1192
        %v1381 = vadd.f32 %v1380, %v1193
        %v1382 = vadd.f32 %v1381, %v1194
        %1383 = vadd.xlane.f32.xlu0 %v1382
        %v1384 = vpop.xlane.xlu0 %1383
        %v1385 = vadd.f32 %v1195, %v1196
        %v1386 = vadd.f32 %v1385, %v1197
        %v1387 = vadd.f32 %v1386, %v1198
        %1388 = vadd.xlane.f32.xlu0 %v1387
        %v1389 = vpop.xlane.xlu0 %1388
        %v1390 = vadd.f32 %v1199, %v1200
        %v1391 = vadd.f32 %v1390, %v1201
        %v1392 = vadd.f32 %v1391, %v1202
        %1393 = vadd.xlane.f32.xlu0 %v1392
        %v1394 = vpop.xlane.xlu0 %1393
        %v1395 = vadd.f32 %v1203, %v1239
        %v1396 = vadd.f32 %v1204, %v1244
        %v1397 = vadd.f32 %v1205, %v1249
        %v1398 = vadd.f32 %v1206, %v1254
        %v1399 = vadd.f32 %v1207, %v1259
        %v1400 = vadd.f32 %v1208, %v1264
        %v1401 = vadd.f32 %v1209, %v1269
        %v1402 = vadd.f32 %v1210, %v1274
        %v1403 = vadd.f32 %v1211, %v1279
        %v1404 = vadd.f32 %v1212, %v1284
        %v1405 = vadd.f32 %v1213, %v1289
        %v1406 = vadd.f32 %v1214, %v1294
        %v1407 = vadd.f32 %v1215, %v1299
        %v1408 = vadd.f32 %v1216, %v1304
        %v1409 = vadd.f32 %v1217, %v1309
        %v1410 = vadd.f32 %v1218, %v1314
        %v1411 = vadd.f32 %v1219, %v1319
        %v1412 = vadd.f32 %v1220, %v1324
        %v1413 = vadd.f32 %v1221, %v1329
        %v1414 = vadd.f32 %v1222, %v1334
        %v1415 = vadd.f32 %v1223, %v1339
        %v1416 = vadd.f32 %v1224, %v1344
        %v1417 = vadd.f32 %v1225, %v1349
        %v1418 = vadd.f32 %v1226, %v1354
        %v1419 = vadd.f32 %v1227, %v1359
        %v1420 = vadd.f32 %v1228, %v1364
        %v1421 = vadd.f32 %v1229, %v1369
        %v1422 = vadd.f32 %v1230, %v1374
        %v1423 = vadd.f32 %v1231, %v1379
        %v1424 = vadd.f32 %v1232, %v1384
        %v1425 = vadd.f32 %v1233, %v1389
        %v1426 = vadd.f32 %v1234, %v1394
        %vm1427 = vcmask 7168
        %1428 = vst.msk [vmem:[#allocation2] sm:$0xff] %vm1427, %v1395
        %1429 = vst.msk [vmem:[#allocation2 + $0x8] sm:$0xff] %vm1427, %v1396
        %1430 = vst.msk [vmem:[#allocation2 + $0x10] sm:$0xff] %vm1427, %v1397
        %1431 = vst.msk [vmem:[#allocation2 + $0x18] sm:$0xff] %vm1427, %v1398
        %1432 = vst.msk [vmem:[#allocation2 + $0x20] sm:$0xff] %vm1427, %v1399
        %1433 = vst.msk [vmem:[#allocation2 + $0x28] sm:$0xff] %vm1427, %v1400
        %1434 = vst.msk [vmem:[#allocation2 + $0x30] sm:$0xff] %vm1427, %v1401
        %1435 = vst.msk [vmem:[#allocation2 + $0x38] sm:$0xff] %vm1427, %v1402
        %1436 = vst.msk [vmem:[#allocation2 + $0x40] sm:$0xff] %vm1427, %v1403
        %1437 = vst.msk [vmem:[#allocation2 + $0x48] sm:$0xff] %vm1427, %v1404
        %1438 = vst.msk [vmem:[#allocation2 + $0x50] sm:$0xff] %vm1427, %v1405
        %1439 = vst.msk [vmem:[#allocation2 + $0x58] sm:$0xff] %vm1427, %v1406
        %1440 = vst.msk [vmem:[#allocation2 + $0x60] sm:$0xff] %vm1427, %v1407
        %1441 = vst.msk [vmem:[#allocation2 + $0x68] sm:$0xff] %vm1427, %v1408
        %1442 = vst.msk [vmem:[#allocation2 + $0x70] sm:$0xff] %vm1427, %v1409
        %1443 = vst.msk [vmem:[#allocation2 + $0x78] sm:$0xff] %vm1427, %v1410
        %1444 = vst.msk [vmem:[#allocation2 + $0x80] sm:$0xff] %vm1427, %v1411
        %1445 = vst.msk [vmem:[#allocation2 + $0x88] sm:$0xff] %vm1427, %v1412
        %1446 = vst.msk [vmem:[#allocation2 + $0x90] sm:$0xff] %vm1427, %v1413
        %1447 = vst.msk [vmem:[#allocation2 + $0x98] sm:$0xff] %vm1427, %v1414
        %1448 = vst.msk [vmem:[#allocation2 + $0xa0] sm:$0xff] %vm1427, %v1415
        %1449 = vst.msk [vmem:[#allocation2 + $0xa8] sm:$0xff] %vm1427, %v1416
        %1450 = vst.msk [vmem:[#allocation2 + $0xb0] sm:$0xff] %vm1427, %v1417
        %1451 = vst.msk [vmem:[#allocation2 + $0xb8] sm:$0xff] %vm1427, %v1418
        %1452 = vst.msk [vmem:[#allocation2 + $0xc0] sm:$0xff] %vm1427, %v1419
        %1453 = vst.msk [vmem:[#allocation2 + $0xc8] sm:$0xff] %vm1427, %v1420
        %1454 = vst.msk [vmem:[#allocation2 + $0xd0] sm:$0xff] %vm1427, %v1421
        %1455 = vst.msk [vmem:[#allocation2 + $0xd8] sm:$0xff] %vm1427, %v1422
        %1456 = vst.msk [vmem:[#allocation2 + $0xe0] sm:$0xff] %vm1427, %v1423
        %1457 = vst.msk [vmem:[#allocation2 + $0xe8] sm:$0xff] %vm1427, %v1424
        %1458 = vst.msk [vmem:[#allocation2 + $0xf0] sm:$0xff] %vm1427, %v1425
        %1459 = vst.msk [vmem:[#allocation2 + $0xf8] sm:$0xff] %vm1427, %v1426
        %v1460 = vld [vmem:[#allocation3] sm:$0xff]
        %v1461 = vld [vmem:[#allocation3 + $0x8] sm:$0xff]
        %v1462 = vld [vmem:[#allocation3 + $0x10] sm:$0xff]
        %v1463 = vld [vmem:[#allocation3 + $0x18] sm:$0xff]
        %v1464 = vld [vmem:[#allocation3 + $0x20] sm:$0xff]
        %v1465 = vld [vmem:[#allocation3 + $0x28] sm:$0xff]
        %v1466 = vld [vmem:[#allocation3 + $0x30] sm:$0xff]
        %v1467 = vld [vmem:[#allocation3 + $0x38] sm:$0xff]
        %v1468 = vld [vmem:[#allocation3 + $0x40] sm:$0xff]
        %v1469 = vld [vmem:[#allocation3 + $0x48] sm:$0xff]
        %v1470 = vld [vmem:[#allocation3 + $0x50] sm:$0xff]
        %v1471 = vld [vmem:[#allocation3 + $0x58] sm:$0xff]
        %v1472 = vld [vmem:[#allocation3 + $0x60] sm:$0xff]
        %v1473 = vld [vmem:[#allocation3 + $0x68] sm:$0xff]
        %v1474 = vld [vmem:[#allocation3 + $0x70] sm:$0xff]
        %v1475 = vld [vmem:[#allocation3 + $0x78] sm:$0xff]
        %v1476 = vld [vmem:[#allocation3 + $0x80] sm:$0xff]
        %v1477 = vld [vmem:[#allocation3 + $0x88] sm:$0xff]
        %v1478 = vld [vmem:[#allocation3 + $0x90] sm:$0xff]
        %v1479 = vld [vmem:[#allocation3 + $0x98] sm:$0xff]
        %v1480 = vld [vmem:[#allocation3 + $0xa0] sm:$0xff]
        %v1481 = vld [vmem:[#allocation3 + $0xa8] sm:$0xff]
        %v1482 = vld [vmem:[#allocation3 + $0xb0] sm:$0xff]
        %v1483 = vld [vmem:[#allocation3 + $0xb8] sm:$0xff]
        %v1484 = vld [vmem:[#allocation3 + $0xc0] sm:$0xff]
        %v1485 = vld [vmem:[#allocation3 + $0xc8] sm:$0xff]
        %v1486 = vld [vmem:[#allocation3 + $0xd0] sm:$0xff]
        %v1487 = vld [vmem:[#allocation3 + $0xd8] sm:$0xff]
        %v1488 = vld [vmem:[#allocation3 + $0xe0] sm:$0xff]
        %v1489 = vld [vmem:[#allocation3 + $0xe8] sm:$0xff]
        %v1490 = vld [vmem:[#allocation3 + $0xf0] sm:$0xff]
        %v1491 = vld [vmem:[#allocation3 + $0xf8] sm:$0xff]
        %v1492 = vmul.f32 %v1075, %v1075
        %v1493 = vmul.f32 %v1076, %v1076
        %v1494 = vmul.f32 %v1077, %v1077
        %v1495 = vmul.f32 %v1078, %v1078
        %v1496 = vmul.f32 %v1079, %v1079
        %v1497 = vmul.f32 %v1080, %v1080
        %v1498 = vmul.f32 %v1081, %v1081
        %v1499 = vmul.f32 %v1082, %v1082
        %v1500 = vmul.f32 %v1083, %v1083
        %v1501 = vmul.f32 %v1084, %v1084
        %v1502 = vmul.f32 %v1085, %v1085
        %v1503 = vmul.f32 %v1086, %v1086
        %v1504 = vmul.f32 %v1087, %v1087
        %v1505 = vmul.f32 %v1088, %v1088
        %v1506 = vmul.f32 %v1089, %v1089
        %v1507 = vmul.f32 %v1090, %v1090
        %v1508 = vmul.f32 %v1091, %v1091
        %v1509 = vmul.f32 %v1092, %v1092
        %v1510 = vmul.f32 %v1093, %v1093
        %v1511 = vmul.f32 %v1094, %v1094
        %v1512 = vmul.f32 %v1095, %v1095
        %v1513 = vmul.f32 %v1096, %v1096
        %v1514 = vmul.f32 %v1097, %v1097
        %v1515 = vmul.f32 %v1098, %v1098
        %v1516 = vmul.f32 %v1099, %v1099
        %v1517 = vmul.f32 %v1100, %v1100
        %v1518 = vmul.f32 %v1101, %v1101
        %v1519 = vmul.f32 %v1102, %v1102
        %v1520 = vmul.f32 %v1103, %v1103
        %v1521 = vmul.f32 %v1104, %v1104
        %v1522 = vmul.f32 %v1105, %v1105
        %v1523 = vmul.f32 %v1106, %v1106
        %v1524 = vmul.f32 %v1107, %v1107
        %v1525 = vmul.f32 %v1108, %v1108
        %v1526 = vmul.f32 %v1109, %v1109
        %v1527 = vmul.f32 %v1110, %v1110
        %v1528 = vmul.f32 %v1111, %v1111
        %v1529 = vmul.f32 %v1112, %v1112
        %v1530 = vmul.f32 %v1113, %v1113
        %v1531 = vmul.f32 %v1114, %v1114
        %v1532 = vmul.f32 %v1115, %v1115
        %v1533 = vmul.f32 %v1116, %v1116
        %v1534 = vmul.f32 %v1117, %v1117
        %v1535 = vmul.f32 %v1118, %v1118
        %v1536 = vmul.f32 %v1119, %v1119
        %v1537 = vmul.f32 %v1120, %v1120
        %v1538 = vmul.f32 %v1121, %v1121
        %v1539 = vmul.f32 %v1122, %v1122
        %v1540 = vmul.f32 %v1123, %v1123
        %v1541 = vmul.f32 %v1124, %v1124
        %v1542 = vmul.f32 %v1125, %v1125
        %v1543 = vmul.f32 %v1126, %v1126
        %v1544 = vmul.f32 %v1127, %v1127
        %v1545 = vmul.f32 %v1128, %v1128
        %v1546 = vmul.f32 %v1129, %v1129
        %v1547 = vmul.f32 %v1130, %v1130
        %v1548 = vmul.f32 %v1131, %v1131
        %v1549 = vmul.f32 %v1132, %v1132
        %v1550 = vmul.f32 %v1133, %v1133
        %v1551 = vmul.f32 %v1134, %v1134
        %v1552 = vmul.f32 %v1135, %v1135
        %v1553 = vmul.f32 %v1136, %v1136
        %v1554 = vmul.f32 %v1137, %v1137
        %v1555 = vmul.f32 %v1138, %v1138
        %v1556 = vmul.f32 %v1139, %v1139
        %v1557 = vmul.f32 %v1140, %v1140
        %v1558 = vmul.f32 %v1141, %v1141
        %v1559 = vmul.f32 %v1142, %v1142
        %v1560 = vmul.f32 %v1143, %v1143
        %v1561 = vmul.f32 %v1144, %v1144
        %v1562 = vmul.f32 %v1145, %v1145
        %v1563 = vmul.f32 %v1146, %v1146
        %v1564 = vmul.f32 %v1147, %v1147
        %v1565 = vmul.f32 %v1148, %v1148
        %v1566 = vmul.f32 %v1149, %v1149
        %v1567 = vmul.f32 %v1150, %v1150
        %v1568 = vmul.f32 %v1151, %v1151
        %v1569 = vmul.f32 %v1152, %v1152
        %v1570 = vmul.f32 %v1153, %v1153
        %v1571 = vmul.f32 %v1154, %v1154
        %v1572 = vmul.f32 %v1155, %v1155
        %v1573 = vmul.f32 %v1156, %v1156
        %v1574 = vmul.f32 %v1157, %v1157
        %v1575 = vmul.f32 %v1158, %v1158
        %v1576 = vmul.f32 %v1159, %v1159
        %v1577 = vmul.f32 %v1160, %v1160
        %v1578 = vmul.f32 %v1161, %v1161
        %v1579 = vmul.f32 %v1162, %v1162
        %v1580 = vmul.f32 %v1163, %v1163
        %v1581 = vmul.f32 %v1164, %v1164
        %v1582 = vmul.f32 %v1165, %v1165
        %v1583 = vmul.f32 %v1166, %v1166
        %v1584 = vmul.f32 %v1167, %v1167
        %v1585 = vmul.f32 %v1168, %v1168
        %v1586 = vmul.f32 %v1169, %v1169
        %v1587 = vmul.f32 %v1170, %v1170
        %v1588 = vmul.f32 %v1171, %v1171
        %v1589 = vmul.f32 %v1172, %v1172
        %v1590 = vmul.f32 %v1173, %v1173
        %v1591 = vmul.f32 %v1174, %v1174
        %v1592 = vmul.f32 %v1175, %v1175
        %v1593 = vmul.f32 %v1176, %v1176
        %v1594 = vmul.f32 %v1177, %v1177
        %v1595 = vmul.f32 %v1178, %v1178
        %v1596 = vmul.f32 %v1179, %v1179
        %v1597 = vmul.f32 %v1180, %v1180
        %v1598 = vmul.f32 %v1181, %v1181
        %v1599 = vmul.f32 %v1182, %v1182
        %v1600 = vmul.f32 %v1183, %v1183
        %v1601 = vmul.f32 %v1184, %v1184
        %v1602 = vmul.f32 %v1185, %v1185
        %v1603 = vmul.f32 %v1186, %v1186
        %v1604 = vmul.f32 %v1187, %v1187
        %v1605 = vmul.f32 %v1188, %v1188
        %v1606 = vmul.f32 %v1189, %v1189
        %v1607 = vmul.f32 %v1190, %v1190
        %v1608 = vmul.f32 %v1191, %v1191
        %v1609 = vmul.f32 %v1192, %v1192
        %v1610 = vmul.f32 %v1193, %v1193
        %v1611 = vmul.f32 %v1194, %v1194
        %v1612 = vmul.f32 %v1195, %v1195
        %v1613 = vmul.f32 %v1196, %v1196
        %v1614 = vmul.f32 %v1197, %v1197
        %v1615 = vmul.f32 %v1198, %v1198
        %v1616 = vmul.f32 %v1199, %v1199
        %v1617 = vmul.f32 %v1200, %v1200
        %v1618 = vmul.f32 %v1201, %v1201
        %v1619 = vmul.f32 %v1202, %v1202
        %v1620 = vadd.f32 %v1492, %v1493
        %v1621 = vadd.f32 %v1620, %v1494
        %v1622 = vadd.f32 %v1621, %v1495
        %1623 = vadd.xlane.f32.xlu0 %v1622
        %v1624 = vpop.xlane.xlu0 %1623
        %v1625 = vadd.f32 %v1496, %v1497
        %v1626 = vadd.f32 %v1625, %v1498
        %v1627 = vadd.f32 %v1626, %v1499
        %1628 = vadd.xlane.f32.xlu0 %v1627
        %v1629 = vpop.xlane.xlu0 %1628
        %v1630 = vadd.f32 %v1500, %v1501
        %v1631 = vadd.f32 %v1630, %v1502
        %v1632 = vadd.f32 %v1631, %v1503
        %1633 = vadd.xlane.f32.xlu0 %v1632
        %v1634 = vpop.xlane.xlu0 %1633
        %v1635 = vadd.f32 %v1504, %v1505
        %v1636 = vadd.f32 %v1635, %v1506
        %v1637 = vadd.f32 %v1636, %v1507
        %1638 = vadd.xlane.f32.xlu0 %v1637
        %v1639 = vpop.xlane.xlu0 %1638
        %v1640 = vadd.f32 %v1508, %v1509
        %v1641 = vadd.f32 %v1640, %v1510
        %v1642 = vadd.f32 %v1641, %v1511
        %1643 = vadd.xlane.f32.xlu0 %v1642
        %v1644 = vpop.xlane.xlu0 %1643
        %v1645 = vadd.f32 %v1512, %v1513
        %v1646 = vadd.f32 %v1645, %v1514
        %v1647 = vadd.f32 %v1646, %v1515
        %1648 = vadd.xlane.f32.xlu0 %v1647
        %v1649 = vpop.xlane.xlu0 %1648
        %v1650 = vadd.f32 %v1516, %v1517
        %v1651 = vadd.f32 %v1650, %v1518
        %v1652 = vadd.f32 %v1651, %v1519
        %1653 = vadd.xlane.f32.xlu0 %v1652
        %v1654 = vpop.xlane.xlu0 %1653
        %v1655 = vadd.f32 %v1520, %v1521
        %v1656 = vadd.f32 %v1655, %v1522
        %v1657 = vadd.f32 %v1656, %v1523
        %1658 = vadd.xlane.f32.xlu0 %v1657
        %v1659 = vpop.xlane.xlu0 %1658
        %v1660 = vadd.f32 %v1524, %v1525
        %v1661 = vadd.f32 %v1660, %v1526
        %v1662 = vadd.f32 %v1661, %v1527
        %1663 = vadd.xlane.f32.xlu0 %v1662
        %v1664 = vpop.xlane.xlu0 %1663
        %v1665 = vadd.f32 %v1528, %v1529
        %v1666 = vadd.f32 %v1665, %v1530
        %v1667 = vadd.f32 %v1666, %v1531
        %1668 = vadd.xlane.f32.xlu0 %v1667
        %v1669 = vpop.xlane.xlu0 %1668
        %v1670 = vadd.f32 %v1532, %v1533
        %v1671 = vadd.f32 %v1670, %v1534
        %v1672 = vadd.f32 %v1671, %v1535
        %1673 = vadd.xlane.f32.xlu0 %v1672
        %v1674 = vpop.xlane.xlu0 %1673
        %v1675 = vadd.f32 %v1536, %v1537
        %v1676 = vadd.f32 %v1675, %v1538
        %v1677 = vadd.f32 %v1676, %v1539
        %1678 = vadd.xlane.f32.xlu0 %v1677
        %v1679 = vpop.xlane.xlu0 %1678
        %v1680 = vadd.f32 %v1540, %v1541
        %v1681 = vadd.f32 %v1680, %v1542
        %v1682 = vadd.f32 %v1681, %v1543
        %1683 = vadd.xlane.f32.xlu0 %v1682
        %v1684 = vpop.xlane.xlu0 %1683
        %v1685 = vadd.f32 %v1544, %v1545
        %v1686 = vadd.f32 %v1685, %v1546
        %v1687 = vadd.f32 %v1686, %v1547
        %1688 = vadd.xlane.f32.xlu0 %v1687
        %v1689 = vpop.xlane.xlu0 %1688
        %v1690 = vadd.f32 %v1548, %v1549
        %v1691 = vadd.f32 %v1690, %v1550
        %v1692 = vadd.f32 %v1691, %v1551
        %1693 = vadd.xlane.f32.xlu0 %v1692
        %v1694 = vpop.xlane.xlu0 %1693
        %v1695 = vadd.f32 %v1552, %v1553
        %v1696 = vadd.f32 %v1695, %v1554
        %v1697 = vadd.f32 %v1696, %v1555
        %1698 = vadd.xlane.f32.xlu0 %v1697
        %v1699 = vpop.xlane.xlu0 %1698
        %v1700 = vadd.f32 %v1556, %v1557
        %v1701 = vadd.f32 %v1700, %v1558
        %v1702 = vadd.f32 %v1701, %v1559
        %1703 = vadd.xlane.f32.xlu0 %v1702
        %v1704 = vpop.xlane.xlu0 %1703
        %v1705 = vadd.f32 %v1560, %v1561
        %v1706 = vadd.f32 %v1705, %v1562
        %v1707 = vadd.f32 %v1706, %v1563
        %1708 = vadd.xlane.f32.xlu0 %v1707
        %v1709 = vpop.xlane.xlu0 %1708
        %v1710 = vadd.f32 %v1564, %v1565
        %v1711 = vadd.f32 %v1710, %v1566
        %v1712 = vadd.f32 %v1711, %v1567
        %1713 = vadd.xlane.f32.xlu0 %v1712
        %v1714 = vpop.xlane.xlu0 %1713
        %v1715 = vadd.f32 %v1568, %v1569
        %v1716 = vadd.f32 %v1715, %v1570
        %v1717 = vadd.f32 %v1716, %v1571
        %1718 = vadd.xlane.f32.xlu0 %v1717
        %v1719 = vpop.xlane.xlu0 %1718
        %v1720 = vadd.f32 %v1572, %v1573
        %v1721 = vadd.f32 %v1720, %v1574
        %v1722 = vadd.f32 %v1721, %v1575
        %1723 = vadd.xlane.f32.xlu0 %v1722
        %v1724 = vpop.xlane.xlu0 %1723
        %v1725 = vadd.f32 %v1576, %v1577
        %v1726 = vadd.f32 %v1725, %v1578
        %v1727 = vadd.f32 %v1726, %v1579
        %1728 = vadd.xlane.f32.xlu0 %v1727
        %v1729 = vpop.xlane.xlu0 %1728
        %v1730 = vadd.f32 %v1580, %v1581
        %v1731 = vadd.f32 %v1730, %v1582
        %v1732 = vadd.f32 %v1731, %v1583
        %1733 = vadd.xlane.f32.xlu0 %v1732
        %v1734 = vpop.xlane.xlu0 %1733
        %v1735 = vadd.f32 %v1584, %v1585
        %v1736 = vadd.f32 %v1735, %v1586
        %v1737 = vadd.f32 %v1736, %v1587
        %1738 = vadd.xlane.f32.xlu0 %v1737
        %v1739 = vpop.xlane.xlu0 %1738
        %v1740 = vadd.f32 %v1588, %v1589
        %v1741 = vadd.f32 %v1740, %v1590
        %v1742 = vadd.f32 %v1741, %v1591
        %1743 = vadd.xlane.f32.xlu0 %v1742
        %v1744 = vpop.xlane.xlu0 %1743
        %v1745 = vadd.f32 %v1592, %v1593
        %v1746 = vadd.f32 %v1745, %v1594
        %v1747 = vadd.f32 %v1746, %v1595
        %1748 = vadd.xlane.f32.xlu0 %v1747
        %v1749 = vpop.xlane.xlu0 %1748
        %v1750 = vadd.f32 %v1596, %v1597
        %v1751 = vadd.f32 %v1750, %v1598
        %v1752 = vadd.f32 %v1751, %v1599
        %1753 = vadd.xlane.f32.xlu0 %v1752
        %v1754 = vpop.xlane.xlu0 %1753
        %v1755 = vadd.f32 %v1600, %v1601
        %v1756 = vadd.f32 %v1755, %v1602
        %v1757 = vadd.f32 %v1756, %v1603
        %1758 = vadd.xlane.f32.xlu0 %v1757
        %v1759 = vpop.xlane.xlu0 %1758
        %v1760 = vadd.f32 %v1604, %v1605
        %v1761 = vadd.f32 %v1760, %v1606
        %v1762 = vadd.f32 %v1761, %v1607
        %1763 = vadd.xlane.f32.xlu0 %v1762
        %v1764 = vpop.xlane.xlu0 %1763
        %v1765 = vadd.f32 %v1608, %v1609
        %v1766 = vadd.f32 %v1765, %v1610
        %v1767 = vadd.f32 %v1766, %v1611
        %1768 = vadd.xlane.f32.xlu0 %v1767
        %v1769 = vpop.xlane.xlu0 %1768
        %v1770 = vadd.f32 %v1612, %v1613
        %v1771 = vadd.f32 %v1770, %v1614
        %v1772 = vadd.f32 %v1771, %v1615
        %1773 = vadd.xlane.f32.xlu0 %v1772
        %v1774 = vpop.xlane.xlu0 %1773
        %v1775 = vadd.f32 %v1616, %v1617
        %v1776 = vadd.f32 %v1775, %v1618
        %v1777 = vadd.f32 %v1776, %v1619
        %1778 = vadd.xlane.f32.xlu0 %v1777
        %v1779 = vpop.xlane.xlu0 %1778
        %v1780 = vadd.f32 %v1460, %v1624
        %v1781 = vadd.f32 %v1461, %v1629
        %v1782 = vadd.f32 %v1462, %v1634
        %v1783 = vadd.f32 %v1463, %v1639
        %v1784 = vadd.f32 %v1464, %v1644
        %v1785 = vadd.f32 %v1465, %v1649
        %v1786 = vadd.f32 %v1466, %v1654
        %v1787 = vadd.f32 %v1467, %v1659
        %v1788 = vadd.f32 %v1468, %v1664
        %v1789 = vadd.f32 %v1469, %v1669
        %v1790 = vadd.f32 %v1470, %v1674
        %v1791 = vadd.f32 %v1471, %v1679
        %v1792 = vadd.f32 %v1472, %v1684
        %v1793 = vadd.f32 %v1473, %v1689
        %v1794 = vadd.f32 %v1474, %v1694
        %v1795 = vadd.f32 %v1475, %v1699
        %v1796 = vadd.f32 %v1476, %v1704
        %v1797 = vadd.f32 %v1477, %v1709
        %v1798 = vadd.f32 %v1478, %v1714
        %v1799 = vadd.f32 %v1479, %v1719
        %v1800 = vadd.f32 %v1480, %v1724
        %v1801 = vadd.f32 %v1481, %v1729
        %v1802 = vadd.f32 %v1482, %v1734
        %v1803 = vadd.f32 %v1483, %v1739
        %v1804 = vadd.f32 %v1484, %v1744
        %v1805 = vadd.f32 %v1485, %v1749
        %v1806 = vadd.f32 %v1486, %v1754
        %v1807 = vadd.f32 %v1487, %v1759
        %v1808 = vadd.f32 %v1488, %v1764
        %v1809 = vadd.f32 %v1489, %v1769
        %v1810 = vadd.f32 %v1490, %v1774
        %v1811 = vadd.f32 %v1491, %v1779
        %1812 = vst.msk [vmem:[#allocation3] sm:$0xff] %vm1427, %v1780
        %1813 = vst.msk [vmem:[#allocation3 + $0x8] sm:$0xff] %vm1427, %v1781
        %1814 = vst.msk [vmem:[#allocation3 + $0x10] sm:$0xff] %vm1427, %v1782
        %1815 = vst.msk [vmem:[#allocation3 + $0x18] sm:$0xff] %vm1427, %v1783
        %1816 = vst.msk [vmem:[#allocation3 + $0x20] sm:$0xff] %vm1427, %v1784
        %1817 = vst.msk [vmem:[#allocation3 + $0x28] sm:$0xff] %vm1427, %v1785
        %1818 = vst.msk [vmem:[#allocation3 + $0x30] sm:$0xff] %vm1427, %v1786
        %1819 = vst.msk [vmem:[#allocation3 + $0x38] sm:$0xff] %vm1427, %v1787
        %1820 = vst.msk [vmem:[#allocation3 + $0x40] sm:$0xff] %vm1427, %v1788
        %1821 = vst.msk [vmem:[#allocation3 + $0x48] sm:$0xff] %vm1427, %v1789
        %1822 = vst.msk [vmem:[#allocation3 + $0x50] sm:$0xff] %vm1427, %v1790
        %1823 = vst.msk [vmem:[#allocation3 + $0x58] sm:$0xff] %vm1427, %v1791
        %1824 = vst.msk [vmem:[#allocation3 + $0x60] sm:$0xff] %vm1427, %v1792
        %1825 = vst.msk [vmem:[#allocation3 + $0x68] sm:$0xff] %vm1427, %v1793
        %1826 = vst.msk [vmem:[#allocation3 + $0x70] sm:$0xff] %vm1427, %v1794
        %1827 = vst.msk [vmem:[#allocation3 + $0x78] sm:$0xff] %vm1427, %v1795
        %1828 = vst.msk [vmem:[#allocation3 + $0x80] sm:$0xff] %vm1427, %v1796
        %1829 = vst.msk [vmem:[#allocation3 + $0x88] sm:$0xff] %vm1427, %v1797
        %1830 = vst.msk [vmem:[#allocation3 + $0x90] sm:$0xff] %vm1427, %v1798
        %1831 = vst.msk [vmem:[#allocation3 + $0x98] sm:$0xff] %vm1427, %v1799
        %1832 = vst.msk [vmem:[#allocation3 + $0xa0] sm:$0xff] %vm1427, %v1800
        %1833 = vst.msk [vmem:[#allocation3 + $0xa8] sm:$0xff] %vm1427, %v1801
        %1834 = vst.msk [vmem:[#allocation3 + $0xb0] sm:$0xff] %vm1427, %v1802
        %1835 = vst.msk [vmem:[#allocation3 + $0xb8] sm:$0xff] %vm1427, %v1803
        %1836 = vst.msk [vmem:[#allocation3 + $0xc0] sm:$0xff] %vm1427, %v1804
        %1837 = vst.msk [vmem:[#allocation3 + $0xc8] sm:$0xff] %vm1427, %v1805
        %1838 = vst.msk [vmem:[#allocation3 + $0xd0] sm:$0xff] %vm1427, %v1806
        %1839 = vst.msk [vmem:[#allocation3 + $0xd8] sm:$0xff] %vm1427, %v1807
        %1840 = vst.msk [vmem:[#allocation3 + $0xe0] sm:$0xff] %vm1427, %v1808
        %1841 = vst.msk [vmem:[#allocation3 + $0xe8] sm:$0xff] %vm1427, %v1809
        %1842 = vst.msk [vmem:[#allocation3 + $0xf0] sm:$0xff] %vm1427, %v1810
        %1843 = vst.msk [vmem:[#allocation3 + $0xf8] sm:$0xff] %vm1427, %v1811
        %p1844 = scmp.eq.s32.totalorder %s21, 1
        %p1845 = pnand %p861, %p1844
        %p1846 = pneg %p1845
        // Predicated region
        $region103: #{tpu_custom_call.1} parent=93 // pred_check
          _
        $region104: #{tpu_custom_call.1} parent=93 // pred_check_branch
          %1848 = sbr.rel (%p1845) target = $region106
        $region105: #{tpu_custom_call.1} parent=93 // pred_region
          %v1849 = vld [vmem:[#allocation2] sm:$0xff]
          %v1850 = vld [vmem:[#allocation2 + $0x8] sm:$0xff]
          %v1851 = vld [vmem:[#allocation2 + $0x10] sm:$0xff]
          %v1852 = vld [vmem:[#allocation2 + $0x18] sm:$0xff]
          %v1853 = vld [vmem:[#allocation2 + $0x20] sm:$0xff]
          %v1854 = vld [vmem:[#allocation2 + $0x28] sm:$0xff]
          %v1855 = vld [vmem:[#allocation2 + $0x30] sm:$0xff]
          %v1856 = vld [vmem:[#allocation2 + $0x38] sm:$0xff]
          %v1857 = vld [vmem:[#allocation2 + $0x40] sm:$0xff]
          %v1858 = vld [vmem:[#allocation2 + $0x48] sm:$0xff]
          %v1859 = vld [vmem:[#allocation2 + $0x50] sm:$0xff]
          %v1860 = vld [vmem:[#allocation2 + $0x58] sm:$0xff]
          %v1861 = vld [vmem:[#allocation2 + $0x60] sm:$0xff]
          %v1862 = vld [vmem:[#allocation2 + $0x68] sm:$0xff]
          %v1863 = vld [vmem:[#allocation2 + $0x70] sm:$0xff]
          %v1864 = vld [vmem:[#allocation2 + $0x78] sm:$0xff]
          %v1865 = vld [vmem:[#allocation2 + $0x80] sm:$0xff]
          %v1866 = vld [vmem:[#allocation2 + $0x88] sm:$0xff]
          %v1867 = vld [vmem:[#allocation2 + $0x90] sm:$0xff]
          %v1868 = vld [vmem:[#allocation2 + $0x98] sm:$0xff]
          %v1869 = vld [vmem:[#allocation2 + $0xa0] sm:$0xff]
          %v1870 = vld [vmem:[#allocation2 + $0xa8] sm:$0xff]
          %v1871 = vld [vmem:[#allocation2 + $0xb0] sm:$0xff]
          %v1872 = vld [vmem:[#allocation2 + $0xb8] sm:$0xff]
          %v1873 = vld [vmem:[#allocation2 + $0xc0] sm:$0xff]
          %v1874 = vld [vmem:[#allocation2 + $0xc8] sm:$0xff]
          %v1875 = vld [vmem:[#allocation2 + $0xd0] sm:$0xff]
          %v1876 = vld [vmem:[#allocation2 + $0xd8] sm:$0xff]
          %v1877 = vld [vmem:[#allocation2 + $0xe0] sm:$0xff]
          %v1878 = vld [vmem:[#allocation2 + $0xe8] sm:$0xff]
          %v1879 = vld [vmem:[#allocation2 + $0xf0] sm:$0xff]
          %v1880 = vld [vmem:[#allocation2 + $0xf8] sm:$0xff]
          %v1881 = vmul.f32 %v1849, 0.0012755102
          %v1882 = vmul.f32 %v1850, 0.0012755102
          %v1883 = vmul.f32 %v1851, 0.0012755102
          %v1884 = vmul.f32 %v1852, 0.0012755102
          %v1885 = vmul.f32 %v1853, 0.0012755102
          %v1886 = vmul.f32 %v1854, 0.0012755102
          %v1887 = vmul.f32 %v1855, 0.0012755102
          %v1888 = vmul.f32 %v1856, 0.0012755102
          %v1889 = vmul.f32 %v1857, 0.0012755102
          %v1890 = vmul.f32 %v1858, 0.0012755102
          %v1891 = vmul.f32 %v1859, 0.0012755102
          %v1892 = vmul.f32 %v1860, 0.0012755102
          %v1893 = vmul.f32 %v1861, 0.0012755102
          %v1894 = vmul.f32 %v1862, 0.0012755102
          %v1895 = vmul.f32 %v1863, 0.0012755102
          %v1896 = vmul.f32 %v1864, 0.0012755102
          %v1897 = vmul.f32 %v1865, 0.0012755102
          %v1898 = vmul.f32 %v1866, 0.0012755102
          %v1899 = vmul.f32 %v1867, 0.0012755102
          %v1900 = vmul.f32 %v1868, 0.0012755102
          %v1901 = vmul.f32 %v1869, 0.0012755102
          %v1902 = vmul.f32 %v1870, 0.0012755102
          %v1903 = vmul.f32 %v1871, 0.0012755102
          %v1904 = vmul.f32 %v1872, 0.0012755102
          %v1905 = vmul.f32 %v1873, 0.0012755102
          %v1906 = vmul.f32 %v1874, 0.0012755102
          %v1907 = vmul.f32 %v1875, 0.0012755102
          %v1908 = vmul.f32 %v1876, 0.0012755102
          %v1909 = vmul.f32 %v1877, 0.0012755102
          %v1910 = vmul.f32 %v1878, 0.0012755102
          %v1911 = vmul.f32 %v1879, 0.0012755102
          %v1912 = vmul.f32 %v1880, 0.0012755102
          %v1913 = vld [vmem:[#allocation3] sm:$0xff]
          %v1914 = vld [vmem:[#allocation3 + $0x8] sm:$0xff]
          %v1915 = vld [vmem:[#allocation3 + $0x10] sm:$0xff]
          %v1916 = vld [vmem:[#allocation3 + $0x18] sm:$0xff]
          %v1917 = vld [vmem:[#allocation3 + $0x20] sm:$0xff]
          %v1918 = vld [vmem:[#allocation3 + $0x28] sm:$0xff]
          %v1919 = vld [vmem:[#allocation3 + $0x30] sm:$0xff]
          %v1920 = vld [vmem:[#allocation3 + $0x38] sm:$0xff]
          %v1921 = vld [vmem:[#allocation3 + $0x40] sm:$0xff]
          %v1922 = vld [vmem:[#allocation3 + $0x48] sm:$0xff]
          %v1923 = vld [vmem:[#allocation3 + $0x50] sm:$0xff]
          %v1924 = vld [vmem:[#allocation3 + $0x58] sm:$0xff]
          %v1925 = vld [vmem:[#allocation3 + $0x60] sm:$0xff]
          %v1926 = vld [vmem:[#allocation3 + $0x68] sm:$0xff]
          %v1927 = vld [vmem:[#allocation3 + $0x70] sm:$0xff]
          %v1928 = vld [vmem:[#allocation3 + $0x78] sm:$0xff]
          %v1929 = vld [vmem:[#allocation3 + $0x80] sm:$0xff]
          %v1930 = vld [vmem:[#allocation3 + $0x88] sm:$0xff]
          %v1931 = vld [vmem:[#allocation3 + $0x90] sm:$0xff]
          %v1932 = vld [vmem:[#allocation3 + $0x98] sm:$0xff]
          %v1933 = vld [vmem:[#allocation3 + $0xa0] sm:$0xff]
          %v1934 = vld [vmem:[#allocation3 + $0xa8] sm:$0xff]
          %v1935 = vld [vmem:[#allocation3 + $0xb0] sm:$0xff]
          %v1936 = vld [vmem:[#allocation3 + $0xb8] sm:$0xff]
          %v1937 = vld [vmem:[#allocation3 + $0xc0] sm:$0xff]
          %v1938 = vld [vmem:[#allocation3 + $0xc8] sm:$0xff]
          %v1939 = vld [vmem:[#allocation3 + $0xd0] sm:$0xff]
          %v1940 = vld [vmem:[#allocation3 + $0xd8] sm:$0xff]
          %v1941 = vld [vmem:[#allocation3 + $0xe0] sm:$0xff]
          %v1942 = vld [vmem:[#allocation3 + $0xe8] sm:$0xff]
          %v1943 = vld [vmem:[#allocation3 + $0xf0] sm:$0xff]
          %v1944 = vld [vmem:[#allocation3 + $0xf8] sm:$0xff]
          %v1945 = vmul.f32 %v1913, 0.0012755102
          %v1946 = vmul.f32 %v1914, 0.0012755102
          %v1947 = vmul.f32 %v1915, 0.0012755102
          %v1948 = vmul.f32 %v1916, 0.0012755102
          %v1949 = vmul.f32 %v1917, 0.0012755102
          %v1950 = vmul.f32 %v1918, 0.0012755102
          %v1951 = vmul.f32 %v1919, 0.0012755102
          %v1952 = vmul.f32 %v1920, 0.0012755102
          %v1953 = vmul.f32 %v1921, 0.0012755102
          %v1954 = vmul.f32 %v1922, 0.0012755102
          %v1955 = vmul.f32 %v1923, 0.0012755102
          %v1956 = vmul.f32 %v1924, 0.0012755102
          %v1957 = vmul.f32 %v1925, 0.0012755102
          %v1958 = vmul.f32 %v1926, 0.0012755102
          %v1959 = vmul.f32 %v1927, 0.0012755102
          %v1960 = vmul.f32 %v1928, 0.0012755102
          %v1961 = vmul.f32 %v1929, 0.0012755102
          %v1962 = vmul.f32 %v1930, 0.0012755102
          %v1963 = vmul.f32 %v1931, 0.0012755102
          %v1964 = vmul.f32 %v1932, 0.0012755102
          %v1965 = vmul.f32 %v1933, 0.0012755102
          %v1966 = vmul.f32 %v1934, 0.0012755102
          %v1967 = vmul.f32 %v1935, 0.0012755102
          %v1968 = vmul.f32 %v1936, 0.0012755102
          %v1969 = vmul.f32 %v1937, 0.0012755102
          %v1970 = vmul.f32 %v1938, 0.0012755102
          %v1971 = vmul.f32 %v1939, 0.0012755102
          %v1972 = vmul.f32 %v1940, 0.0012755102
          %v1973 = vmul.f32 %v1941, 0.0012755102
          %v1974 = vmul.f32 %v1942, 0.0012755102
          %v1975 = vmul.f32 %v1943, 0.0012755102
          %v1976 = vmul.f32 %v1944, 0.0012755102
          %v1977 = vmul.f32 %v1881, %v1881
          %v1978 = vmul.f32 %v1882, %v1882
          %v1979 = vmul.f32 %v1883, %v1883
          %v1980 = vmul.f32 %v1884, %v1884
          %v1981 = vmul.f32 %v1885, %v1885
          %v1982 = vmul.f32 %v1886, %v1886
          %v1983 = vmul.f32 %v1887, %v1887
          %v1984 = vmul.f32 %v1888, %v1888
          %v1985 = vmul.f32 %v1889, %v1889
          %v1986 = vmul.f32 %v1890, %v1890
          %v1987 = vmul.f32 %v1891, %v1891
          %v1988 = vmul.f32 %v1892, %v1892
          %v1989 = vmul.f32 %v1893, %v1893
          %v1990 = vmul.f32 %v1894, %v1894
          %v1991 = vmul.f32 %v1895, %v1895
          %v1992 = vmul.f32 %v1896, %v1896
          %v1993 = vmul.f32 %v1897, %v1897
          %v1994 = vmul.f32 %v1898, %v1898
          %v1995 = vmul.f32 %v1899, %v1899
          %v1996 = vmul.f32 %v1900, %v1900
          %v1997 = vmul.f32 %v1901, %v1901
          %v1998 = vmul.f32 %v1902, %v1902
          %v1999 = vmul.f32 %v1903, %v1903
          %v2000 = vmul.f32 %v1904, %v1904
          %v2001 = vmul.f32 %v1905, %v1905
          %v2002 = vmul.f32 %v1906, %v1906
          %v2003 = vmul.f32 %v1907, %v1907
          %v2004 = vmul.f32 %v1908, %v1908
          %v2005 = vmul.f32 %v1909, %v1909
          %v2006 = vmul.f32 %v1910, %v1910
          %v2007 = vmul.f32 %v1911, %v1911
          %v2008 = vmul.f32 %v1912, %v1912
          %v2009 = vsub.f32 %v1945, %v1977
          %v2010 = vsub.f32 %v1946, %v1978
          %v2011 = vsub.f32 %v1947, %v1979
          %v2012 = vsub.f32 %v1948, %v1980
          %v2013 = vsub.f32 %v1949, %v1981
          %v2014 = vsub.f32 %v1950, %v1982
          %v2015 = vsub.f32 %v1951, %v1983
          %v2016 = vsub.f32 %v1952, %v1984
          %v2017 = vsub.f32 %v1953, %v1985
          %v2018 = vsub.f32 %v1954, %v1986
          %v2019 = vsub.f32 %v1955, %v1987
          %v2020 = vsub.f32 %v1956, %v1988
          %v2021 = vsub.f32 %v1957, %v1989
          %v2022 = vsub.f32 %v1958, %v1990
          %v2023 = vsub.f32 %v1959, %v1991
          %v2024 = vsub.f32 %v1960, %v1992
          %v2025 = vsub.f32 %v1961, %v1993
          %v2026 = vsub.f32 %v1962, %v1994
          %v2027 = vsub.f32 %v1963, %v1995
          %v2028 = vsub.f32 %v1964, %v1996
          %v2029 = vsub.f32 %v1965, %v1997
          %v2030 = vsub.f32 %v1966, %v1998
          %v2031 = vsub.f32 %v1967, %v1999
          %v2032 = vsub.f32 %v1968, %v2000
          %v2033 = vsub.f32 %v1969, %v2001
          %v2034 = vsub.f32 %v1970, %v2002
          %v2035 = vsub.f32 %v1971, %v2003
          %v2036 = vsub.f32 %v1972, %v2004
          %v2037 = vsub.f32 %v1973, %v2005
          %v2038 = vsub.f32 %v1974, %v2006
          %v2039 = vsub.f32 %v1975, %v2007
          %v2040 = vsub.f32 %v1976, %v2008
          %v2041 = vmax.f32 %v2009, 0.0
          %v2042 = vmax.f32 %v2010, 0.0
          %v2043 = vmax.f32 %v2011, 0.0
          %v2044 = vmax.f32 %v2012, 0.0
          %v2045 = vmax.f32 %v2013, 0.0
          %v2046 = vmax.f32 %v2014, 0.0
          %v2047 = vmax.f32 %v2015, 0.0
          %v2048 = vmax.f32 %v2016, 0.0
          %v2049 = vmax.f32 %v2017, 0.0
          %v2050 = vmax.f32 %v2018, 0.0
          %v2051 = vmax.f32 %v2019, 0.0
          %v2052 = vmax.f32 %v2020, 0.0
          %v2053 = vmax.f32 %v2021, 0.0
          %v2054 = vmax.f32 %v2022, 0.0
          %v2055 = vmax.f32 %v2023, 0.0
          %v2056 = vmax.f32 %v2024, 0.0
          %v2057 = vmax.f32 %v2025, 0.0
          %v2058 = vmax.f32 %v2026, 0.0
          %v2059 = vmax.f32 %v2027, 0.0
          %v2060 = vmax.f32 %v2028, 0.0
          %v2061 = vmax.f32 %v2029, 0.0
          %v2062 = vmax.f32 %v2030, 0.0
          %v2063 = vmax.f32 %v2031, 0.0
          %v2064 = vmax.f32 %v2032, 0.0
          %v2065 = vmax.f32 %v2033, 0.0
          %v2066 = vmax.f32 %v2034, 0.0
          %v2067 = vmax.f32 %v2035, 0.0
          %v2068 = vmax.f32 %v2036, 0.0
          %v2069 = vmax.f32 %v2037, 0.0
          %v2070 = vmax.f32 %v2038, 0.0
          %v2071 = vmax.f32 %v2039, 0.0
          %v2072 = vmax.f32 %v2040, 0.0
          %v2073 = vadd.f32 %v2041, 1e-05
          %v2074 = vadd.f32 %v2042, 1e-05
          %v2075 = vadd.f32 %v2043, 1e-05
          %v2076 = vadd.f32 %v2044, 1e-05
          %v2077 = vadd.f32 %v2045, 1e-05
          %v2078 = vadd.f32 %v2046, 1e-05
          %v2079 = vadd.f32 %v2047, 1e-05
          %v2080 = vadd.f32 %v2048, 1e-05
          %v2081 = vadd.f32 %v2049, 1e-05
          %v2082 = vadd.f32 %v2050, 1e-05
          %v2083 = vadd.f32 %v2051, 1e-05
          %v2084 = vadd.f32 %v2052, 1e-05
          %v2085 = vadd.f32 %v2053, 1e-05
          %v2086 = vadd.f32 %v2054, 1e-05
          %v2087 = vadd.f32 %v2055, 1e-05
          %v2088 = vadd.f32 %v2056, 1e-05
          %v2089 = vadd.f32 %v2057, 1e-05
          %v2090 = vadd.f32 %v2058, 1e-05
          %v2091 = vadd.f32 %v2059, 1e-05
          %v2092 = vadd.f32 %v2060, 1e-05
          %v2093 = vadd.f32 %v2061, 1e-05
          %v2094 = vadd.f32 %v2062, 1e-05
          %v2095 = vadd.f32 %v2063, 1e-05
          %v2096 = vadd.f32 %v2064, 1e-05
          %v2097 = vadd.f32 %v2065, 1e-05
          %v2098 = vadd.f32 %v2066, 1e-05
          %v2099 = vadd.f32 %v2067, 1e-05
          %v2100 = vadd.f32 %v2068, 1e-05
          %v2101 = vadd.f32 %v2069, 1e-05
          %v2102 = vadd.f32 %v2070, 1e-05
          %v2103 = vadd.f32 %v2071, 1e-05
          %v2104 = vadd.f32 %v2072, 1e-05
          %v2105 = vrsqrt.pop %v2073
          %v2106 = vrsqrt.pop %v2074
          %v2107 = vrsqrt.pop %v2075
          %v2108 = vrsqrt.pop %v2076
          %v2109 = vrsqrt.pop %v2077
          %v2110 = vrsqrt.pop %v2078
          %v2111 = vrsqrt.pop %v2079
          %v2112 = vrsqrt.pop %v2080
          %v2113 = vrsqrt.pop %v2081
          %v2114 = vrsqrt.pop %v2082
          %v2115 = vrsqrt.pop %v2083
          %v2116 = vrsqrt.pop %v2084
          %v2117 = vrsqrt.pop %v2085
          %v2118 = vrsqrt.pop %v2086
          %v2119 = vrsqrt.pop %v2087
          %v2120 = vrsqrt.pop %v2088
          %v2121 = vrsqrt.pop %v2089
          %v2122 = vrsqrt.pop %v2090
          %v2123 = vrsqrt.pop %v2091
          %v2124 = vrsqrt.pop %v2092
          %v2125 = vrsqrt.pop %v2093
          %v2126 = vrsqrt.pop %v2094
          %v2127 = vrsqrt.pop %v2095
          %v2128 = vrsqrt.pop %v2096
          %v2129 = vrsqrt.pop %v2097
          %v2130 = vrsqrt.pop %v2098
          %v2131 = vrsqrt.pop %v2099
          %v2132 = vrsqrt.pop %v2100
          %v2133 = vrsqrt.pop %v2101
          %v2134 = vrsqrt.pop %v2102
          %v2135 = vrsqrt.pop %v2103
          %v2136 = vrsqrt.pop %v2104
          %v2137 = vld [vmem:[%s1] sm:$0xff]
          %v2138 = vld [vmem:[%s1 + $0x8] sm:$0xff]
          %v2139 = vld [vmem:[%s1 + $0x10] sm:$0xff]
          %v2140 = vld [vmem:[%s1 + $0x18] sm:$0xff]
          %v2141 = vld [vmem:[%s1 + $0x20] sm:$0xff]
          %v2142 = vld [vmem:[%s1 + $0x28] sm:$0xff]
          %v2143 = vld [vmem:[%s1 + $0x30] sm:$0xff]
          %v2144 = vld [vmem:[%s1 + $0x38] sm:$0xff]
          %v2145 = vld [vmem:[%s1 + $0x40] sm:$0xff]
          %v2146 = vld [vmem:[%s1 + $0x48] sm:$0xff]
          %v2147 = vld [vmem:[%s1 + $0x50] sm:$0xff]
          %v2148 = vld [vmem:[%s1 + $0x58] sm:$0xff]
          %v2149 = vld [vmem:[%s1 + $0x60] sm:$0xff]
          %v2150 = vld [vmem:[%s1 + $0x68] sm:$0xff]
          %v2151 = vld [vmem:[%s1 + $0x70] sm:$0xff]
          %v2152 = vld [vmem:[%s1 + $0x78] sm:$0xff]
          %v2153 = vld [vmem:[%s1 + $0x80] sm:$0xff]
          %v2154 = vld [vmem:[%s1 + $0x88] sm:$0xff]
          %v2155 = vld [vmem:[%s1 + $0x90] sm:$0xff]
          %v2156 = vld [vmem:[%s1 + $0x98] sm:$0xff]
          %v2157 = vld [vmem:[%s1 + $0xa0] sm:$0xff]
          %v2158 = vld [vmem:[%s1 + $0xa8] sm:$0xff]
          %v2159 = vld [vmem:[%s1 + $0xb0] sm:$0xff]
          %v2160 = vld [vmem:[%s1 + $0xb8] sm:$0xff]
          %v2161 = vld [vmem:[%s1 + $0xc0] sm:$0xff]
          %v2162 = vld [vmem:[%s1 + $0xc8] sm:$0xff]
          %v2163 = vld [vmem:[%s1 + $0xd0] sm:$0xff]
          %v2164 = vld [vmem:[%s1 + $0xd8] sm:$0xff]
          %v2165 = vld [vmem:[%s1 + $0xe0] sm:$0xff]
          %v2166 = vld [vmem:[%s1 + $0xe8] sm:$0xff]
          %v2167 = vld [vmem:[%s1 + $0xf0] sm:$0xff]
          %v2168 = vld [vmem:[%s1 + $0xf8] sm:$0xff]
          %v2169 = vmul.f32 %v2137, %v2105
          %v2170 = vmul.f32 %v2138, %v2106
          %v2171 = vmul.f32 %v2139, %v2107
          %v2172 = vmul.f32 %v2140, %v2108
          %v2173 = vmul.f32 %v2141, %v2109
          %v2174 = vmul.f32 %v2142, %v2110
          %v2175 = vmul.f32 %v2143, %v2111
          %v2176 = vmul.f32 %v2144, %v2112
          %v2177 = vmul.f32 %v2145, %v2113
          %v2178 = vmul.f32 %v2146, %v2114
          %v2179 = vmul.f32 %v2147, %v2115
          %v2180 = vmul.f32 %v2148, %v2116
          %v2181 = vmul.f32 %v2149, %v2117
          %v2182 = vmul.f32 %v2150, %v2118
          %v2183 = vmul.f32 %v2151, %v2119
          %v2184 = vmul.f32 %v2152, %v2120
          %v2185 = vmul.f32 %v2153, %v2121
          %v2186 = vmul.f32 %v2154, %v2122
          %v2187 = vmul.f32 %v2155, %v2123
          %v2188 = vmul.f32 %v2156, %v2124
          %v2189 = vmul.f32 %v2157, %v2125
          %v2190 = vmul.f32 %v2158, %v2126
          %v2191 = vmul.f32 %v2159, %v2127
          %v2192 = vmul.f32 %v2160, %v2128
          %v2193 = vmul.f32 %v2161, %v2129
          %v2194 = vmul.f32 %v2162, %v2130
          %v2195 = vmul.f32 %v2163, %v2131
          %v2196 = vmul.f32 %v2164, %v2132
          %v2197 = vmul.f32 %v2165, %v2133
          %v2198 = vmul.f32 %v2166, %v2134
          %v2199 = vmul.f32 %v2167, %v2135
          %v2200 = vmul.f32 %v2168, %v2136
          %v2201 = vmul.f32 %v2169, 1.1111112
          %v2202 = vmul.f32 %v2170, 1.1111112
          %v2203 = vmul.f32 %v2171, 1.1111112
          %v2204 = vmul.f32 %v2172, 1.1111112
          %v2205 = vmul.f32 %v2173, 1.1111112
          %v2206 = vmul.f32 %v2174, 1.1111112
          %v2207 = vmul.f32 %v2175, 1.1111112
          %v2208 = vmul.f32 %v2176, 1.1111112
          %v2209 = vmul.f32 %v2177, 1.1111112
          %v2210 = vmul.f32 %v2178, 1.1111112
          %v2211 = vmul.f32 %v2179, 1.1111112
          %v2212 = vmul.f32 %v2180, 1.1111112
          %v2213 = vmul.f32 %v2181, 1.1111112
          %v2214 = vmul.f32 %v2182, 1.1111112
          %v2215 = vmul.f32 %v2183, 1.1111112
          %v2216 = vmul.f32 %v2184, 1.1111112
          %v2217 = vmul.f32 %v2185, 1.1111112
          %v2218 = vmul.f32 %v2186, 1.1111112
          %v2219 = vmul.f32 %v2187, 1.1111112
          %v2220 = vmul.f32 %v2188, 1.1111112
          %v2221 = vmul.f32 %v2189, 1.1111112
          %v2222 = vmul.f32 %v2190, 1.1111112
          %v2223 = vmul.f32 %v2191, 1.1111112
          %v2224 = vmul.f32 %v2192, 1.1111112
          %v2225 = vmul.f32 %v2193, 1.1111112
          %v2226 = vmul.f32 %v2194, 1.1111112
          %v2227 = vmul.f32 %v2195, 1.1111112
          %v2228 = vmul.f32 %v2196, 1.1111112
          %v2229 = vmul.f32 %v2197, 1.1111112
          %v2230 = vmul.f32 %v2198, 1.1111112
          %v2231 = vmul.f32 %v2199, 1.1111112
          %v2232 = vmul.f32 %v2200, 1.1111112
          %2233 = vst.msk [vmem:[%s3] sm:$0xff] %vm1427, %v2201
          %2234 = vst.msk [vmem:[%s3 + $0x8] sm:$0xff] %vm1427, %v2202
          %2235 = vst.msk [vmem:[%s3 + $0x10] sm:$0xff] %vm1427, %v2203
          %2236 = vst.msk [vmem:[%s3 + $0x18] sm:$0xff] %vm1427, %v2204
          %2237 = vst.msk [vmem:[%s3 + $0x20] sm:$0xff] %vm1427, %v2205
          %2238 = vst.msk [vmem:[%s3 + $0x28] sm:$0xff] %vm1427, %v2206
          %2239 = vst.msk [vmem:[%s3 + $0x30] sm:$0xff] %vm1427, %v2207
          %2240 = vst.msk [vmem:[%s3 + $0x38] sm:$0xff] %vm1427, %v2208
          %2241 = vst.msk [vmem:[%s3 + $0x40] sm:$0xff] %vm1427, %v2209
          %2242 = vst.msk [vmem:[%s3 + $0x48] sm:$0xff] %vm1427, %v2210
          %2243 = vst.msk [vmem:[%s3 + $0x50] sm:$0xff] %vm1427, %v2211
          %2244 = vst.msk [vmem:[%s3 + $0x58] sm:$0xff] %vm1427, %v2212
          %2245 = vst.msk [vmem:[%s3 + $0x60] sm:$0xff] %vm1427, %v2213
          %2246 = vst.msk [vmem:[%s3 + $0x68] sm:$0xff] %vm1427, %v2214
          %2247 = vst.msk [vmem:[%s3 + $0x70] sm:$0xff] %vm1427, %v2215
          %2248 = vst.msk [vmem:[%s3 + $0x78] sm:$0xff] %vm1427, %v2216
          %2249 = vst.msk [vmem:[%s3 + $0x80] sm:$0xff] %vm1427, %v2217
          %2250 = vst.msk [vmem:[%s3 + $0x88] sm:$0xff] %vm1427, %v2218
          %2251 = vst.msk [vmem:[%s3 + $0x90] sm:$0xff] %vm1427, %v2219
          %2252 = vst.msk [vmem:[%s3 + $0x98] sm:$0xff] %vm1427, %v2220
          %2253 = vst.msk [vmem:[%s3 + $0xa0] sm:$0xff] %vm1427, %v2221
          %2254 = vst.msk [vmem:[%s3 + $0xa8] sm:$0xff] %vm1427, %v2222
          %2255 = vst.msk [vmem:[%s3 + $0xb0] sm:$0xff] %vm1427, %v2223
          %2256 = vst.msk [vmem:[%s3 + $0xb8] sm:$0xff] %vm1427, %v2224
          %2257 = vst.msk [vmem:[%s3 + $0xc0] sm:$0xff] %vm1427, %v2225
          %2258 = vst.msk [vmem:[%s3 + $0xc8] sm:$0xff] %vm1427, %v2226
          %2259 = vst.msk [vmem:[%s3 + $0xd0] sm:$0xff] %vm1427, %v2227
          %2260 = vst.msk [vmem:[%s3 + $0xd8] sm:$0xff] %vm1427, %v2228
          %2261 = vst.msk [vmem:[%s3 + $0xe0] sm:$0xff] %vm1427, %v2229
          %2262 = vst.msk [vmem:[%s3 + $0xe8] sm:$0xff] %vm1427, %v2230
          %2263 = vst.msk [vmem:[%s3 + $0xf0] sm:$0xff] %vm1427, %v2231
          %2264 = vst.msk [vmem:[%s3 + $0xf8] sm:$0xff] %vm1427, %v2232
          %v2265 = vld [vmem:[%s2] sm:$0xff]
          %v2266 = vld [vmem:[%s2 + $0x8] sm:$0xff]
          %v2267 = vld [vmem:[%s2 + $0x10] sm:$0xff]
          %v2268 = vld [vmem:[%s2 + $0x18] sm:$0xff]
          %v2269 = vld [vmem:[%s2 + $0x20] sm:$0xff]
          %v2270 = vld [vmem:[%s2 + $0x28] sm:$0xff]
          %v2271 = vld [vmem:[%s2 + $0x30] sm:$0xff]
          %v2272 = vld [vmem:[%s2 + $0x38] sm:$0xff]
          %v2273 = vld [vmem:[%s2 + $0x40] sm:$0xff]
          %v2274 = vld [vmem:[%s2 + $0x48] sm:$0xff]
          %v2275 = vld [vmem:[%s2 + $0x50] sm:$0xff]
          %v2276 = vld [vmem:[%s2 + $0x58] sm:$0xff]
          %v2277 = vld [vmem:[%s2 + $0x60] sm:$0xff]
          %v2278 = vld [vmem:[%s2 + $0x68] sm:$0xff]
          %v2279 = vld [vmem:[%s2 + $0x70] sm:$0xff]
          %v2280 = vld [vmem:[%s2 + $0x78] sm:$0xff]
          %v2281 = vld [vmem:[%s2 + $0x80] sm:$0xff]
          %v2282 = vld [vmem:[%s2 + $0x88] sm:$0xff]
          %v2283 = vld [vmem:[%s2 + $0x90] sm:$0xff]
          %v2284 = vld [vmem:[%s2 + $0x98] sm:$0xff]
          %v2285 = vld [vmem:[%s2 + $0xa0] sm:$0xff]
          %v2286 = vld [vmem:[%s2 + $0xa8] sm:$0xff]
          %v2287 = vld [vmem:[%s2 + $0xb0] sm:$0xff]
          %v2288 = vld [vmem:[%s2 + $0xb8] sm:$0xff]
          %v2289 = vld [vmem:[%s2 + $0xc0] sm:$0xff]
          %v2290 = vld [vmem:[%s2 + $0xc8] sm:$0xff]
          %v2291 = vld [vmem:[%s2 + $0xd0] sm:$0xff]
          %v2292 = vld [vmem:[%s2 + $0xd8] sm:$0xff]
          %v2293 = vld [vmem:[%s2 + $0xe0] sm:$0xff]
          %v2294 = vld [vmem:[%s2 + $0xe8] sm:$0xff]
          %v2295 = vld [vmem:[%s2 + $0xf0] sm:$0xff]
          %v2296 = vld [vmem:[%s2 + $0xf8] sm:$0xff]
          %v2297 = vmul.f32 %v1881, %v2169
          %v2298 = vmul.f32 %v1882, %v2170
          %v2299 = vmul.f32 %v1883, %v2171
          %v2300 = vmul.f32 %v1884, %v2172
          %v2301 = vmul.f32 %v1885, %v2173
          %v2302 = vmul.f32 %v1886, %v2174
          %v2303 = vmul.f32 %v1887, %v2175
          %v2304 = vmul.f32 %v1888, %v2176
          %v2305 = vmul.f32 %v1889, %v2177
          %v2306 = vmul.f32 %v1890, %v2178
          %v2307 = vmul.f32 %v1891, %v2179
          %v2308 = vmul.f32 %v1892, %v2180
          %v2309 = vmul.f32 %v1893, %v2181
          %v2310 = vmul.f32 %v1894, %v2182
          %v2311 = vmul.f32 %v1895, %v2183
          %v2312 = vmul.f32 %v1896, %v2184
          %v2313 = vmul.f32 %v1897, %v2185
          %v2314 = vmul.f32 %v1898, %v2186
          %v2315 = vmul.f32 %v1899, %v2187
          %v2316 = vmul.f32 %v1900, %v2188
          %v2317 = vmul.f32 %v1901, %v2189
          %v2318 = vmul.f32 %v1902, %v2190
          %v2319 = vmul.f32 %v1903, %v2191
          %v2320 = vmul.f32 %v1904, %v2192
          %v2321 = vmul.f32 %v1905, %v2193
          %v2322 = vmul.f32 %v1906, %v2194
          %v2323 = vmul.f32 %v1907, %v2195
          %v2324 = vmul.f32 %v1908, %v2196
          %v2325 = vmul.f32 %v1909, %v2197
          %v2326 = vmul.f32 %v1910, %v2198
          %v2327 = vmul.f32 %v1911, %v2199
          %v2328 = vmul.f32 %v1912, %v2200
          %v2329 = vsub.f32 %v2265, %v2297
          %v2330 = vsub.f32 %v2266, %v2298
          %v2331 = vsub.f32 %v2267, %v2299
          %v2332 = vsub.f32 %v2268, %v2300
          %v2333 = vsub.f32 %v2269, %v2301
          %v2334 = vsub.f32 %v2270, %v2302
          %v2335 = vsub.f32 %v2271, %v2303
          %v2336 = vsub.f32 %v2272, %v2304
          %v2337 = vsub.f32 %v2273, %v2305
          %v2338 = vsub.f32 %v2274, %v2306
          %v2339 = vsub.f32 %v2275, %v2307
          %v2340 = vsub.f32 %v2276, %v2308
          %v2341 = vsub.f32 %v2277, %v2309
          %v2342 = vsub.f32 %v2278, %v2310
          %v2343 = vsub.f32 %v2279, %v2311
          %v2344 = vsub.f32 %v2280, %v2312
          %v2345 = vsub.f32 %v2281, %v2313
          %v2346 = vsub.f32 %v2282, %v2314
          %v2347 = vsub.f32 %v2283, %v2315
          %v2348 = vsub.f32 %v2284, %v2316
          %v2349 = vsub.f32 %v2285, %v2317
          %v2350 = vsub.f32 %v2286, %v2318
          %v2351 = vsub.f32 %v2287, %v2319
          %v2352 = vsub.f32 %v2288, %v2320
          %v2353 = vsub.f32 %v2289, %v2321
          %v2354 = vsub.f32 %v2290, %v2322
          %v2355 = vsub.f32 %v2291, %v2323
          %v2356 = vsub.f32 %v2292, %v2324
          %v2357 = vsub.f32 %v2293, %v2325
          %v2358 = vsub.f32 %v2294, %v2326
          %v2359 = vsub.f32 %v2295, %v2327
          %v2360 = vsub.f32 %v2296, %v2328
          %v2361 = vmul.f32 %v2329, 1.1111112
          %v2362 = vmul.f32 %v2330, 1.1111112
          %v2363 = vmul.f32 %v2331, 1.1111112
          %v2364 = vmul.f32 %v2332, 1.1111112
          %v2365 = vmul.f32 %v2333, 1.1111112
          %v2366 = vmul.f32 %v2334, 1.1111112
          %v2367 = vmul.f32 %v2335, 1.1111112
          %v2368 = vmul.f32 %v2336, 1.1111112
          %v2369 = vmul.f32 %v2337, 1.1111112
          %v2370 = vmul.f32 %v2338, 1.1111112
          %v2371 = vmul.f32 %v2339, 1.1111112
          %v2372 = vmul.f32 %v2340, 1.1111112
          %v2373 = vmul.f32 %v2341, 1.1111112
          %v2374 = vmul.f32 %v2342, 1.1111112
          %v2375 = vmul.f32 %v2343, 1.1111112
          %v2376 = vmul.f32 %v2344, 1.1111112
          %v2377 = vmul.f32 %v2345, 1.1111112
          %v2378 = vmul.f32 %v2346, 1.1111112
          %v2379 = vmul.f32 %v2347, 1.1111112
          %v2380 = vmul.f32 %v2348, 1.1111112
          %v2381 = vmul.f32 %v2349, 1.1111112
          %v2382 = vmul.f32 %v2350, 1.1111112
          %v2383 = vmul.f32 %v2351, 1.1111112
          %v2384 = vmul.f32 %v2352, 1.1111112
          %v2385 = vmul.f32 %v2353, 1.1111112
          %v2386 = vmul.f32 %v2354, 1.1111112
          %v2387 = vmul.f32 %v2355, 1.1111112
          %v2388 = vmul.f32 %v2356, 1.1111112
          %v2389 = vmul.f32 %v2357, 1.1111112
          %v2390 = vmul.f32 %v2358, 1.1111112
          %v2391 = vmul.f32 %v2359, 1.1111112
          %v2392 = vmul.f32 %v2360, 1.1111112
          %2393 = vst.msk [vmem:[%s4] sm:$0xff] %vm1427, %v2361
          %2394 = vst.msk [vmem:[%s4 + $0x8] sm:$0xff] %vm1427, %v2362
          %2395 = vst.msk [vmem:[%s4 + $0x10] sm:$0xff] %vm1427, %v2363
          %2396 = vst.msk [vmem:[%s4 + $0x18] sm:$0xff] %vm1427, %v2364
          %2397 = vst.msk [vmem:[%s4 + $0x20] sm:$0xff] %vm1427, %v2365
          %2398 = vst.msk [vmem:[%s4 + $0x28] sm:$0xff] %vm1427, %v2366
          %2399 = vst.msk [vmem:[%s4 + $0x30] sm:$0xff] %vm1427, %v2367
          %2400 = vst.msk [vmem:[%s4 + $0x38] sm:$0xff] %vm1427, %v2368
          %2401 = vst.msk [vmem:[%s4 + $0x40] sm:$0xff] %vm1427, %v2369
          %2402 = vst.msk [vmem:[%s4 + $0x48] sm:$0xff] %vm1427, %v2370
          %2403 = vst.msk [vmem:[%s4 + $0x50] sm:$0xff] %vm1427, %v2371
          %2404 = vst.msk [vmem:[%s4 + $0x58] sm:$0xff] %vm1427, %v2372
          %2405 = vst.msk [vmem:[%s4 + $0x60] sm:$0xff] %vm1427, %v2373
          %2406 = vst.msk [vmem:[%s4 + $0x68] sm:$0xff] %vm1427, %v2374
          %2407 = vst.msk [vmem:[%s4 + $0x70] sm:$0xff] %vm1427, %v2375
          %2408 = vst.msk [vmem:[%s4 + $0x78] sm:$0xff] %vm1427, %v2376
          %2409 = vst.msk [vmem:[%s4 + $0x80] sm:$0xff] %vm1427, %v2377
          %2410 = vst.msk [vmem:[%s4 + $0x88] sm:$0xff] %vm1427, %v2378
          %2411 = vst.msk [vmem:[%s4 + $0x90] sm:$0xff] %vm1427, %v2379
          %2412 = vst.msk [vmem:[%s4 + $0x98] sm:$0xff] %vm1427, %v2380
          %2413 = vst.msk [vmem:[%s4 + $0xa0] sm:$0xff] %vm1427, %v2381
          %2414 = vst.msk [vmem:[%s4 + $0xa8] sm:$0xff] %vm1427, %v2382
          %2415 = vst.msk [vmem:[%s4 + $0xb0] sm:$0xff] %vm1427, %v2383
          %2416 = vst.msk [vmem:[%s4 + $0xb8] sm:$0xff] %vm1427, %v2384
          %2417 = vst.msk [vmem:[%s4 + $0xc0] sm:$0xff] %vm1427, %v2385
          %2418 = vst.msk [vmem:[%s4 + $0xc8] sm:$0xff] %vm1427, %v2386
          %2419 = vst.msk [vmem:[%s4 + $0xd0] sm:$0xff] %vm1427, %v2387
          %2420 = vst.msk [vmem:[%s4 + $0xd8] sm:$0xff] %vm1427, %v2388
          %2421 = vst.msk [vmem:[%s4 + $0xe0] sm:$0xff] %vm1427, %v2389
          %2422 = vst.msk [vmem:[%s4 + $0xe8] sm:$0xff] %vm1427, %v2390
          %2423 = vst.msk [vmem:[%s4 + $0xf0] sm:$0xff] %vm1427, %v2391
          %2424 = vst.msk [vmem:[%s4 + $0xf8] sm:$0xff] %vm1427, %v2392
        $region106: #{tpu_custom_call.1} parent=93 // pred_fallthru
          _
        // Predicated region
        $region107: #{tpu_custom_call.1} parent=93 // pred_check
          %p2425 = pneg %p111
        $region108: #{tpu_custom_call.1} parent=93 // pred_check_branch
          %2427 = sbr.rel (%p2425) target = $region110
        $region109: #{tpu_custom_call.1} parent=93 // pred_region
          _
        $region110: #{tpu_custom_call.1} parent=93 // pred_fallthru
          _
        // Predicated region
        $region111: #{tpu_custom_call.1} parent=93 // pred_check
          %p2428 = pneg %p132
        $region112: #{tpu_custom_call.1} parent=93 // pred_check_branch
          %2430 = sbr.rel (%p2428) target = $region114
        $region113: #{tpu_custom_call.1} parent=93 // pred_region
          _
        $region114: #{tpu_custom_call.1} parent=93 // pred_fallthru
          _
        // Predicated region
        $region115: #{tpu_custom_call.1} parent=93 // pred_check
          %p2431 = pneg %p111
        $region116: #{tpu_custom_call.1} parent=93 // pred_check_branch
          %2433 = sbr.rel (%p2431) target = $region118
        $region117: #{tpu_custom_call.1} parent=93 // pred_region
          _
        $region118: #{tpu_custom_call.1} parent=93 // pred_fallthru
          _
        // Predicated region
        $region119: #{tpu_custom_call.1} parent=93 // pred_check
          %p2434 = pneg %p132
        $region120: #{tpu_custom_call.1} parent=93 // pred_check_branch
          %2436 = sbr.rel (%p2434) target = $region122
        $region121: #{tpu_custom_call.1} parent=93 // pred_region
          _
        $region122: #{tpu_custom_call.1} parent=93 // pred_fallthru
          _
      $region94: #{tpu_custom_call.1} parent=5 // pred_fallthru
        _
      %p2437 = scmp.le.s32.totalorder 2, %s11
      // Predicated region
      $region123: #{tpu_custom_call.1} parent=5 // pred_check
        %p2438 = pneg %p2437
      $region124: #{tpu_custom_call.1} parent=5 // pred_check_branch
        %2440 = sbr.rel (%p2438) target = $region126
      $region125: #{tpu_custom_call.1} parent=5 // pred_region
        %s2441 = ssub.s32 %s11, 2
      $region126: #{tpu_custom_call.1} parent=5 // pred_fallthru
        _
    $region6: #{tpu_custom_call.1} parent=1 // loop_footer
      %s15 = sadd.s32 1, %s11
    $region7: #{tpu_custom_call.1} parent=1 // loop_footer_branch
      %10 = sbr.rel target = $region3
    $region8: #{tpu_custom_call.1} parent=1 // loop_exit
      _

</llo_original>
